<compile_context>
chip_gen: v7x
topology: tpu7x:2x2x1
jax: 0.10.0
libtpu: 0.0.40
codegen_flags: <defaults>
</compile_context>

<pallas_src>
import math
from functools import partial

import jax
import jax.numpy as jnp
import numpy as np
from jax.experimental import pallas as pl
from jax.experimental.pallas import tpu as pltpu


# -----------------------------------------------------------------------------
# Kernel: full num_layers-deep encoder on one row-block of (bb*seq, D) tokens.
# -----------------------------------------------------------------------------
def _encoder_kernel(x_ref,
                    wqkv_ref, wo_ref, w1_ref, w2_ref,
                    bqkv_ref, b1_ref, vec_ref,
                    out_ref,
                    *, num_layers, nhead, head_dim, bb, seq, use_bf16):
    D = nhead * head_dim
    scale = 1.0 / math.sqrt(head_dim)

    def mm(a, b):
        if use_bf16:  # v6e/v7x fast MXU path (loosen tolerance if enabled)
            a = a.astype(jnp.bfloat16)
            b = b.astype(jnp.bfloat16)
        return jnp.dot(a, b, preferred_element_type=jnp.float32)

    def layernorm(v, g, b, eps=1e-5):
        mu = jnp.mean(v, axis=-1, keepdims=True)
        c = v - mu
        var = jnp.mean(c * c, axis=-1, keepdims=True)
        return c * jax.lax.rsqrt(var + eps) * g + b

    x = x_ref[...]                                   # (bb*seq, D)

    for l in range(num_layers):                      # static unroll over layers
        wqkv = wqkv_ref[l]                           # (D, 3D)
        wo = wo_ref[l]                               # (D, D)
        w1 = w1_ref[l]                               # (D, FF)
        w2 = w2_ref[l]                               # (FF, D)
        bqkv = bqkv_ref[l]                           # (1, 3D)
        b1 = b1_ref[l]                               # (1, FF)
        vec = vec_ref[l]                             # (6, D)
        bo, ln1_g, ln1_b = vec[0:1], vec[1:2], vec[2:3]
        b2, ln2_g, ln2_b = vec[3:4], vec[4:5], vec[5:6]

        # ---- multi-head self-attention: packed QKV projection ----
        qkv = mm(x, wqkv) + bqkv                     # (bb*seq, 3D)

        attn_rows = []
        for b in range(bb):                          # static unroll over batch
            r0, r1 = b * seq, (b + 1) * seq
            acc = jnp.zeros((seq, D), jnp.float32)
            for h in range(nhead):                   # static unroll over heads
                c0, c1 = h * head_dim, (h + 1) * head_dim
                qh = qkv[r0:r1, c0:c1]               # (S, hd)
                kh = qkv[r0:r1, D + c0:D + c1]       # (S, hd)
                vh = qkv[r0:r1, 2 * D + c0:2 * D + c1]
                s = mm(qh, kh.T) * scale             # (S, S)
                s = s - jnp.max(s, axis=-1, keepdims=True)
                p = jnp.exp(s)
                p = p * pl.reciprocal(jnp.sum(p, axis=-1, keepdims=True),
                                      approx=True)
                # accumulate head output directly through its out-proj slice
                acc = acc + mm(mm(p, vh), wo[c0:c1, :])
            attn_rows.append(acc + bo)
        attn = attn_rows[0] if bb == 1 else jnp.concatenate(attn_rows, axis=0)

        # residual + LayerNorm1
        x1 = layernorm(x + attn, ln1_g, ln1_b)

        # ---- feed-forward ----
        hidden = jnp.maximum(mm(x1, w1) + b1, 0.0)   # relu
        ff = mm(hidden, w2) + b2

        # residual + LayerNorm2
        x = layernorm(x1 + ff, ln2_g, ln2_b)

    out_ref[...] = x


# -----------------------------------------------------------------------------
# Wrapper: stacks per-layer parameters and launches ONE pallas_call for the
# whole nn.TransformerEncoder.
# -----------------------------------------------------------------------------
def transformer_encoder(x, layer_params_list, *, nhead,
                        num_row_blocks=None, use_bf16=False):
    B, S, D = x.shape
    L = len(layer_params_list)
    head_dim = D // nhead

    # Stack weights along a leading layer axis; pack QKV and the 1-row vectors.
    wqkv = jnp.stack([jnp.concatenate([p["wq"], p["wk"], p["wv"]], axis=1)
                      for p in layer_params_list])                 # (L, D, 3D)
    bqkv = jnp.stack([jnp.concatenate([p["bq"], p["bk"], p["bv"]], axis=1)
                      for p in layer_params_list])                 # (L, 1, 3D)
    wo = jnp.stack([p["wo"] for p in layer_params_list])           # (L, D, D)
    w1 = jnp.stack([p["w1"] for p in layer_params_list])           # (L, D, FF)
    w2 = jnp.stack([p["w2"] for p in layer_params_list])           # (L, FF, D)
    b1 = jnp.stack([p["b1"] for p in layer_params_list])           # (L, 1, FF)
    vec = jnp.stack([jnp.concatenate([p["bo"], p["ln1_g"], p["ln1_b"],
                                      p["b2"], p["ln2_g"], p["ln2_b"]], axis=0)
                     for p in layer_params_list])                  # (L, 6, D)

    if num_row_blocks is None:
        # 2-way "parallel" row split keeps both v7x TensorCores busy; on
        # v5e/v6e (single TC) it is just one extra ~0.35 us grid step.
        num_row_blocks = 2 if (B >= 2 and B % 2 == 0) else 1
    bb = B // num_row_blocks
    m_blk = bb * S

    x2 = x.reshape(B * S, D)   # fold batch into rows (taller MXU LHS tiles)

    kernel = partial(_encoder_kernel, num_layers=L, nhead=nhead,
                     head_dim=head_dim, bb=bb, seq=S, use_bf16=use_bf16)

    def full_spec(a):
        nd = a.ndim
        return pl.BlockSpec(a.shape, lambda i, _nd=nd: (0,) * _nd)

    out = pl.pallas_call(
        kernel,
        out_shape=jax.ShapeDtypeStruct((B * S, D), jnp.float32),
        grid_spec=pltpu.PrefetchScalarGridSpec(
            num_scalar_prefetch=0,
            grid=(num_row_blocks,),
            in_specs=[pl.BlockSpec((m_blk, D), lambda i: (i, 0))]
                     + [full_spec(w) for w in (wqkv, wo, w1, w2, bqkv, b1, vec)],
            out_specs=pl.BlockSpec((m_blk, D), lambda i: (i, 0)),
        ),
        compiler_params=pltpu.CompilerParams(
            dimension_semantics=("parallel",)),
    )(x2, wqkv, wo, w1, w2, bqkv, b1, vec)

    return out.reshape(B, S, D)


# -----------------------------------------------------------------------------
# Deterministic synthetic parameters (PyTorch-compatible shapes, transposed
# to (in, out)).
# -----------------------------------------------------------------------------
def init_layer_params(key, d_model, dim_feedforward):
    ks = jax.random.split(key, 8)

    def w(k, shape, scale):
        return jax.random.normal(k, shape, dtype=jnp.float32) * scale

    s_d = 1.0 / math.sqrt(d_model)
    s_f = 1.0 / math.sqrt(dim_feedforward)
    return dict(
        wq=w(ks[0], (d_model, d_model), s_d), bq=jnp.zeros((1, d_model), jnp.float32),
        wk=w(ks[1], (d_model, d_model), s_d), bk=jnp.zeros((1, d_model), jnp.float32),
        wv=w(ks[2], (d_model, d_model), s_d), bv=jnp.zeros((1, d_model), jnp.float32),
        wo=w(ks[3], (d_model, d_model), s_d),
        bo=w(ks[4], (1, d_model), 0.01),
        ln1_g=jnp.ones((1, d_model), jnp.float32),
        ln1_b=jnp.zeros((1, d_model), jnp.float32),
        w1=w(ks[5], (d_model, dim_feedforward), s_d),
        b1=w(ks[6], (1, dim_feedforward), 0.01),
        w2=w(ks[7], (dim_feedforward, d_model), s_f),
        b2=jnp.zeros((1, d_model), jnp.float32),
        ln2_g=jnp.ones((1, d_model), jnp.float32),
        ln2_b=jnp.zeros((1, d_model), jnp.float32),
    )


# -----------------------------------------------------------------------------
# Pure-JAX reference for a correctness sanity check.
# -----------------------------------------------------------------------------
def _ref_layer(x, p, nhead):
    B, S, D = x.shape
    hd = D // nhead

    def ln(v, g, b, eps=1e-5):
        mu = v.mean(-1, keepdims=True)
        var = ((v - mu) ** 2).mean(-1, keepdims=True)
        return (v - mu) / jnp.sqrt(var + eps) * g + b

    q = x @ p["wq"] + p["bq"]
    k = x @ p["wk"] + p["bk"]
    v = x @ p["wv"] + p["bv"]
    qh = q.reshape(B, S, nhead, hd).transpose(0, 2, 1, 3)
    kh = k.reshape(B, S, nhead, hd).transpose(0, 2, 1, 3)
    vh = v.reshape(B, S, nhead, hd).transpose(0, 2, 1, 3)
    s = jnp.einsum("bhqd,bhkd->bhqk", qh, kh) / math.sqrt(hd)
    pattn = jax.nn.softmax(s, axis=-1)
    o = jnp.einsum("bhqk,bhkd->bhqd", pattn, vh).transpose(0, 2, 1, 3).reshape(B, S, D)
    o = o @ p["wo"] + p["bo"]
    x1 = ln(x + o, p["ln1_g"], p["ln1_b"])
    h = jnp.maximum(x1 @ p["w1"] + p["b1"], 0.0)
    ff = h @ p["w2"] + p["b2"]
    return ln(x1 + ff, p["ln2_g"], p["ln2_b"])


if __name__ == "__main__":
    # d_model=32, nhead=4, num_layers=2, dim_feedforward=64; input (2, 8, 32).
    d_model, nhead, num_layers, dim_feedforward = 32, 4, 2, 64
    B, S = 2, 8

    root = jax.random.PRNGKey(0)
    k_x, k_p = jax.random.split(root)
    x = jax.random.normal(k_x, (B, S, d_model), dtype=jnp.float32)

    layer_keys = jax.random.split(k_p, num_layers)
    layer_params = [init_layer_params(k, d_model, dim_feedforward)
                    for k in layer_keys]

    out = transformer_encoder(x, layer_params, nhead=nhead)
    out = jax.block_until_ready(out)

    # sanity check against pure-JAX reference (tolerance accommodates the
    # EUP approximate-reciprocal softmax normalization)
    ref = x
    for p in layer_params:
        ref = _ref_layer(ref, p, nhead)
    ref = jax.block_until_ready(ref)

    assert out.shape == (B, S, d_model)
    np.testing.assert_allclose(np.asarray(out), np.asarray(ref),
                               rtol=5e-3, atol=5e-3)
    print("KERNEL_OK")
</pallas_src>

<mosaic_0001>
module attributes {stable_mosaic.version = 11 : i64} {
  func.func @_encoder_kernel(%arg0: i32, %arg1: memref<8x32xf32, #tpu.memory_space<vmem>>, %arg2: memref<2x32x96xf32, #tpu.memory_space<vmem>>, %arg3: memref<2x32x32xf32, #tpu.memory_space<vmem>>, %arg4: memref<2x32x64xf32, #tpu.memory_space<vmem>>, %arg5: memref<2x64x32xf32, #tpu.memory_space<vmem>>, %arg6: memref<2x1x96xf32, #tpu.memory_space<vmem>>, %arg7: memref<2x1x64xf32, #tpu.memory_space<vmem>>, %arg8: memref<2x6x32xf32, #tpu.memory_space<vmem>>, %arg9: memref<8x32xf32, #tpu.memory_space<vmem>>) attributes {dimension_semantics = [#tpu.dimension_semantics<parallel>], iteration_bounds = array<i64: 2>, scalar_prefetch = 0 : i64, scratch_operands = 0 : i64, tpu.core_type = #tpu.core_type<tc>, window_params = [{transform_indices = @transform_0, window_bounds = array<i64: 8, 32>}, {pipeline_mode = #tpu.pipeline_mode<synchronous>, transform_indices = @transform_1, window_bounds = array<i64: 2, 32, 96>}, {pipeline_mode = #tpu.pipeline_mode<synchronous>, transform_indices = @transform_2, window_bounds = array<i64: 2, 32, 32>}, {pipeline_mode = #tpu.pipeline_mode<synchronous>, transform_indices = @transform_3, window_bounds = array<i64: 2, 32, 64>}, {pipeline_mode = #tpu.pipeline_mode<synchronous>, transform_indices = @transform_4, window_bounds = array<i64: 2, 64, 32>}, {pipeline_mode = #tpu.pipeline_mode<synchronous>, transform_indices = @transform_5, window_bounds = array<i64: 2, 1, 96>}, {pipeline_mode = #tpu.pipeline_mode<synchronous>, transform_indices = @transform_6, window_bounds = array<i64: 2, 1, 64>}, {pipeline_mode = #tpu.pipeline_mode<synchronous>, transform_indices = @transform_7, window_bounds = array<i64: 2, 6, 32>}, {transform_indices = @transform_8, window_bounds = array<i64: 8, 32>}]} {
    %c0 = arith.constant 0 : index
    %c0_0 = arith.constant 0 : index
    %0 = vector.load %arg1[%c0, %c0_0] : memref<8x32xf32, #tpu.memory_space<vmem>>, vector<8x32xf32>
    %c0_1 = arith.constant 0 : index
    %c0_2 = arith.constant 0 : index
    %c0_3 = arith.constant 0 : index
    %1 = vector.load %arg2[%c0_1, %c0_2, %c0_3] : memref<2x32x96xf32, #tpu.memory_space<vmem>>, vector<1x32x96xf32>
    %2 = vector.shape_cast %1 : vector<1x32x96xf32> to vector<32x96xf32>
    %c0_4 = arith.constant 0 : index
    %c0_5 = arith.constant 0 : index
    %c0_6 = arith.constant 0 : index
    %3 = vector.load %arg3[%c0_4, %c0_5, %c0_6] : memref<2x32x32xf32, #tpu.memory_space<vmem>>, vector<1x32x32xf32>
    %4 = vector.shape_cast %3 : vector<1x32x32xf32> to vector<32x32xf32>
    %c0_7 = arith.constant 0 : index
    %c0_8 = arith.constant 0 : index
    %c0_9 = arith.constant 0 : index
    %5 = vector.load %arg4[%c0_7, %c0_8, %c0_9] : memref<2x32x64xf32, #tpu.memory_space<vmem>>, vector<1x32x64xf32>
    %6 = vector.shape_cast %5 : vector<1x32x64xf32> to vector<32x64xf32>
    %c0_10 = arith.constant 0 : index
    %c0_11 = arith.constant 0 : index
    %c0_12 = arith.constant 0 : index
    %7 = vector.load %arg5[%c0_10, %c0_11, %c0_12] : memref<2x64x32xf32, #tpu.memory_space<vmem>>, vector<1x64x32xf32>
    %8 = vector.shape_cast %7 : vector<1x64x32xf32> to vector<64x32xf32>
    %c0_13 = arith.constant 0 : index
    %c0_14 = arith.constant 0 : index
    %c0_15 = arith.constant 0 : index
    %9 = vector.load %arg6[%c0_13, %c0_14, %c0_15] : memref<2x1x96xf32, #tpu.memory_space<vmem>>, vector<1x1x96xf32>
    %10 = vector.shape_cast %9 : vector<1x1x96xf32> to vector<1x96xf32>
    %c0_16 = arith.constant 0 : index
    %c0_17 = arith.constant 0 : index
    %c0_18 = arith.constant 0 : index
    %11 = vector.load %arg7[%c0_16, %c0_17, %c0_18] : memref<2x1x64xf32, #tpu.memory_space<vmem>>, vector<1x1x64xf32>
    %12 = vector.shape_cast %11 : vector<1x1x64xf32> to vector<1x64xf32>
    %c0_19 = arith.constant 0 : index
    %c0_20 = arith.constant 0 : index
    %c0_21 = arith.constant 0 : index
    %13 = vector.load %arg8[%c0_19, %c0_20, %c0_21] : memref<2x6x32xf32, #tpu.memory_space<vmem>>, vector<1x6x32xf32>
    %14 = vector.shape_cast %13 : vector<1x6x32xf32> to vector<6x32xf32>
    %15 = vector.extract_strided_slice %14 {offsets = [0, 0], sizes = [1, 32], strides = [1, 1]} : vector<6x32xf32> to vector<1x32xf32>
    %16 = vector.extract_strided_slice %14 {offsets = [1, 0], sizes = [1, 32], strides = [1, 1]} : vector<6x32xf32> to vector<1x32xf32>
    %17 = vector.extract_strided_slice %14 {offsets = [2, 0], sizes = [1, 32], strides = [1, 1]} : vector<6x32xf32> to vector<1x32xf32>
    %18 = vector.extract_strided_slice %14 {offsets = [3, 0], sizes = [1, 32], strides = [1, 1]} : vector<6x32xf32> to vector<1x32xf32>
    %19 = vector.extract_strided_slice %14 {offsets = [4, 0], sizes = [1, 32], strides = [1, 1]} : vector<6x32xf32> to vector<1x32xf32>
    %20 = vector.extract_strided_slice %14 {offsets = [5, 0], sizes = [1, 32], strides = [1, 1]} : vector<6x32xf32> to vector<1x32xf32>
    %cst = arith.constant dense<0.000000e+00> : vector<8x96xf32>
    %21 = tpu.matmul %0, %2, %cst {dimension_numbers = #tpu.dot_dimension_numbers<[1], [0], [0], [1], [0, 0, 1, 1], [], []>} : vector<8x32xf32>, vector<32x96xf32>, vector<8x96xf32> -> vector<8x96xf32>
    %22 = vector.broadcast %10 : vector<1x96xf32> to vector<8x96xf32>
    %23 = arith.addf %21, %22 : vector<8x96xf32>
    %cst_22 = arith.constant 0.000000e+00 : f32
    %24 = vector.broadcast %cst_22 : f32 to vector<8x32xf32>
    %25 = vector.extract_strided_slice %23 {offsets = [0, 0], sizes = [8, 8], strides = [1, 1]} : vector<8x96xf32> to vector<8x8xf32>
    %26 = vector.extract_strided_slice %23 {offsets = [0, 32], sizes = [8, 8], strides = [1, 1]} : vector<8x96xf32> to vector<8x8xf32>
    %27 = vector.extract_strided_slice %23 {offsets = [0, 64], sizes = [8, 8], strides = [1, 1]} : vector<8x96xf32> to vector<8x8xf32>
    %28 = tpu.transpose %26, [1, 0] : vector<8x8xf32> -> vector<8x8xf32>
    %cst_23 = arith.constant dense<0.000000e+00> : vector<8x8xf32>
    %29 = tpu.matmul %25, %28, %cst_23 {dimension_numbers = #tpu.dot_dimension_numbers<[1], [0], [0], [1], [0, 0, 1, 1], [], []>} : vector<8x8xf32>, vector<8x8xf32>, vector<8x8xf32> -> vector<8x8xf32>
    %cst_24 = arith.constant 0.353553385 : f32
    %30 = vector.broadcast %cst_24 : f32 to vector<8x8xf32>
    %31 = arith.mulf %29, %30 : vector<8x8xf32>
    %cst_25 = arith.constant dense<0xFF800000> : vector<8xf32>
    %32 = vector.multi_reduction <maximumf>, %31, %cst_25 [1] : vector<8x8xf32> to vector<8xf32>
    %33 = vector.shape_cast %32 : vector<8xf32> to vector<8x1xf32>
    %34 = vector.broadcast %33 : vector<8x1xf32> to vector<8x8xf32>
    %35 = arith.subf %31, %34 : vector<8x8xf32>
    %36 = math.exp %35 : vector<8x8xf32>
    %cst_26 = arith.constant dense<0.000000e+00> : vector<8xf32>
    %37 = vector.multi_reduction <add>, %36, %cst_26 [1] : vector<8x8xf32> to vector<8xf32>
    %38 = vector.shape_cast %37 : vector<8xf32> to vector<8x1xf32>
    %39 = tpu.reciprocal %38 {approx = true} : vector<8x1xf32> -> vector<8x1xf32>
    %40 = vector.broadcast %39 : vector<8x1xf32> to vector<8x8xf32>
    %41 = arith.mulf %36, %40 : vector<8x8xf32>
    %cst_27 = arith.constant dense<0.000000e+00> : vector<8x8xf32>
    %42 = tpu.matmul %41, %27, %cst_27 {dimension_numbers = #tpu.dot_dimension_numbers<[1], [0], [0], [1], [0, 0, 1, 1], [], []>} : vector<8x8xf32>, vector<8x8xf32>, vector<8x8xf32> -> vector<8x8xf32>
    %43 = vector.extract_strided_slice %4 {offsets = [0, 0], sizes = [8, 32], strides = [1, 1]} : vector<32x32xf32> to vector<8x32xf32>
    %cst_28 = arith.constant dense<0.000000e+00> : vector<8x32xf32>
    %44 = tpu.matmul %42, %43, %cst_28 {dimension_numbers = #tpu.dot_dimension_numbers<[1], [0], [0], [1], [0, 0, 1, 1], [], []>} : vector<8x8xf32>, vector<8x32xf32>, vector<8x32xf32> -> vector<8x32xf32>
    %45 = arith.addf %24, %44 : vector<8x32xf32>
    %46 = vector.extract_strided_slice %23 {offsets = [0, 8], sizes = [8, 8], strides = [1, 1]} : vector<8x96xf32> to vector<8x8xf32>
    %47 = vector.extract_strided_slice %23 {offsets = [0, 40], sizes = [8, 8], strides = [1, 1]} : vector<8x96xf32> to vector<8x8xf32>
    %48 = vector.extract_strided_slice %23 {offsets = [0, 72], sizes = [8, 8], strides = [1, 1]} : vector<8x96xf32> to vector<8x8xf32>
    %49 = tpu.transpose %47, [1, 0] : vector<8x8xf32> -> vector<8x8xf32>
    %cst_29 = arith.constant dense<0.000000e+00> : vector<8x8xf32>
    %50 = tpu.matmul %46, %49, %cst_29 {dimension_numbers = #tpu.dot_dimension_numbers<[1], [0], [0], [1], [0, 0, 1, 1], [], []>} : vector<8x8xf32>, vector<8x8xf32>, vector<8x8xf32> -> vector<8x8xf32>
    %cst_30 = arith.constant 0.353553385 : f32
    %51 = vector.broadcast %cst_30 : f32 to vector<8x8xf32>
    %52 = arith.mulf %50, %51 : vector<8x8xf32>
    %cst_31 = arith.constant dense<0xFF800000> : vector<8xf32>
    %53 = vector.multi_reduction <maximumf>, %52, %cst_31 [1] : vector<8x8xf32> to vector<8xf32>
    %54 = vector.shape_cast %53 : vector<8xf32> to vector<8x1xf32>
    %55 = vector.broadcast %54 : vector<8x1xf32> to vector<8x8xf32>
    %56 = arith.subf %52, %55 : vector<8x8xf32>
    %57 = math.exp %56 : vector<8x8xf32>
    %cst_32 = arith.constant dense<0.000000e+00> : vector<8xf32>
    %58 = vector.multi_reduction <add>, %57, %cst_32 [1] : vector<8x8xf32> to vector<8xf32>
    %59 = vector.shape_cast %58 : vector<8xf32> to vector<8x1xf32>
    %60 = tpu.reciprocal %59 {approx = true} : vector<8x1xf32> -> vector<8x1xf32>
    %61 = vector.broadcast %60 : vector<8x1xf32> to vector<8x8xf32>
    %62 = arith.mulf %57, %61 : vector<8x8xf32>
    %cst_33 = arith.constant dense<0.000000e+00> : vector<8x8xf32>
    %63 = tpu.matmul %62, %48, %cst_33 {dimension_numbers = #tpu.dot_dimension_numbers<[1], [0], [0], [1], [0, 0, 1, 1], [], []>} : vector<8x8xf32>, vector<8x8xf32>, vector<8x8xf32> -> vector<8x8xf32>
    %64 = vector.extract_strided_slice %4 {offsets = [8, 0], sizes = [8, 32], strides = [1, 1]} : vector<32x32xf32> to vector<8x32xf32>
    %cst_34 = arith.constant dense<0.000000e+00> : vector<8x32xf32>
    %65 = tpu.matmul %63, %64, %cst_34 {dimension_numbers = #tpu.dot_dimension_numbers<[1], [0], [0], [1], [0, 0, 1, 1], [], []>} : vector<8x8xf32>, vector<8x32xf32>, vector<8x32xf32> -> vector<8x32xf32>
    %66 = arith.addf %45, %65 : vector<8x32xf32>
    %67 = vector.extract_strided_slice %23 {offsets = [0, 16], sizes = [8, 8], strides = [1, 1]} : vector<8x96xf32> to vector<8x8xf32>
    %68 = vector.extract_strided_slice %23 {offsets = [0, 48], sizes = [8, 8], strides = [1, 1]} : vector<8x96xf32> to vector<8x8xf32>
    %69 = vector.extract_strided_slice %23 {offsets = [0, 80], sizes = [8, 8], strides = [1, 1]} : vector<8x96xf32> to vector<8x8xf32>
    %70 = tpu.transpose %68, [1, 0] : vector<8x8xf32> -> vector<8x8xf32>
    %cst_35 = arith.constant dense<0.000000e+00> : vector<8x8xf32>
    %71 = tpu.matmul %67, %70, %cst_35 {dimension_numbers = #tpu.dot_dimension_numbers<[1], [0], [0], [1], [0, 0, 1, 1], [], []>} : vector<8x8xf32>, vector<8x8xf32>, vector<8x8xf32> -> vector<8x8xf32>
    %cst_36 = arith.constant 0.353553385 : f32
    %72 = vector.broadcast %cst_36 : f32 to vector<8x8xf32>
    %73 = arith.mulf %71, %72 : vector<8x8xf32>
    %cst_37 = arith.constant dense<0xFF800000> : vector<8xf32>
    %74 = vector.multi_reduction <maximumf>, %73, %cst_37 [1] : vector<8x8xf32> to vector<8xf32>
    %75 = vector.shape_cast %74 : vector<8xf32> to vector<8x1xf32>
    %76 = vector.broadcast %75 : vector<8x1xf32> to vector<8x8xf32>
    %77 = arith.subf %73, %76 : vector<8x8xf32>
    %78 = math.exp %77 : vector<8x8xf32>
    %cst_38 = arith.constant dense<0.000000e+00> : vector<8xf32>
    %79 = vector.multi_reduction <add>, %78, %cst_38 [1] : vector<8x8xf32> to vector<8xf32>
    %80 = vector.shape_cast %79 : vector<8xf32> to vector<8x1xf32>
    %81 = tpu.reciprocal %80 {approx = true} : vector<8x1xf32> -> vector<8x1xf32>
    %82 = vector.broadcast %81 : vector<8x1xf32> to vector<8x8xf32>
    %83 = arith.mulf %78, %82 : vector<8x8xf32>
    %cst_39 = arith.constant dense<0.000000e+00> : vector<8x8xf32>
    %84 = tpu.matmul %83, %69, %cst_39 {dimension_numbers = #tpu.dot_dimension_numbers<[1], [0], [0], [1], [0, 0, 1, 1], [], []>} : vector<8x8xf32>, vector<8x8xf32>, vector<8x8xf32> -> vector<8x8xf32>
    %85 = vector.extract_strided_slice %4 {offsets = [16, 0], sizes = [8, 32], strides = [1, 1]} : vector<32x32xf32> to vector<8x32xf32>
    %cst_40 = arith.constant dense<0.000000e+00> : vector<8x32xf32>
    %86 = tpu.matmul %84, %85, %cst_40 {dimension_numbers = #tpu.dot_dimension_numbers<[1], [0], [0], [1], [0, 0, 1, 1], [], []>} : vector<8x8xf32>, vector<8x32xf32>, vector<8x32xf32> -> vector<8x32xf32>
    %87 = arith.addf %66, %86 : vector<8x32xf32>
    %88 = vector.extract_strided_slice %23 {offsets = [0, 24], sizes = [8, 8], strides = [1, 1]} : vector<8x96xf32> to vector<8x8xf32>
    %89 = vector.extract_strided_slice %23 {offsets = [0, 56], sizes = [8, 8], strides = [1, 1]} : vector<8x96xf32> to vector<8x8xf32>
    %90 = vector.extract_strided_slice %23 {offsets = [0, 88], sizes = [8, 8], strides = [1, 1]} : vector<8x96xf32> to vector<8x8xf32>
    %91 = tpu.transpose %89, [1, 0] : vector<8x8xf32> -> vector<8x8xf32>
    %cst_41 = arith.constant dense<0.000000e+00> : vector<8x8xf32>
    %92 = tpu.matmul %88, %91, %cst_41 {dimension_numbers = #tpu.dot_dimension_numbers<[1], [0], [0], [1], [0, 0, 1, 1], [], []>} : vector<8x8xf32>, vector<8x8xf32>, vector<8x8xf32> -> vector<8x8xf32>
    %cst_42 = arith.constant 0.353553385 : f32
    %93 = vector.broadcast %cst_42 : f32 to vector<8x8xf32>
    %94 = arith.mulf %92, %93 : vector<8x8xf32>
    %cst_43 = arith.constant dense<0xFF800000> : vector<8xf32>
    %95 = vector.multi_reduction <maximumf>, %94, %cst_43 [1] : vector<8x8xf32> to vector<8xf32>
    %96 = vector.shape_cast %95 : vector<8xf32> to vector<8x1xf32>
    %97 = vector.broadcast %96 : vector<8x1xf32> to vector<8x8xf32>
    %98 = arith.subf %94, %97 : vector<8x8xf32>
    %99 = math.exp %98 : vector<8x8xf32>
    %cst_44 = arith.constant dense<0.000000e+00> : vector<8xf32>
    %100 = vector.multi_reduction <add>, %99, %cst_44 [1] : vector<8x8xf32> to vector<8xf32>
    %101 = vector.shape_cast %100 : vector<8xf32> to vector<8x1xf32>
    %102 = tpu.reciprocal %101 {approx = true} : vector<8x1xf32> -> vector<8x1xf32>
    %103 = vector.broadcast %102 : vector<8x1xf32> to vector<8x8xf32>
    %104 = arith.mulf %99, %103 : vector<8x8xf32>
    %cst_45 = arith.constant dense<0.000000e+00> : vector<8x8xf32>
    %105 = tpu.matmul %104, %90, %cst_45 {dimension_numbers = #tpu.dot_dimension_numbers<[1], [0], [0], [1], [0, 0, 1, 1], [], []>} : vector<8x8xf32>, vector<8x8xf32>, vector<8x8xf32> -> vector<8x8xf32>
    %106 = vector.extract_strided_slice %4 {offsets = [24, 0], sizes = [8, 32], strides = [1, 1]} : vector<32x32xf32> to vector<8x32xf32>
    %cst_46 = arith.constant dense<0.000000e+00> : vector<8x32xf32>
    %107 = tpu.matmul %105, %106, %cst_46 {dimension_numbers = #tpu.dot_dimension_numbers<[1], [0], [0], [1], [0, 0, 1, 1], [], []>} : vector<8x8xf32>, vector<8x32xf32>, vector<8x32xf32> -> vector<8x32xf32>
    %108 = arith.addf %87, %107 : vector<8x32xf32>
    %109 = vector.broadcast %15 : vector<1x32xf32> to vector<8x32xf32>
    %110 = arith.addf %108, %109 : vector<8x32xf32>
    %111 = arith.addf %0, %110 : vector<8x32xf32>
    %cst_47 = arith.constant dense<0.000000e+00> : vector<8xf32>
    %112 = vector.multi_reduction <add>, %111, %cst_47 [1] : vector<8x32xf32> to vector<8xf32>
    %113 = vector.shape_cast %112 : vector<8xf32> to vector<8x1xf32>
    %cst_48 = arith.constant 3.200000e+01 : f32
    %114 = vector.broadcast %cst_48 : f32 to vector<8x1xf32>
    %115 = arith.divf %113, %114 : vector<8x1xf32>
    %116 = vector.broadcast %115 : vector<8x1xf32> to vector<8x32xf32>
    %117 = arith.subf %111, %116 : vector<8x32xf32>
    %118 = arith.mulf %117, %117 : vector<8x32xf32>
    %cst_49 = arith.constant dense<0.000000e+00> : vector<8xf32>
    %119 = vector.multi_reduction <add>, %118, %cst_49 [1] : vector<8x32xf32> to vector<8xf32>
    %120 = vector.shape_cast %119 : vector<8xf32> to vector<8x1xf32>
    %cst_50 = arith.constant 3.200000e+01 : f32
    %121 = vector.broadcast %cst_50 : f32 to vector<8x1xf32>
    %122 = arith.divf %120, %121 : vector<8x1xf32>
    %cst_51 = arith.constant 9.99999974E-6 : f32
    %123 = vector.broadcast %cst_51 : f32 to vector<8x1xf32>
    %124 = arith.addf %122, %123 : vector<8x1xf32>
    %125 = math.rsqrt %124 : vector<8x1xf32>
    %126 = vector.broadcast %125 : vector<8x1xf32> to vector<8x32xf32>
    %127 = arith.mulf %117, %126 : vector<8x32xf32>
    %128 = vector.broadcast %16 : vector<1x32xf32> to vector<8x32xf32>
    %129 = arith.mulf %127, %128 : vector<8x32xf32>
    %130 = vector.broadcast %17 : vector<1x32xf32> to vector<8x32xf32>
    %131 = arith.addf %129, %130 : vector<8x32xf32>
    %cst_52 = arith.constant dense<0.000000e+00> : vector<8x64xf32>
    %132 = tpu.matmul %131, %6, %cst_52 {dimension_numbers = #tpu.dot_dimension_numbers<[1], [0], [0], [1], [0, 0, 1, 1], [], []>} : vector<8x32xf32>, vector<32x64xf32>, vector<8x64xf32> -> vector<8x64xf32>
    %133 = vector.broadcast %12 : vector<1x64xf32> to vector<8x64xf32>
    %134 = arith.addf %132, %133 : vector<8x64xf32>
    %cst_53 = arith.constant 0.000000e+00 : f32
    %135 = vector.broadcast %cst_53 : f32 to vector<8x64xf32>
    %136 = arith.maximumf %134, %135 : vector<8x64xf32>
    %cst_54 = arith.constant dense<0.000000e+00> : vector<8x32xf32>
    %137 = tpu.matmul %136, %8, %cst_54 {dimension_numbers = #tpu.dot_dimension_numbers<[1], [0], [0], [1], [0, 0, 1, 1], [], []>} : vector<8x64xf32>, vector<64x32xf32>, vector<8x32xf32> -> vector<8x32xf32>
    %138 = vector.broadcast %18 : vector<1x32xf32> to vector<8x32xf32>
    %139 = arith.addf %137, %138 : vector<8x32xf32>
    %140 = arith.addf %131, %139 : vector<8x32xf32>
    %cst_55 = arith.constant dense<0.000000e+00> : vector<8xf32>
    %141 = vector.multi_reduction <add>, %140, %cst_55 [1] : vector<8x32xf32> to vector<8xf32>
    %142 = vector.shape_cast %141 : vector<8xf32> to vector<8x1xf32>
    %cst_56 = arith.constant 3.200000e+01 : f32
    %143 = vector.broadcast %cst_56 : f32 to vector<8x1xf32>
    %144 = arith.divf %142, %143 : vector<8x1xf32>
    %145 = vector.broadcast %144 : vector<8x1xf32> to vector<8x32xf32>
    %146 = arith.subf %140, %145 : vector<8x32xf32>
    %147 = arith.mulf %146, %146 : vector<8x32xf32>
    %cst_57 = arith.constant dense<0.000000e+00> : vector<8xf32>
    %148 = vector.multi_reduction <add>, %147, %cst_57 [1] : vector<8x32xf32> to vector<8xf32>
    %149 = vector.shape_cast %148 : vector<8xf32> to vector<8x1xf32>
    %cst_58 = arith.constant 3.200000e+01 : f32
    %150 = vector.broadcast %cst_58 : f32 to vector<8x1xf32>
    %151 = arith.divf %149, %150 : vector<8x1xf32>
    %cst_59 = arith.constant 9.99999974E-6 : f32
    %152 = vector.broadcast %cst_59 : f32 to vector<8x1xf32>
    %153 = arith.addf %151, %152 : vector<8x1xf32>
    %154 = math.rsqrt %153 : vector<8x1xf32>
    %155 = vector.broadcast %154 : vector<8x1xf32> to vector<8x32xf32>
    %156 = arith.mulf %146, %155 : vector<8x32xf32>
    %157 = vector.broadcast %19 : vector<1x32xf32> to vector<8x32xf32>
    %158 = arith.mulf %156, %157 : vector<8x32xf32>
    %159 = vector.broadcast %20 : vector<1x32xf32> to vector<8x32xf32>
    %160 = arith.addf %158, %159 : vector<8x32xf32>
    %c1 = arith.constant 1 : index
    %c0_60 = arith.constant 0 : index
    %c0_61 = arith.constant 0 : index
    %161 = vector.load %arg2[%c1, %c0_60, %c0_61] : memref<2x32x96xf32, #tpu.memory_space<vmem>>, vector<1x32x96xf32>
    %162 = vector.shape_cast %161 : vector<1x32x96xf32> to vector<32x96xf32>
    %c1_62 = arith.constant 1 : index
    %c0_63 = arith.constant 0 : index
    %c0_64 = arith.constant 0 : index
    %163 = vector.load %arg3[%c1_62, %c0_63, %c0_64] : memref<2x32x32xf32, #tpu.memory_space<vmem>>, vector<1x32x32xf32>
    %164 = vector.shape_cast %163 : vector<1x32x32xf32> to vector<32x32xf32>
    %c1_65 = arith.constant 1 : index
    %c0_66 = arith.constant 0 : index
    %c0_67 = arith.constant 0 : index
    %165 = vector.load %arg4[%c1_65, %c0_66, %c0_67] : memref<2x32x64xf32, #tpu.memory_space<vmem>>, vector<1x32x64xf32>
    %166 = vector.shape_cast %165 : vector<1x32x64xf32> to vector<32x64xf32>
    %c1_68 = arith.constant 1 : index
    %c0_69 = arith.constant 0 : index
    %c0_70 = arith.constant 0 : index
    %167 = vector.load %arg5[%c1_68, %c0_69, %c0_70] : memref<2x64x32xf32, #tpu.memory_space<vmem>>, vector<1x64x32xf32>
    %168 = vector.shape_cast %167 : vector<1x64x32xf32> to vector<64x32xf32>
    %c1_71 = arith.constant 1 : index
    %c0_72 = arith.constant 0 : index
    %c0_73 = arith.constant 0 : index
    %169 = vector.load %arg6[%c1_71, %c0_72, %c0_73] : memref<2x1x96xf32, #tpu.memory_space<vmem>>, vector<1x1x96xf32>
    %170 = vector.shape_cast %169 : vector<1x1x96xf32> to vector<1x96xf32>
    %c1_74 = arith.constant 1 : index
    %c0_75 = arith.constant 0 : index
    %c0_76 = arith.constant 0 : index
    %171 = vector.load %arg7[%c1_74, %c0_75, %c0_76] : memref<2x1x64xf32, #tpu.memory_space<vmem>>, vector<1x1x64xf32>
    %172 = vector.shape_cast %171 : vector<1x1x64xf32> to vector<1x64xf32>
    %c1_77 = arith.constant 1 : index
    %c0_78 = arith.constant 0 : index
    %c0_79 = arith.constant 0 : index
    %173 = vector.load %arg8[%c1_77, %c0_78, %c0_79] : memref<2x6x32xf32, #tpu.memory_space<vmem>>, vector<1x6x32xf32>
    %174 = vector.shape_cast %173 : vector<1x6x32xf32> to vector<6x32xf32>
    %175 = vector.extract_strided_slice %174 {offsets = [0, 0], sizes = [1, 32], strides = [1, 1]} : vector<6x32xf32> to vector<1x32xf32>
    %176 = vector.extract_strided_slice %174 {offsets = [1, 0], sizes = [1, 32], strides = [1, 1]} : vector<6x32xf32> to vector<1x32xf32>
    %177 = vector.extract_strided_slice %174 {offsets = [2, 0], sizes = [1, 32], strides = [1, 1]} : vector<6x32xf32> to vector<1x32xf32>
    %178 = vector.extract_strided_slice %174 {offsets = [3, 0], sizes = [1, 32], strides = [1, 1]} : vector<6x32xf32> to vector<1x32xf32>
    %179 = vector.extract_strided_slice %174 {offsets = [4, 0], sizes = [1, 32], strides = [1, 1]} : vector<6x32xf32> to vector<1x32xf32>
    %180 = vector.extract_strided_slice %174 {offsets = [5, 0], sizes = [1, 32], strides = [1, 1]} : vector<6x32xf32> to vector<1x32xf32>
    %cst_80 = arith.constant dense<0.000000e+00> : vector<8x96xf32>
    %181 = tpu.matmul %160, %162, %cst_80 {dimension_numbers = #tpu.dot_dimension_numbers<[1], [0], [0], [1], [0, 0, 1, 1], [], []>} : vector<8x32xf32>, vector<32x96xf32>, vector<8x96xf32> -> vector<8x96xf32>
    %182 = vector.broadcast %170 : vector<1x96xf32> to vector<8x96xf32>
    %183 = arith.addf %181, %182 : vector<8x96xf32>
    %cst_81 = arith.constant 0.000000e+00 : f32
    %184 = vector.broadcast %cst_81 : f32 to vector<8x32xf32>
    %185 = vector.extract_strided_slice %183 {offsets = [0, 0], sizes = [8, 8], strides = [1, 1]} : vector<8x96xf32> to vector<8x8xf32>
    %186 = vector.extract_strided_slice %183 {offsets = [0, 32], sizes = [8, 8], strides = [1, 1]} : vector<8x96xf32> to vector<8x8xf32>
    %187 = vector.extract_strided_slice %183 {offsets = [0, 64], sizes = [8, 8], strides = [1, 1]} : vector<8x96xf32> to vector<8x8xf32>
    %188 = tpu.transpose %186, [1, 0] : vector<8x8xf32> -> vector<8x8xf32>
    %cst_82 = arith.constant dense<0.000000e+00> : vector<8x8xf32>
    %189 = tpu.matmul %185, %188, %cst_82 {dimension_numbers = #tpu.dot_dimension_numbers<[1], [0], [0], [1], [0, 0, 1, 1], [], []>} : vector<8x8xf32>, vector<8x8xf32>, vector<8x8xf32> -> vector<8x8xf32>
    %cst_83 = arith.constant 0.353553385 : f32
    %190 = vector.broadcast %cst_83 : f32 to vector<8x8xf32>
    %191 = arith.mulf %189, %190 : vector<8x8xf32>
    %cst_84 = arith.constant dense<0xFF800000> : vector<8xf32>
    %192 = vector.multi_reduction <maximumf>, %191, %cst_84 [1] : vector<8x8xf32> to vector<8xf32>
    %193 = vector.shape_cast %192 : vector<8xf32> to vector<8x1xf32>
    %194 = vector.broadcast %193 : vector<8x1xf32> to vector<8x8xf32>
    %195 = arith.subf %191, %194 : vector<8x8xf32>
    %196 = math.exp %195 : vector<8x8xf32>
    %cst_85 = arith.constant dense<0.000000e+00> : vector<8xf32>
    %197 = vector.multi_reduction <add>, %196, %cst_85 [1] : vector<8x8xf32> to vector<8xf32>
    %198 = vector.shape_cast %197 : vector<8xf32> to vector<8x1xf32>
    %199 = tpu.reciprocal %198 {approx = true} : vector<8x1xf32> -> vector<8x1xf32>
    %200 = vector.broadcast %199 : vector<8x1xf32> to vector<8x8xf32>
    %201 = arith.mulf %196, %200 : vector<8x8xf32>
    %cst_86 = arith.constant dense<0.000000e+00> : vector<8x8xf32>
    %202 = tpu.matmul %201, %187, %cst_86 {dimension_numbers = #tpu.dot_dimension_numbers<[1], [0], [0], [1], [0, 0, 1, 1], [], []>} : vector<8x8xf32>, vector<8x8xf32>, vector<8x8xf32> -> vector<8x8xf32>
    %203 = vector.extract_strided_slice %164 {offsets = [0, 0], sizes = [8, 32], strides = [1, 1]} : vector<32x32xf32> to vector<8x32xf32>
    %cst_87 = arith.constant dense<0.000000e+00> : vector<8x32xf32>
    %204 = tpu.matmul %202, %203, %cst_87 {dimension_numbers = #tpu.dot_dimension_numbers<[1], [0], [0], [1], [0, 0, 1, 1], [], []>} : vector<8x8xf32>, vector<8x32xf32>, vector<8x32xf32> -> vector<8x32xf32>
    %205 = arith.addf %184, %204 : vector<8x32xf32>
    %206 = vector.extract_strided_slice %183 {offsets = [0, 8], sizes = [8, 8], strides = [1, 1]} : vector<8x96xf32> to vector<8x8xf32>
    %207 = vector.extract_strided_slice %183 {offsets = [0, 40], sizes = [8, 8], strides = [1, 1]} : vector<8x96xf32> to vector<8x8xf32>
    %208 = vector.extract_strided_slice %183 {offsets = [0, 72], sizes = [8, 8], strides = [1, 1]} : vector<8x96xf32> to vector<8x8xf32>
    %209 = tpu.transpose %207, [1, 0] : vector<8x8xf32> -> vector<8x8xf32>
    %cst_88 = arith.constant dense<0.000000e+00> : vector<8x8xf32>
    %210 = tpu.matmul %206, %209, %cst_88 {dimension_numbers = #tpu.dot_dimension_numbers<[1], [0], [0], [1], [0, 0, 1, 1], [], []>} : vector<8x8xf32>, vector<8x8xf32>, vector<8x8xf32> -> vector<8x8xf32>
    %cst_89 = arith.constant 0.353553385 : f32
    %211 = vector.broadcast %cst_89 : f32 to vector<8x8xf32>
    %212 = arith.mulf %210, %211 : vector<8x8xf32>
    %cst_90 = arith.constant dense<0xFF800000> : vector<8xf32>
    %213 = vector.multi_reduction <maximumf>, %212, %cst_90 [1] : vector<8x8xf32> to vector<8xf32>
    %214 = vector.shape_cast %213 : vector<8xf32> to vector<8x1xf32>
    %215 = vector.broadcast %214 : vector<8x1xf32> to vector<8x8xf32>
    %216 = arith.subf %212, %215 : vector<8x8xf32>
    %217 = math.exp %216 : vector<8x8xf32>
    %cst_91 = arith.constant dense<0.000000e+00> : vector<8xf32>
    %218 = vector.multi_reduction <add>, %217, %cst_91 [1] : vector<8x8xf32> to vector<8xf32>
    %219 = vector.shape_cast %218 : vector<8xf32> to vector<8x1xf32>
    %220 = tpu.reciprocal %219 {approx = true} : vector<8x1xf32> -> vector<8x1xf32>
    %221 = vector.broadcast %220 : vector<8x1xf32> to vector<8x8xf32>
    %222 = arith.mulf %217, %221 : vector<8x8xf32>
    %cst_92 = arith.constant dense<0.000000e+00> : vector<8x8xf32>
    %223 = tpu.matmul %222, %208, %cst_92 {dimension_numbers = #tpu.dot_dimension_numbers<[1], [0], [0], [1], [0, 0, 1, 1], [], []>} : vector<8x8xf32>, vector<8x8xf32>, vector<8x8xf32> -> vector<8x8xf32>
    %224 = vector.extract_strided_slice %164 {offsets = [8, 0], sizes = [8, 32], strides = [1, 1]} : vector<32x32xf32> to vector<8x32xf32>
    %cst_93 = arith.constant dense<0.000000e+00> : vector<8x32xf32>
    %225 = tpu.matmul %223, %224, %cst_93 {dimension_numbers = #tpu.dot_dimension_numbers<[1], [0], [0], [1], [0, 0, 1, 1], [], []>} : vector<8x8xf32>, vector<8x32xf32>, vector<8x32xf32> -> vector<8x32xf32>
    %226 = arith.addf %205, %225 : vector<8x32xf32>
    %227 = vector.extract_strided_slice %183 {offsets = [0, 16], sizes = [8, 8], strides = [1, 1]} : vector<8x96xf32> to vector<8x8xf32>
    %228 = vector.extract_strided_slice %183 {offsets = [0, 48], sizes = [8, 8], strides = [1, 1]} : vector<8x96xf32> to vector<8x8xf32>
    %229 = vector.extract_strided_slice %183 {offsets = [0, 80], sizes = [8, 8], strides = [1, 1]} : vector<8x96xf32> to vector<8x8xf32>
    %230 = tpu.transpose %228, [1, 0] : vector<8x8xf32> -> vector<8x8xf32>
    %cst_94 = arith.constant dense<0.000000e+00> : vector<8x8xf32>
    %231 = tpu.matmul %227, %230, %cst_94 {dimension_numbers = #tpu.dot_dimension_numbers<[1], [0], [0], [1], [0, 0, 1, 1], [], []>} : vector<8x8xf32>, vector<8x8xf32>, vector<8x8xf32> -> vector<8x8xf32>
    %cst_95 = arith.constant 0.353553385 : f32
    %232 = vector.broadcast %cst_95 : f32 to vector<8x8xf32>
    %233 = arith.mulf %231, %232 : vector<8x8xf32>
    %cst_96 = arith.constant dense<0xFF800000> : vector<8xf32>
    %234 = vector.multi_reduction <maximumf>, %233, %cst_96 [1] : vector<8x8xf32> to vector<8xf32>
    %235 = vector.shape_cast %234 : vector<8xf32> to vector<8x1xf32>
    %236 = vector.broadcast %235 : vector<8x1xf32> to vector<8x8xf32>
    %237 = arith.subf %233, %236 : vector<8x8xf32>
    %238 = math.exp %237 : vector<8x8xf32>
    %cst_97 = arith.constant dense<0.000000e+00> : vector<8xf32>
    %239 = vector.multi_reduction <add>, %238, %cst_97 [1] : vector<8x8xf32> to vector<8xf32>
    %240 = vector.shape_cast %239 : vector<8xf32> to vector<8x1xf32>
    %241 = tpu.reciprocal %240 {approx = true} : vector<8x1xf32> -> vector<8x1xf32>
    %242 = vector.broadcast %241 : vector<8x1xf32> to vector<8x8xf32>
    %243 = arith.mulf %238, %242 : vector<8x8xf32>
    %cst_98 = arith.constant dense<0.000000e+00> : vector<8x8xf32>
    %244 = tpu.matmul %243, %229, %cst_98 {dimension_numbers = #tpu.dot_dimension_numbers<[1], [0], [0], [1], [0, 0, 1, 1], [], []>} : vector<8x8xf32>, vector<8x8xf32>, vector<8x8xf32> -> vector<8x8xf32>
    %245 = vector.extract_strided_slice %164 {offsets = [16, 0], sizes = [8, 32], strides = [1, 1]} : vector<32x32xf32> to vector<8x32xf32>
    %cst_99 = arith.constant dense<0.000000e+00> : vector<8x32xf32>
    %246 = tpu.matmul %244, %245, %cst_99 {dimension_numbers = #tpu.dot_dimension_numbers<[1], [0], [0], [1], [0, 0, 1, 1], [], []>} : vector<8x8xf32>, vector<8x32xf32>, vector<8x32xf32> -> vector<8x32xf32>
    %247 = arith.addf %226, %246 : vector<8x32xf32>
    %248 = vector.extract_strided_slice %183 {offsets = [0, 24], sizes = [8, 8], strides = [1, 1]} : vector<8x96xf32> to vector<8x8xf32>
    %249 = vector.extract_strided_slice %183 {offsets = [0, 56], sizes = [8, 8], strides = [1, 1]} : vector<8x96xf32> to vector<8x8xf32>
    %250 = vector.extract_strided_slice %183 {offsets = [0, 88], sizes = [8, 8], strides = [1, 1]} : vector<8x96xf32> to vector<8x8xf32>
    %251 = tpu.transpose %249, [1, 0] : vector<8x8xf32> -> vector<8x8xf32>
    %cst_100 = arith.constant dense<0.000000e+00> : vector<8x8xf32>
    %252 = tpu.matmul %248, %251, %cst_100 {dimension_numbers = #tpu.dot_dimension_numbers<[1], [0], [0], [1], [0, 0, 1, 1], [], []>} : vector<8x8xf32>, vector<8x8xf32>, vector<8x8xf32> -> vector<8x8xf32>
    %cst_101 = arith.constant 0.353553385 : f32
    %253 = vector.broadcast %cst_101 : f32 to vector<8x8xf32>
    %254 = arith.mulf %252, %253 : vector<8x8xf32>
    %cst_102 = arith.constant dense<0xFF800000> : vector<8xf32>
    %255 = vector.multi_reduction <maximumf>, %254, %cst_102 [1] : vector<8x8xf32> to vector<8xf32>
    %256 = vector.shape_cast %255 : vector<8xf32> to vector<8x1xf32>
    %257 = vector.broadcast %256 : vector<8x1xf32> to vector<8x8xf32>
    %258 = arith.subf %254, %257 : vector<8x8xf32>
    %259 = math.exp %258 : vector<8x8xf32>
    %cst_103 = arith.constant dense<0.000000e+00> : vector<8xf32>
    %260 = vector.multi_reduction <add>, %259, %cst_103 [1] : vector<8x8xf32> to vector<8xf32>
    %261 = vector.shape_cast %260 : vector<8xf32> to vector<8x1xf32>
    %262 = tpu.reciprocal %261 {approx = true} : vector<8x1xf32> -> vector<8x1xf32>
    %263 = vector.broadcast %262 : vector<8x1xf32> to vector<8x8xf32>
    %264 = arith.mulf %259, %263 : vector<8x8xf32>
    %cst_104 = arith.constant dense<0.000000e+00> : vector<8x8xf32>
    %265 = tpu.matmul %264, %250, %cst_104 {dimension_numbers = #tpu.dot_dimension_numbers<[1], [0], [0], [1], [0, 0, 1, 1], [], []>} : vector<8x8xf32>, vector<8x8xf32>, vector<8x8xf32> -> vector<8x8xf32>
    %266 = vector.extract_strided_slice %164 {offsets = [24, 0], sizes = [8, 32], strides = [1, 1]} : vector<32x32xf32> to vector<8x32xf32>
    %cst_105 = arith.constant dense<0.000000e+00> : vector<8x32xf32>
    %267 = tpu.matmul %265, %266, %cst_105 {dimension_numbers = #tpu.dot_dimension_numbers<[1], [0], [0], [1], [0, 0, 1, 1], [], []>} : vector<8x8xf32>, vector<8x32xf32>, vector<8x32xf32> -> vector<8x32xf32>
    %268 = arith.addf %247, %267 : vector<8x32xf32>
    %269 = vector.broadcast %175 : vector<1x32xf32> to vector<8x32xf32>
    %270 = arith.addf %268, %269 : vector<8x32xf32>
    %271 = arith.addf %160, %270 : vector<8x32xf32>
    %cst_106 = arith.constant dense<0.000000e+00> : vector<8xf32>
    %272 = vector.multi_reduction <add>, %271, %cst_106 [1] : vector<8x32xf32> to vector<8xf32>
    %273 = vector.shape_cast %272 : vector<8xf32> to vector<8x1xf32>
    %cst_107 = arith.constant 3.200000e+01 : f32
    %274 = vector.broadcast %cst_107 : f32 to vector<8x1xf32>
    %275 = arith.divf %273, %274 : vector<8x1xf32>
    %276 = vector.broadcast %275 : vector<8x1xf32> to vector<8x32xf32>
    %277 = arith.subf %271, %276 : vector<8x32xf32>
    %278 = arith.mulf %277, %277 : vector<8x32xf32>
    %cst_108 = arith.constant dense<0.000000e+00> : vector<8xf32>
    %279 = vector.multi_reduction <add>, %278, %cst_108 [1] : vector<8x32xf32> to vector<8xf32>
    %280 = vector.shape_cast %279 : vector<8xf32> to vector<8x1xf32>
    %cst_109 = arith.constant 3.200000e+01 : f32
    %281 = vector.broadcast %cst_109 : f32 to vector<8x1xf32>
    %282 = arith.divf %280, %281 : vector<8x1xf32>
    %cst_110 = arith.constant 9.99999974E-6 : f32
    %283 = vector.broadcast %cst_110 : f32 to vector<8x1xf32>
    %284 = arith.addf %282, %283 : vector<8x1xf32>
    %285 = math.rsqrt %284 : vector<8x1xf32>
    %286 = vector.broadcast %285 : vector<8x1xf32> to vector<8x32xf32>
    %287 = arith.mulf %277, %286 : vector<8x32xf32>
    %288 = vector.broadcast %176 : vector<1x32xf32> to vector<8x32xf32>
    %289 = arith.mulf %287, %288 : vector<8x32xf32>
    %290 = vector.broadcast %177 : vector<1x32xf32> to vector<8x32xf32>
    %291 = arith.addf %289, %290 : vector<8x32xf32>
    %cst_111 = arith.constant dense<0.000000e+00> : vector<8x64xf32>
    %292 = tpu.matmul %291, %166, %cst_111 {dimension_numbers = #tpu.dot_dimension_numbers<[1], [0], [0], [1], [0, 0, 1, 1], [], []>} : vector<8x32xf32>, vector<32x64xf32>, vector<8x64xf32> -> vector<8x64xf32>
    %293 = vector.broadcast %172 : vector<1x64xf32> to vector<8x64xf32>
    %294 = arith.addf %292, %293 : vector<8x64xf32>
    %cst_112 = arith.constant 0.000000e+00 : f32
    %295 = vector.broadcast %cst_112 : f32 to vector<8x64xf32>
    %296 = arith.maximumf %294, %295 : vector<8x64xf32>
    %cst_113 = arith.constant dense<0.000000e+00> : vector<8x32xf32>
    %297 = tpu.matmul %296, %168, %cst_113 {dimension_numbers = #tpu.dot_dimension_numbers<[1], [0], [0], [1], [0, 0, 1, 1], [], []>} : vector<8x64xf32>, vector<64x32xf32>, vector<8x32xf32> -> vector<8x32xf32>
    %298 = vector.broadcast %178 : vector<1x32xf32> to vector<8x32xf32>
    %299 = arith.addf %297, %298 : vector<8x32xf32>
    %300 = arith.addf %291, %299 : vector<8x32xf32>
    %cst_114 = arith.constant dense<0.000000e+00> : vector<8xf32>
    %301 = vector.multi_reduction <add>, %300, %cst_114 [1] : vector<8x32xf32> to vector<8xf32>
    %302 = vector.shape_cast %301 : vector<8xf32> to vector<8x1xf32>
    %cst_115 = arith.constant 3.200000e+01 : f32
    %303 = vector.broadcast %cst_115 : f32 to vector<8x1xf32>
    %304 = arith.divf %302, %303 : vector<8x1xf32>
    %305 = vector.broadcast %304 : vector<8x1xf32> to vector<8x32xf32>
    %306 = arith.subf %300, %305 : vector<8x32xf32>
    %307 = arith.mulf %306, %306 : vector<8x32xf32>
    %cst_116 = arith.constant dense<0.000000e+00> : vector<8xf32>
    %308 = vector.multi_reduction <add>, %307, %cst_116 [1] : vector<8x32xf32> to vector<8xf32>
    %309 = vector.shape_cast %308 : vector<8xf32> to vector<8x1xf32>
    %cst_117 = arith.constant 3.200000e+01 : f32
    %310 = vector.broadcast %cst_117 : f32 to vector<8x1xf32>
    %311 = arith.divf %309, %310 : vector<8x1xf32>
    %cst_118 = arith.constant 9.99999974E-6 : f32
    %312 = vector.broadcast %cst_118 : f32 to vector<8x1xf32>
    %313 = arith.addf %311, %312 : vector<8x1xf32>
    %314 = math.rsqrt %313 : vector<8x1xf32>
    %315 = vector.broadcast %314 : vector<8x1xf32> to vector<8x32xf32>
    %316 = arith.mulf %306, %315 : vector<8x32xf32>
    %317 = vector.broadcast %179 : vector<1x32xf32> to vector<8x32xf32>
    %318 = arith.mulf %316, %317 : vector<8x32xf32>
    %319 = vector.broadcast %180 : vector<1x32xf32> to vector<8x32xf32>
    %320 = arith.addf %318, %319 : vector<8x32xf32>
    %c0_119 = arith.constant 0 : index
    %c0_120 = arith.constant 0 : index
    %321 = vector.load %arg9[%c0_119, %c0_120] : memref<8x32xf32, #tpu.memory_space<vmem>>, vector<8x32xf32>
    tpu.vector_store %arg9[%c0_119, %c0_120], %320 {strides = array<i32>} : memref<8x32xf32, #tpu.memory_space<vmem>>, vector<8x32xf32>,
    return
  }
  func.func @transform_0(%arg0: i32) -> (i32, i32) {
    %c0_i32 = arith.constant 0 : i32
    %c0_i32_0 = arith.constant 0 : i32
    return %arg0, %c0_i32 : i32, i32
  }
  func.func @transform_1(%arg0: i32) -> (i32, i32, i32) {
    %c0_i32 = arith.constant 0 : i32
    %c0_i32_0 = arith.constant 0 : i32
    %c0_i32_1 = arith.constant 0 : i32
    %c0_i32_2 = arith.constant 0 : i32
    return %c0_i32, %c0_i32_0, %c0_i32_1 : i32, i32, i32
  }
  func.func @transform_2(%arg0: i32) -> (i32, i32, i32) {
    %c0_i32 = arith.constant 0 : i32
    %c0_i32_0 = arith.constant 0 : i32
    %c0_i32_1 = arith.constant 0 : i32
    %c0_i32_2 = arith.constant 0 : i32
    return %c0_i32, %c0_i32_0, %c0_i32_1 : i32, i32, i32
  }
  func.func @transform_3(%arg0: i32) -> (i32, i32, i32) {
    %c0_i32 = arith.constant 0 : i32
    %c0_i32_0 = arith.constant 0 : i32
    %c0_i32_1 = arith.constant 0 : i32
    %c0_i32_2 = arith.constant 0 : i32
    return %c0_i32, %c0_i32_0, %c0_i32_1 : i32, i32, i32
  }
  func.func @transform_4(%arg0: i32) -> (i32, i32, i32) {
    %c0_i32 = arith.constant 0 : i32
    %c0_i32_0 = arith.constant 0 : i32
    %c0_i32_1 = arith.constant 0 : i32
    %c0_i32_2 = arith.constant 0 : i32
    return %c0_i32, %c0_i32_0, %c0_i32_1 : i32, i32, i32
  }
  func.func @transform_5(%arg0: i32) -> (i32, i32, i32) {
    %c0_i32 = arith.constant 0 : i32
    %c0_i32_0 = arith.constant 0 : i32
    %c0_i32_1 = arith.constant 0 : i32
    %c0_i32_2 = arith.constant 0 : i32
    return %c0_i32, %c0_i32_0, %c0_i32_1 : i32, i32, i32
  }
  func.func @transform_6(%arg0: i32) -> (i32, i32, i32) {
    %c0_i32 = arith.constant 0 : i32
    %c0_i32_0 = arith.constant 0 : i32
    %c0_i32_1 = arith.constant 0 : i32
    %c0_i32_2 = arith.constant 0 : i32
    return %c0_i32, %c0_i32_0, %c0_i32_1 : i32, i32, i32
  }
  func.func @transform_7(%arg0: i32) -> (i32, i32, i32) {
    %c0_i32 = arith.constant 0 : i32
    %c0_i32_0 = arith.constant 0 : i32
    %c0_i32_1 = arith.constant 0 : i32
    %c0_i32_2 = arith.constant 0 : i32
    return %c0_i32, %c0_i32_0, %c0_i32_1 : i32, i32, i32
  }
  func.func @transform_8(%arg0: i32) -> (i32, i32) {
    %c0_i32 = arith.constant 0 : i32
    %c0_i32_0 = arith.constant 0 : i32
    return %arg0, %c0_i32 : i32, i32
  }
}

</mosaic_0001>

<llo_original>
// kernel: tpu_custom_call.1
$region0: #{tpu_custom_call.1}
  #allocation0 [shape = 'u32[]', space=smem, size = 0x4, offset = 0x4, fixed_abs, tag = 'smem constant byte address 0x4 - core index']
  #allocation1 [shape = 'u32[144,128]{1,0:T(1,128)}', space=vmem, size = 0x12000, scoped, tag = 'internal scratch']
  %s0 = inlined_call_operand.vmem [shape: f32[16,32], index: 0, kind: input, shape index: {}]
  %s1 = inlined_call_operand.vmem [shape: f32[2,32,96], index: 1, kind: input, shape index: {}]
  %s2 = inlined_call_operand.vmem [shape: f32[2,32,32], index: 2, kind: input, shape index: {}]
  %s3 = inlined_call_operand.vmem [shape: f32[2,32,64], index: 3, kind: input, shape index: {}]
  %s4 = inlined_call_operand.vmem [shape: f32[2,64,32], index: 4, kind: input, shape index: {}]
  %s5 = inlined_call_operand.vmem [shape: f32[2,1,96], index: 5, kind: input, shape index: {}]
  %s6 = inlined_call_operand.vmem [shape: f32[2,1,64], index: 6, kind: input, shape index: {}]
  %s7 = inlined_call_operand.vmem [shape: f32[2,6,32], index: 7, kind: input, shape index: {}]
  %s8 = inlined_call_operand.hbm [shape: f32[16,32], index: 8, kind: output, shape index: {}]
  %s9 = sld [smem:[#allocation0]]
  $region65: #{tpu_custom_call.1} parent=0
    _
  %s11 = ssub.s32 1, %s9
  %s12 = scalar_select 0, %s11, %s9
  $region1: #{tpu_custom_call.1} parent=0
    #allocation2 [shape = 'u8[8192]{0}', space=vmem, size = 0x2000, scoped, tag = 'output window, operand 0']
    #allocation3 [shape = 's32[2]{0}', space=sflag, size = 0x8, scoped, tag = 'scoped memory for tpu_custom_call.1']
    %13 = vsyncpa [#allocation3], 0
    %s14 = scalar_lea.sflag [#allocation3], 1
    %15 = vsyncpa %s14, 0
    loop: start=0, step=1, limit=4
    $region2: #{tpu_custom_call.1} parent=1 // loop_pre_header
      _
    $region3: #{tpu_custom_call.1} parent=1 // loop_header
      %s17 = sphi 0, %s21
      %p18 = scmp.ge.s32.totalorder %s17, 4
      %s27 = sphi 0, %s29
      %s30 = sphi 0, %s27
      %s31 = sphi 0, %s30
      %s47 = sphi 0, %s31
      %s51 = sphi 0, %s51
      %s53 = sphi 0, %s51
      %s54 = sphi 0, %s53
      %s68 = sphi 0, %s54
      %s72 = sphi 0, %s72
      %s74 = sphi 0, %s72
      %s75 = sphi 0, %s74
      %s89 = sphi 0, %s75
      %s93 = sphi 0, %s93
      %s95 = sphi 0, %s93
      %s96 = sphi 0, %s95
      %s110 = sphi 0, %s96
      %s114 = sphi 0, %s114
      %s116 = sphi 0, %s114
      %s117 = sphi 0, %s116
      %s131 = sphi 0, %s117
      %s135 = sphi 0, %s135
      %s137 = sphi 0, %s135
      %s138 = sphi 0, %s137
      %s152 = sphi 0, %s138
      %s156 = sphi 0, %s156
      %s158 = sphi 0, %s156
      %s159 = sphi 0, %s158
      %s173 = sphi 0, %s159
      %s177 = sphi 0, %s177
      %s179 = sphi 0, %s177
      %s180 = sphi 0, %s179
      %s194 = sphi 0, %s180
      %s200 = sphi 0, %s202
      %s203 = sphi 0, %s200
      %s204 = sphi 0, %s203
      %s220 = sphi 0, %s204
    $region4: #{tpu_custom_call.1} parent=1 // loop_header_branch
      %20 = sbr.rel (%p18) target = $region8
    $region5: #{tpu_custom_call.1} parent=1 // loop_body
      %s22 = ssub.s32 %s17, 1
      %s23 = ssub.s32 %s17, 2
      %s24 = sadd.s32 %s17, 1
      %s25 = ssub.s32 %s17, %s24
      %p26 = scmp.eq.s32.totalorder %s25, 0
      %s28 = sadd.s32 %s27, 1
      %s29 = scalar_select %p26, %s27, %s28
      %p32 = pneg %p26
      %p33 = scmp.eq.s32.totalorder %s17, 1
      %p34 = por %p32, %p33
      %p35 = scmp.ne.s32.totalorder %s27, %s30
      %p36 = scmp.eq.s32.totalorder %s17, 0
      %p37 = por %p35, %p36
      %p38 = scmp.ne.s32.totalorder %s27, %s30
      %p39 = scmp.eq.s32.totalorder %s22, 1
      %p40 = por %p38, %p39
      %p41 = scmp.ne.s32.totalorder %s30, %s31
      %p42 = scmp.eq.s32.totalorder %s22, 0
      %p43 = por %p41, %p42
      %p44 = scmp.ne.s32.totalorder %s30, %s31
      %p45 = scmp.eq.s32.totalorder %s23, 1
      %p46 = por %p44, %p45
      %p48 = scmp.ne.s32.totalorder %s31, %s47
      %p49 = scmp.eq.s32.totalorder %s23, 0
      %p50 = por %p48, %p49
      %s52 = sadd.s32 %s51, 1
      %p55 = scmp.eq.s32.totalorder %s17, 1
      %p56 = scmp.ne.s32.totalorder %s51, %s53
      %p57 = scmp.eq.s32.totalorder %s17, 0
      %p58 = por %p56, %p57
      %p59 = scmp.ne.s32.totalorder %s51, %s53
      %p60 = scmp.eq.s32.totalorder %s22, 1
      %p61 = por %p59, %p60
      %p62 = scmp.ne.s32.totalorder %s53, %s54
      %p63 = scmp.eq.s32.totalorder %s22, 0
      %p64 = por %p62, %p63
      %p65 = scmp.ne.s32.totalorder %s53, %s54
      %p66 = scmp.eq.s32.totalorder %s23, 1
      %p67 = por %p65, %p66
      %p69 = scmp.ne.s32.totalorder %s54, %s68
      %p70 = scmp.eq.s32.totalorder %s23, 0
      %p71 = por %p69, %p70
      %s73 = sadd.s32 %s72, 1
      %p76 = scmp.eq.s32.totalorder %s17, 1
      %p77 = scmp.ne.s32.totalorder %s72, %s74
      %p78 = scmp.eq.s32.totalorder %s17, 0
      %p79 = por %p77, %p78
      %p80 = scmp.ne.s32.totalorder %s72, %s74
      %p81 = scmp.eq.s32.totalorder %s22, 1
      %p82 = por %p80, %p81
      %p83 = scmp.ne.s32.totalorder %s74, %s75
      %p84 = scmp.eq.s32.totalorder %s22, 0
      %p85 = por %p83, %p84
      %p86 = scmp.ne.s32.totalorder %s74, %s75
      %p87 = scmp.eq.s32.totalorder %s23, 1
      %p88 = por %p86, %p87
      %p90 = scmp.ne.s32.totalorder %s75, %s89
      %p91 = scmp.eq.s32.totalorder %s23, 0
      %p92 = por %p90, %p91
      %s94 = sadd.s32 %s93, 1
      %p97 = scmp.eq.s32.totalorder %s17, 1
      %p98 = scmp.ne.s32.totalorder %s93, %s95
      %p99 = scmp.eq.s32.totalorder %s17, 0
      %p100 = por %p98, %p99
      %p101 = scmp.ne.s32.totalorder %s93, %s95
      %p102 = scmp.eq.s32.totalorder %s22, 1
      %p103 = por %p101, %p102
      %p104 = scmp.ne.s32.totalorder %s95, %s96
      %p105 = scmp.eq.s32.totalorder %s22, 0
      %p106 = por %p104, %p105
      %p107 = scmp.ne.s32.totalorder %s95, %s96
      %p108 = scmp.eq.s32.totalorder %s23, 1
      %p109 = por %p107, %p108
      %p111 = scmp.ne.s32.totalorder %s96, %s110
      %p112 = scmp.eq.s32.totalorder %s23, 0
      %p113 = por %p111, %p112
      %s115 = sadd.s32 %s114, 1
      %p118 = scmp.eq.s32.totalorder %s17, 1
      %p119 = scmp.ne.s32.totalorder %s114, %s116
      %p120 = scmp.eq.s32.totalorder %s17, 0
      %p121 = por %p119, %p120
      %p122 = scmp.ne.s32.totalorder %s114, %s116
      %p123 = scmp.eq.s32.totalorder %s22, 1
      %p124 = por %p122, %p123
      %p125 = scmp.ne.s32.totalorder %s116, %s117
      %p126 = scmp.eq.s32.totalorder %s22, 0
      %p127 = por %p125, %p126
      %p128 = scmp.ne.s32.totalorder %s116, %s117
      %p129 = scmp.eq.s32.totalorder %s23, 1
      %p130 = por %p128, %p129
      %p132 = scmp.ne.s32.totalorder %s117, %s131
      %p133 = scmp.eq.s32.totalorder %s23, 0
      %p134 = por %p132, %p133
      %s136 = sadd.s32 %s135, 1
      %p139 = scmp.eq.s32.totalorder %s17, 1
      %p140 = scmp.ne.s32.totalorder %s135, %s137
      %p141 = scmp.eq.s32.totalorder %s17, 0
      %p142 = por %p140, %p141
      %p143 = scmp.ne.s32.totalorder %s135, %s137
      %p144 = scmp.eq.s32.totalorder %s22, 1
      %p145 = por %p143, %p144
      %p146 = scmp.ne.s32.totalorder %s137, %s138
      %p147 = scmp.eq.s32.totalorder %s22, 0
      %p148 = por %p146, %p147
      %p149 = scmp.ne.s32.totalorder %s137, %s138
      %p150 = scmp.eq.s32.totalorder %s23, 1
      %p151 = por %p149, %p150
      %p153 = scmp.ne.s32.totalorder %s138, %s152
      %p154 = scmp.eq.s32.totalorder %s23, 0
      %p155 = por %p153, %p154
      %s157 = sadd.s32 %s156, 1
      %p160 = scmp.eq.s32.totalorder %s17, 1
      %p161 = scmp.ne.s32.totalorder %s156, %s158
      %p162 = scmp.eq.s32.totalorder %s17, 0
      %p163 = por %p161, %p162
      %p164 = scmp.ne.s32.totalorder %s156, %s158
      %p165 = scmp.eq.s32.totalorder %s22, 1
      %p166 = por %p164, %p165
      %p167 = scmp.ne.s32.totalorder %s158, %s159
      %p168 = scmp.eq.s32.totalorder %s22, 0
      %p169 = por %p167, %p168
      %p170 = scmp.ne.s32.totalorder %s158, %s159
      %p171 = scmp.eq.s32.totalorder %s23, 1
      %p172 = por %p170, %p171
      %p174 = scmp.ne.s32.totalorder %s159, %s173
      %p175 = scmp.eq.s32.totalorder %s23, 0
      %p176 = por %p174, %p175
      %s178 = sadd.s32 %s177, 1
      %p181 = scmp.eq.s32.totalorder %s17, 1
      %p182 = scmp.ne.s32.totalorder %s177, %s179
      %p183 = scmp.eq.s32.totalorder %s17, 0
      %p184 = por %p182, %p183
      %p185 = scmp.ne.s32.totalorder %s177, %s179
      %p186 = scmp.eq.s32.totalorder %s22, 1
      %p187 = por %p185, %p186
      %p188 = scmp.ne.s32.totalorder %s179, %s180
      %p189 = scmp.eq.s32.totalorder %s22, 0
      %p190 = por %p188, %p189
      %p191 = scmp.ne.s32.totalorder %s179, %s180
      %p192 = scmp.eq.s32.totalorder %s23, 1
      %p193 = por %p191, %p192
      %p195 = scmp.ne.s32.totalorder %s180, %s194
      %p196 = scmp.eq.s32.totalorder %s23, 0
      %p197 = por %p195, %p196
      %s198 = ssub.s32 %s17, %s24
      %p199 = scmp.eq.s32.totalorder %s198, 0
      %s201 = sadd.s32 %s200, 1
      %s202 = scalar_select %p199, %s200, %s201
      %p205 = pneg %p199
      %p206 = scmp.eq.s32.totalorder %s17, 1
      %p207 = por %p205, %p206
      %p208 = scmp.ne.s32.totalorder %s200, %s203
      %p209 = scmp.eq.s32.totalorder %s17, 0
      %p210 = por %p208, %p209
      %p211 = scmp.ne.s32.totalorder %s200, %s203
      %p212 = scmp.eq.s32.totalorder %s22, 1
      %p213 = por %p211, %p212
      %p214 = scmp.ne.s32.totalorder %s203, %s204
      %p215 = scmp.eq.s32.totalorder %s22, 0
      %p216 = por %p214, %p215
      %p217 = scmp.ne.s32.totalorder %s203, %s204
      %p218 = scmp.eq.s32.totalorder %s23, 1
      %p219 = por %p217, %p218
      %p221 = scmp.ne.s32.totalorder %s204, %s220
      %p222 = scmp.eq.s32.totalorder %s23, 0
      %p223 = por %p221, %p222
      %p224 = scmp.le.s32.totalorder 1, %s17
      %p225 = scmp.lt.s32.totalorder %s17, 3
      %p226 = pnand %p224, %p225
      %p227 = pneg %p226
      // Predicated region
      $region9: #{tpu_custom_call.1} parent=5 // pred_check
        _
      $region10: #{tpu_custom_call.1} parent=5 // pred_check_branch
        %229 = sbr.rel (%p226) target = $region12
      $region11: #{tpu_custom_call.1} parent=5 // pred_region
        %s230 = ssub.s32 %s17, 1
        // Predicated region
        $region13: #{tpu_custom_call.1} parent=11 // pred_check
          %p231 = pneg %p64
        $region14: #{tpu_custom_call.1} parent=11 // pred_check_branch
          %233 = sbr.rel (%p231) target = $region16
        $region15: #{tpu_custom_call.1} parent=11 // pred_region
          _
        $region16: #{tpu_custom_call.1} parent=11 // pred_fallthru
          _
        // Predicated region
        $region17: #{tpu_custom_call.1} parent=11 // pred_check
          %p234 = pneg %p85
        $region18: #{tpu_custom_call.1} parent=11 // pred_check_branch
          %236 = sbr.rel (%p234) target = $region20
        $region19: #{tpu_custom_call.1} parent=11 // pred_region
          _
        $region20: #{tpu_custom_call.1} parent=11 // pred_fallthru
          _
        // Predicated region
        $region21: #{tpu_custom_call.1} parent=11 // pred_check
          %p237 = pneg %p106
        $region22: #{tpu_custom_call.1} parent=11 // pred_check_branch
          %239 = sbr.rel (%p237) target = $region24
        $region23: #{tpu_custom_call.1} parent=11 // pred_region
          _
        $region24: #{tpu_custom_call.1} parent=11 // pred_fallthru
          _
        // Predicated region
        $region25: #{tpu_custom_call.1} parent=11 // pred_check
          %p240 = pneg %p127
        $region26: #{tpu_custom_call.1} parent=11 // pred_check_branch
          %242 = sbr.rel (%p240) target = $region28
        $region27: #{tpu_custom_call.1} parent=11 // pred_region
          _
        $region28: #{tpu_custom_call.1} parent=11 // pred_fallthru
          _
        // Predicated region
        $region29: #{tpu_custom_call.1} parent=11 // pred_check
          %p243 = pneg %p148
        $region30: #{tpu_custom_call.1} parent=11 // pred_check_branch
          %245 = sbr.rel (%p243) target = $region32
        $region31: #{tpu_custom_call.1} parent=11 // pred_region
          _
        $region32: #{tpu_custom_call.1} parent=11 // pred_fallthru
          _
        // Predicated region
        $region33: #{tpu_custom_call.1} parent=11 // pred_check
          %p246 = pneg %p169
        $region34: #{tpu_custom_call.1} parent=11 // pred_check_branch
          %248 = sbr.rel (%p246) target = $region36
        $region35: #{tpu_custom_call.1} parent=11 // pred_region
          _
        $region36: #{tpu_custom_call.1} parent=11 // pred_fallthru
          _
        // Predicated region
        $region37: #{tpu_custom_call.1} parent=11 // pred_check
          %p249 = pneg %p190
        $region38: #{tpu_custom_call.1} parent=11 // pred_check_branch
          %251 = sbr.rel (%p249) target = $region40
        $region39: #{tpu_custom_call.1} parent=11 // pred_region
          _
        $region40: #{tpu_custom_call.1} parent=11 // pred_fallthru
          _
      $region12: #{tpu_custom_call.1} parent=5 // pred_fallthru
        _
      %p252 = scmp.lt.s32.totalorder %s17, 2
      // Predicated region
      $region41: #{tpu_custom_call.1} parent=5 // pred_check
        %p253 = pneg %p252
      $region42: #{tpu_custom_call.1} parent=5 // pred_check_branch
        %255 = sbr.rel (%p253) target = $region44
      $region43: #{tpu_custom_call.1} parent=5 // pred_region
        // Predicated region
        $region45: #{tpu_custom_call.1} parent=43 // pred_check
          %p256 = pneg %p37
        $region46: #{tpu_custom_call.1} parent=43 // pred_check_branch
          %258 = sbr.rel (%p256) target = $region48
        $region47: #{tpu_custom_call.1} parent=43 // pred_region
          %p259 = scmp.lt.s32.totalorder %s17, 1
          %s260 = scalar_select %p259, %s17, 1
          %s261 = smul.addr %s260, 8
          %s262 = scalar_lea.vmem %s0, %s261
        $region48: #{tpu_custom_call.1} parent=43 // pred_fallthru
          _
      $region44: #{tpu_custom_call.1} parent=5 // pred_fallthru
        _
      %p263 = scmp.le.s32.totalorder 1, %s17
      %p264 = scmp.lt.s32.totalorder %s17, 3
      %p265 = pnand %p263, %p264
      %p266 = pneg %p265
      // Predicated region
      $region49: #{tpu_custom_call.1} parent=5 // pred_check
        _
      $region50: #{tpu_custom_call.1} parent=5 // pred_check_branch
        %268 = sbr.rel (%p265) target = $region52
      $region51: #{tpu_custom_call.1} parent=5 // pred_region
        %s269 = ssub.s32 %s17, 1
        %p270 = scmp.lt.s32.totalorder %s22, 1
        %s271 = scalar_select %p270, %s22, 1
        %s272 = smul.addr %s271, 8
        %s273 = scalar_lea.vmem %s0, %s272
        %p274 = pneg %p43
        %p275 = pneg %p40
        %p276 = pneg %p64
        %p277 = pneg %p61
        %p278 = pneg %p85
        %p279 = pneg %p82
        %p280 = pneg %p106
        %p281 = pneg %p103
        %p282 = pneg %p127
        %p283 = pneg %p124
        %p284 = pneg %p148
        %p285 = pneg %p145
        %p286 = pneg %p169
        %p287 = pneg %p166
        %p288 = pneg %p190
        %p289 = pneg %p187
        %p290 = pneg %p216
        %p291 = pneg %p213
        %s292 = sand.u32 %s203, 1
        %s293 = scalar_lea.sflag [#allocation3], %s292
        %s294 = sand.u32 %s203, 1
        %s295 = smul.addr %s294, 8
        %s296 = scalar_lea.vmem [#allocation2], %s295
        %p297 = scmp.lt.s32.totalorder %s22, 1
        %s298 = scalar_select %p297, %s22, 1
        %s299 = smul.addr %s298, 8
        %s300 = scalar_lea.vmem %s0, %s299
        %v301 = vld [vmem:[%s300] sm:$0xff]
        %v302 = vld [vmem:[%s1] sm:$0xff]
        %v303 = vld [vmem:[%s1 + $0x8] sm:$0xff]
        %v304 = vld [vmem:[%s1 + $0x10] sm:$0xff]
        %v305 = vld [vmem:[%s1 + $0x18] sm:$0xff]
        %v306 = vld [vmem:[%s2] sm:$0xff]
        %v307 = vld [vmem:[%s2 + $0x8] sm:$0xff]
        %v308 = vld [vmem:[%s2 + $0x10] sm:$0xff]
        %v309 = vld [vmem:[%s2 + $0x18] sm:$0xff]
        %v310 = vld [vmem:[%s3] sm:$0xff]
        %v311 = vld [vmem:[%s3 + $0x8] sm:$0xff]
        %v312 = vld [vmem:[%s3 + $0x10] sm:$0xff]
        %v313 = vld [vmem:[%s3 + $0x18] sm:$0xff]
        %v314 = vld [vmem:[%s4] sm:$0xff]
        %v315 = vld [vmem:[%s4 + $0x8] sm:$0xff]
        %v316 = vld [vmem:[%s4 + $0x10] sm:$0xff]
        %v317 = vld [vmem:[%s4 + $0x18] sm:$0xff]
        %v318 = vld [vmem:[%s4 + $0x20] sm:$0xff]
        %v319 = vld [vmem:[%s4 + $0x28] sm:$0xff]
        %v320 = vld [vmem:[%s4 + $0x30] sm:$0xff]
        %v321 = vld [vmem:[%s4 + $0x38] sm:$0xff]
        %v322 = vld [vmem:[%s5] sm:$0x1]
        %v323 = vld [vmem:[%s6] sm:$0x1]
        %v324 = vld [vmem:[%s7] sm:$0x3f]
        %v326 = vlaneseq
        %v327 = vshrl.u32 %v326, 7
        %v328 = vsub.s32 0, %v327
        %v329 = vrot.slane %v322, %v328
        %vm331 = vcmask 261120
        %v333 = vsel %vm331, %v301, 0
        %335 = vmatprep.subr.mxu0 0.0
        %336 = vmatpush1.msra.mxu0 %v302
        %337 = vmatprep.subr.mxu0 0.0
        %338 = vmatpush1.msra.mxu0 %v303
        %339 = vmatprep.subr.mxu0 0.0
        %340 = vmatpush1.msra.mxu0 %v304
        %341 = vmatprep.subr.mxu0 0.0
        %342 = vmatpush1.msra.mxu0 %v305
        %343 = vmatprep.subr.mxu0 0.0
        %344 = vmatpush1.msra.mxu0 0.0
        %345 = vmatprep.subr.mxu0 0.0
        %346 = vmatpush1.msra.mxu0 0.0
        %347 = vmatprep.subr.mxu0 0.0
        %348 = vmatpush1.msra.mxu0 0.0
        %349 = vmatprep.subr.mxu0 0.0
        %350 = vmatpush1.msra.mxu0 0.0
        %351 = vmatprep.subr.mxu0 0.0
        %352 = vmatpush1.msra.mxu0 0.0
        %353 = vmatprep.subr.mxu0 0.0
        %354 = vmatpush1.msra.mxu0 0.0
        %355 = vmatprep.subr.mxu0 0.0
        %356 = vmatpush1.msra.mxu0 0.0
        %357 = vmatprep.subr.mxu0 0.0
        %358 = vmatpush1.msra.mxu0 0.0
        %359 = vmatprep.subr.mxu0 0.0
        %360 = vmatpush1.msra.mxu0 0.0
        %361 = vmatprep.subr.mxu0 0.0
        %362 = vmatpush1.msra.mxu0 0.0
        %363 = vmatprep.subr.mxu0 0.0
        %364 = vmatpush1.msra.mxu0 0.0
        %365 = vmatprep.subr.mxu0 0.0
        %366 = vmatpush1.msra.mxu0 0.0
        %367 = vmatprep.subr.mxu0 0.0
        %368 = vmatpush1.msra.mxu0 0.0
        %369 = vmatprep.subr.mxu0 0.0
        %370 = vmatpush1.msra.mxu0 0.0
        %371 = vmatprep.subr.mxu0 0.0
        %372 = vmatpush1.msra.mxu0 0.0
        %373 = vmatprep.subr.mxu0 0.0
        %374 = vmatpush1.msra.mxu0 0.0
        %375 = vmatprep.subr.mxu0 0.0
        %376 = vmatpush1.msra.mxu0 0.0
        %377 = vmatprep.subr.mxu0 0.0
        %378 = vmatpush1.msra.mxu0 0.0
        %379 = vmatprep.subr.mxu0 0.0
        %380 = vmatpush1.msra.mxu0 0.0
        %381 = vmatprep.subr.mxu0 0.0
        %382 = vmatpush1.msra.mxu0 0.0
        %383 = vmatprep.subr.mxu0 0.0
        %384 = vmatpush1.msra.mxu0 0.0
        %385 = vmatprep.subr.mxu0 0.0
        %386 = vmatpush1.msra.mxu0 0.0
        %387 = vmatprep.subr.mxu0 0.0
        %388 = vmatpush1.msra.mxu0 0.0
        %389 = vmatprep.subr.mxu0 0.0
        %390 = vmatpush1.msra.mxu0 0.0
        %391 = vmatprep.subr.mxu0 0.0
        %392 = vmatpush1.msra.mxu0 0.0
        %393 = vmatprep.subr.mxu0 0.0
        %394 = vmatpush1.msra.mxu0 0.0
        %395 = vmatprep.subr.mxu0 0.0
        %396 = vmatpush1.msra.mxu0 0.0
        %397 = vmatprep.subr.mxu0 0.0
        %398 = vmatpush1.msra.mxu0 0.0
        %399 = vmatprep.mubr.f32.mxu0 0.0
        %400 = vmatmul.mubr.f32.gmra.mrb[0].mxu0 %v333
        %v401 = vpop.f32.mrb[0].mxu0
        %v402 = vadd.f32 %v329, %v401
        %v403 = vpop.f32.mrb[0].mxu0
        %404 = vdwg.mxu0
        %406 = vrot.lane.b32.xlu0 %v402, 96
        %v407 = vpop.permute.xlu0 %406
        %vm408 = vcmask 64512
        %v409 = vsel %vm408, %v402, 0
        %v411 = vsel %vm408, %v407, 0
        %413 = vmatprep.subr.mxu0 0.0
        %414 = vmatpush1.xpose.msra.mxu0 %v411
        %415 = vmatprep.subr.mxu0 0.0
        %416 = vmatpush1.xpose.msra.mxu0 0.0
        %417 = vmatprep.subr.mxu0 0.0
        %418 = vmatpush1.xpose.msra.mxu0 0.0
        %419 = vmatprep.subr.mxu0 0.0
        %420 = vmatpush1.xpose.msra.mxu0 0.0
        %421 = vmatprep.subr.mxu0 0.0
        %422 = vmatpush1.xpose.msra.mxu0 0.0
        %423 = vmatprep.subr.mxu0 0.0
        %424 = vmatpush1.xpose.msra.mxu0 0.0
        %425 = vmatprep.subr.mxu0 0.0
        %426 = vmatpush1.xpose.msra.mxu0 0.0
        %427 = vmatprep.subr.mxu0 0.0
        %428 = vmatpush1.xpose.msra.mxu0 0.0
        %429 = vmatprep.subr.mxu0 0.0
        %430 = vmatpush1.xpose.msra.mxu0 0.0
        %431 = vmatprep.subr.mxu0 0.0
        %432 = vmatpush1.xpose.msra.mxu0 0.0
        %433 = vmatprep.subr.mxu0 0.0
        %434 = vmatpush1.xpose.msra.mxu0 0.0
        %435 = vmatprep.subr.mxu0 0.0
        %436 = vmatpush1.xpose.msra.mxu0 0.0
        %437 = vmatprep.subr.mxu0 0.0
        %438 = vmatpush1.xpose.msra.mxu0 0.0
        %439 = vmatprep.subr.mxu0 0.0
        %440 = vmatpush1.xpose.msra.mxu0 0.0
        %441 = vmatprep.subr.mxu0 0.0
        %442 = vmatpush1.xpose.msra.mxu0 0.0
        %443 = vmatprep.subr.mxu0 0.0
        %444 = vmatpush1.xpose.msra.mxu0 0.0
        %445 = vmatprep.subr.mxu0 0.0
        %446 = vmatpush1.xpose.msra.mxu0 0.0
        %447 = vmatprep.subr.mxu0 0.0
        %448 = vmatpush1.xpose.msra.mxu0 0.0
        %449 = vmatprep.subr.mxu0 0.0
        %450 = vmatpush1.xpose.msra.mxu0 0.0
        %451 = vmatprep.subr.mxu0 0.0
        %452 = vmatpush1.xpose.msra.mxu0 0.0
        %453 = vmatprep.subr.mxu0 0.0
        %454 = vmatpush1.xpose.msra.mxu0 0.0
        %455 = vmatprep.subr.mxu0 0.0
        %456 = vmatpush1.xpose.msra.mxu0 0.0
        %457 = vmatprep.subr.mxu0 0.0
        %458 = vmatpush1.xpose.msra.mxu0 0.0
        %459 = vmatprep.subr.mxu0 0.0
        %460 = vmatpush1.xpose.msra.mxu0 0.0
        %461 = vmatprep.subr.mxu0 0.0
        %462 = vmatpush1.xpose.msra.mxu0 0.0
        %463 = vmatprep.subr.mxu0 0.0
        %464 = vmatpush1.xpose.msra.mxu0 0.0
        %465 = vmatprep.subr.mxu0 0.0
        %466 = vmatpush1.xpose.msra.mxu0 0.0
        %467 = vmatprep.subr.mxu0 0.0
        %468 = vmatpush1.xpose.msra.mxu0 0.0
        %469 = vmatprep.subr.mxu0 0.0
        %470 = vmatpush1.xpose.msra.mxu0 0.0
        %471 = vmatprep.subr.mxu0 0.0
        %472 = vmatpush1.xpose.msra.mxu0 0.0
        %473 = vmatprep.subr.mxu0 0.0
        %474 = vmatpush1.xpose.msra.mxu0 0.0
        %475 = vmatprep.subr.mxu0 0.0
        %476 = vmatpush1.xpose.msra.mxu0 0.0
        %477 = vmatprep.mubr.f32.mxu0 0.0
        %478 = vmatmul.mubr.f32.gmra.mrb[0].mxu0 %v409
        %v479 = vpop.f32.mrb[0].mxu0
        %v480 = vadd.f32 0.0, %v479
        %v481 = vpop.f32.mrb[0].mxu0
        %482 = vdwg.mxu0
        %v483 = vmul.f32 %v480, 0.35355338
        %v484 = vsel %vm408, %v483, -inf
        %485 = vmax.xlane.f32.xlu0 %v484
        %v486 = vpop.xlane.xlu0 %485
        %v487 = vsub.f32 %v483, %v486
        %v488 = vmul.f32 %v487, 1.442695
        %v489 = vpow.pop %v488
        %v490 = vsel %vm408, %v489, 0.0
        %491 = vadd.xlane.f32.xlu0 %v490
        %v492 = vpop.xlane.xlu0 %491
        %v493 = vrcp.pop %v492
        %v494 = vmul.f32 %v489, %v493
        %495 = vrot.lane.b32.xlu0 %v402, 64
        %v496 = vpop.permute.xlu0 %495
        %v499 = vsel %vm408, %v494, 0
        %501 = vmatprep.subr.mxu0 0.0
        %502 = vmatpush1.msra.mxu0 %v496
        %503 = vmatprep.subr.mxu0 0.0
        %504 = vmatpush1.msra.mxu0 0.0
        %505 = vmatprep.subr.mxu0 0.0
        %506 = vmatpush1.msra.mxu0 0.0
        %507 = vmatprep.subr.mxu0 0.0
        %508 = vmatpush1.msra.mxu0 0.0
        %509 = vmatprep.subr.mxu0 0.0
        %510 = vmatpush1.msra.mxu0 0.0
        %511 = vmatprep.subr.mxu0 0.0
        %512 = vmatpush1.msra.mxu0 0.0
        %513 = vmatprep.subr.mxu0 0.0
        %514 = vmatpush1.msra.mxu0 0.0
        %515 = vmatprep.subr.mxu0 0.0
        %516 = vmatpush1.msra.mxu0 0.0
        %517 = vmatprep.subr.mxu0 0.0
        %518 = vmatpush1.msra.mxu0 0.0
        %519 = vmatprep.subr.mxu0 0.0
        %520 = vmatpush1.msra.mxu0 0.0
        %521 = vmatprep.subr.mxu0 0.0
        %522 = vmatpush1.msra.mxu0 0.0
        %523 = vmatprep.subr.mxu0 0.0
        %524 = vmatpush1.msra.mxu0 0.0
        %525 = vmatprep.subr.mxu0 0.0
        %526 = vmatpush1.msra.mxu0 0.0
        %527 = vmatprep.subr.mxu0 0.0
        %528 = vmatpush1.msra.mxu0 0.0
        %529 = vmatprep.subr.mxu0 0.0
        %530 = vmatpush1.msra.mxu0 0.0
        %531 = vmatprep.subr.mxu0 0.0
        %532 = vmatpush1.msra.mxu0 0.0
        %533 = vmatprep.subr.mxu0 0.0
        %534 = vmatpush1.msra.mxu0 0.0
        %535 = vmatprep.subr.mxu0 0.0
        %536 = vmatpush1.msra.mxu0 0.0
        %537 = vmatprep.subr.mxu0 0.0
        %538 = vmatpush1.msra.mxu0 0.0
        %539 = vmatprep.subr.mxu0 0.0
        %540 = vmatpush1.msra.mxu0 0.0
        %541 = vmatprep.subr.mxu0 0.0
        %542 = vmatpush1.msra.mxu0 0.0
        %543 = vmatprep.subr.mxu0 0.0
        %544 = vmatpush1.msra.mxu0 0.0
        %545 = vmatprep.subr.mxu0 0.0
        %546 = vmatpush1.msra.mxu0 0.0
        %547 = vmatprep.subr.mxu0 0.0
        %548 = vmatpush1.msra.mxu0 0.0
        %549 = vmatprep.subr.mxu0 0.0
        %550 = vmatpush1.msra.mxu0 0.0
        %551 = vmatprep.subr.mxu0 0.0
        %552 = vmatpush1.msra.mxu0 0.0
        %553 = vmatprep.subr.mxu0 0.0
        %554 = vmatpush1.msra.mxu0 0.0
        %555 = vmatprep.subr.mxu0 0.0
        %556 = vmatpush1.msra.mxu0 0.0
        %557 = vmatprep.subr.mxu0 0.0
        %558 = vmatpush1.msra.mxu0 0.0
        %559 = vmatprep.subr.mxu0 0.0
        %560 = vmatpush1.msra.mxu0 0.0
        %561 = vmatprep.subr.mxu0 0.0
        %562 = vmatpush1.msra.mxu0 0.0
        %563 = vmatprep.subr.mxu0 0.0
        %564 = vmatpush1.msra.mxu0 0.0
        %565 = vmatprep.mubr.f32.mxu0 0.0
        %566 = vmatmul.mubr.f32.gmra.mrb[0].mxu0 %v499
        %v567 = vpop.f32.mrb[0].mxu0
        %v568 = vadd.f32 0.0, %v567
        %v569 = vpop.f32.mrb[0].mxu0
        %570 = vdwg.mxu0
        %571 = vrot.lane.b32.xlu0 %v402, 120
        %v572 = vpop.permute.xlu0 %571
        %573 = vrot.lane.b32.xlu0 %v402, 88
        %v574 = vpop.permute.xlu0 %573
        %v575 = vsel %vm408, %v572, 0
        %v577 = vsel %vm408, %v574, 0
        %579 = vmatprep.subr.mxu0 0.0
        %580 = vmatpush1.xpose.msra.mxu0 %v577
        %581 = vmatprep.subr.mxu0 0.0
        %582 = vmatpush1.xpose.msra.mxu0 0.0
        %583 = vmatprep.subr.mxu0 0.0
        %584 = vmatpush1.xpose.msra.mxu0 0.0
        %585 = vmatprep.subr.mxu0 0.0
        %586 = vmatpush1.xpose.msra.mxu0 0.0
        %587 = vmatprep.subr.mxu0 0.0
        %588 = vmatpush1.xpose.msra.mxu0 0.0
        %589 = vmatprep.subr.mxu0 0.0
        %590 = vmatpush1.xpose.msra.mxu0 0.0
        %591 = vmatprep.subr.mxu0 0.0
        %592 = vmatpush1.xpose.msra.mxu0 0.0
        %593 = vmatprep.subr.mxu0 0.0
        %594 = vmatpush1.xpose.msra.mxu0 0.0
        %595 = vmatprep.subr.mxu0 0.0
        %596 = vmatpush1.xpose.msra.mxu0 0.0
        %597 = vmatprep.subr.mxu0 0.0
        %598 = vmatpush1.xpose.msra.mxu0 0.0
        %599 = vmatprep.subr.mxu0 0.0
        %600 = vmatpush1.xpose.msra.mxu0 0.0
        %601 = vmatprep.subr.mxu0 0.0
        %602 = vmatpush1.xpose.msra.mxu0 0.0
        %603 = vmatprep.subr.mxu0 0.0
        %604 = vmatpush1.xpose.msra.mxu0 0.0
        %605 = vmatprep.subr.mxu0 0.0
        %606 = vmatpush1.xpose.msra.mxu0 0.0
        %607 = vmatprep.subr.mxu0 0.0
        %608 = vmatpush1.xpose.msra.mxu0 0.0
        %609 = vmatprep.subr.mxu0 0.0
        %610 = vmatpush1.xpose.msra.mxu0 0.0
        %611 = vmatprep.subr.mxu0 0.0
        %612 = vmatpush1.xpose.msra.mxu0 0.0
        %613 = vmatprep.subr.mxu0 0.0
        %614 = vmatpush1.xpose.msra.mxu0 0.0
        %615 = vmatprep.subr.mxu0 0.0
        %616 = vmatpush1.xpose.msra.mxu0 0.0
        %617 = vmatprep.subr.mxu0 0.0
        %618 = vmatpush1.xpose.msra.mxu0 0.0
        %619 = vmatprep.subr.mxu0 0.0
        %620 = vmatpush1.xpose.msra.mxu0 0.0
        %621 = vmatprep.subr.mxu0 0.0
        %622 = vmatpush1.xpose.msra.mxu0 0.0
        %623 = vmatprep.subr.mxu0 0.0
        %624 = vmatpush1.xpose.msra.mxu0 0.0
        %625 = vmatprep.subr.mxu0 0.0
        %626 = vmatpush1.xpose.msra.mxu0 0.0
        %627 = vmatprep.subr.mxu0 0.0
        %628 = vmatpush1.xpose.msra.mxu0 0.0
        %629 = vmatprep.subr.mxu0 0.0
        %630 = vmatpush1.xpose.msra.mxu0 0.0
        %631 = vmatprep.subr.mxu0 0.0
        %632 = vmatpush1.xpose.msra.mxu0 0.0
        %633 = vmatprep.subr.mxu0 0.0
        %634 = vmatpush1.xpose.msra.mxu0 0.0
        %635 = vmatprep.subr.mxu0 0.0
        %636 = vmatpush1.xpose.msra.mxu0 0.0
        %637 = vmatprep.subr.mxu0 0.0
        %638 = vmatpush1.xpose.msra.mxu0 0.0
        %639 = vmatprep.subr.mxu0 0.0
        %640 = vmatpush1.xpose.msra.mxu0 0.0
        %641 = vmatprep.subr.mxu0 0.0
        %642 = vmatpush1.xpose.msra.mxu0 0.0
        %643 = vmatprep.mubr.f32.mxu0 0.0
        %644 = vmatmul.mubr.f32.gmra.mrb[0].mxu0 %v575
        %v645 = vpop.f32.mrb[0].mxu0
        %v646 = vadd.f32 0.0, %v645
        %v647 = vpop.f32.mrb[0].mxu0
        %648 = vdwg.mxu0
        %v649 = vmul.f32 %v646, 0.35355338
        %v650 = vsel %vm408, %v649, -inf
        %651 = vmax.xlane.f32.xlu0 %v650
        %v652 = vpop.xlane.xlu0 %651
        %v653 = vsub.f32 %v649, %v652
        %v654 = vmul.f32 %v653, 1.442695
        %v655 = vpow.pop %v654
        %v656 = vsel %vm408, %v655, 0.0
        %657 = vadd.xlane.f32.xlu0 %v656
        %v658 = vpop.xlane.xlu0 %657
        %v659 = vrcp.pop %v658
        %v660 = vmul.f32 %v655, %v659
        %661 = vrot.lane.b32.xlu0 %v402, 56
        %v662 = vpop.permute.xlu0 %661
        %v665 = vsel %vm408, %v660, 0
        %667 = vmatprep.subr.mxu0 0.0
        %668 = vmatpush1.msra.mxu0 %v662
        %669 = vmatprep.subr.mxu0 0.0
        %670 = vmatpush1.msra.mxu0 0.0
        %671 = vmatprep.subr.mxu0 0.0
        %672 = vmatpush1.msra.mxu0 0.0
        %673 = vmatprep.subr.mxu0 0.0
        %674 = vmatpush1.msra.mxu0 0.0
        %675 = vmatprep.subr.mxu0 0.0
        %676 = vmatpush1.msra.mxu0 0.0
        %677 = vmatprep.subr.mxu0 0.0
        %678 = vmatpush1.msra.mxu0 0.0
        %679 = vmatprep.subr.mxu0 0.0
        %680 = vmatpush1.msra.mxu0 0.0
        %681 = vmatprep.subr.mxu0 0.0
        %682 = vmatpush1.msra.mxu0 0.0
        %683 = vmatprep.subr.mxu0 0.0
        %684 = vmatpush1.msra.mxu0 0.0
        %685 = vmatprep.subr.mxu0 0.0
        %686 = vmatpush1.msra.mxu0 0.0
        %687 = vmatprep.subr.mxu0 0.0
        %688 = vmatpush1.msra.mxu0 0.0
        %689 = vmatprep.subr.mxu0 0.0
        %690 = vmatpush1.msra.mxu0 0.0
        %691 = vmatprep.subr.mxu0 0.0
        %692 = vmatpush1.msra.mxu0 0.0
        %693 = vmatprep.subr.mxu0 0.0
        %694 = vmatpush1.msra.mxu0 0.0
        %695 = vmatprep.subr.mxu0 0.0
        %696 = vmatpush1.msra.mxu0 0.0
        %697 = vmatprep.subr.mxu0 0.0
        %698 = vmatpush1.msra.mxu0 0.0
        %699 = vmatprep.subr.mxu0 0.0
        %700 = vmatpush1.msra.mxu0 0.0
        %701 = vmatprep.subr.mxu0 0.0
        %702 = vmatpush1.msra.mxu0 0.0
        %703 = vmatprep.subr.mxu0 0.0
        %704 = vmatpush1.msra.mxu0 0.0
        %705 = vmatprep.subr.mxu0 0.0
        %706 = vmatpush1.msra.mxu0 0.0
        %707 = vmatprep.subr.mxu0 0.0
        %708 = vmatpush1.msra.mxu0 0.0
        %709 = vmatprep.subr.mxu0 0.0
        %710 = vmatpush1.msra.mxu0 0.0
        %711 = vmatprep.subr.mxu0 0.0
        %712 = vmatpush1.msra.mxu0 0.0
        %713 = vmatprep.subr.mxu0 0.0
        %714 = vmatpush1.msra.mxu0 0.0
        %715 = vmatprep.subr.mxu0 0.0
        %716 = vmatpush1.msra.mxu0 0.0
        %717 = vmatprep.subr.mxu0 0.0
        %718 = vmatpush1.msra.mxu0 0.0
        %719 = vmatprep.subr.mxu0 0.0
        %720 = vmatpush1.msra.mxu0 0.0
        %721 = vmatprep.subr.mxu0 0.0
        %722 = vmatpush1.msra.mxu0 0.0
        %723 = vmatprep.subr.mxu0 0.0
        %724 = vmatpush1.msra.mxu0 0.0
        %725 = vmatprep.subr.mxu0 0.0
        %726 = vmatpush1.msra.mxu0 0.0
        %727 = vmatprep.subr.mxu0 0.0
        %728 = vmatpush1.msra.mxu0 0.0
        %729 = vmatprep.subr.mxu0 0.0
        %730 = vmatpush1.msra.mxu0 0.0
        %731 = vmatprep.mubr.f32.mxu0 0.0
        %732 = vmatmul.mubr.f32.gmra.mrb[0].mxu0 %v665
        %v733 = vpop.f32.mrb[0].mxu0
        %v734 = vadd.f32 0.0, %v733
        %v735 = vpop.f32.mrb[0].mxu0
        %736 = vdwg.mxu0
        %v738 = vsel %vm408, %v734, 0
        %740 = vmatprep.subr.mxu0 0.0
        %741 = vmatpush1.msra.mxu0 %v307
        %742 = vmatprep.subr.mxu0 0.0
        %743 = vmatpush1.msra.mxu0 0.0
        %744 = vmatprep.subr.mxu0 0.0
        %745 = vmatpush1.msra.mxu0 0.0
        %746 = vmatprep.subr.mxu0 0.0
        %747 = vmatpush1.msra.mxu0 0.0
        %748 = vmatprep.subr.mxu0 0.0
        %749 = vmatpush1.msra.mxu0 0.0
        %750 = vmatprep.subr.mxu0 0.0
        %751 = vmatpush1.msra.mxu0 0.0
        %752 = vmatprep.subr.mxu0 0.0
        %753 = vmatpush1.msra.mxu0 0.0
        %754 = vmatprep.subr.mxu0 0.0
        %755 = vmatpush1.msra.mxu0 0.0
        %756 = vmatprep.subr.mxu0 0.0
        %757 = vmatpush1.msra.mxu0 0.0
        %758 = vmatprep.subr.mxu0 0.0
        %759 = vmatpush1.msra.mxu0 0.0
        %760 = vmatprep.subr.mxu0 0.0
        %761 = vmatpush1.msra.mxu0 0.0
        %762 = vmatprep.subr.mxu0 0.0
        %763 = vmatpush1.msra.mxu0 0.0
        %764 = vmatprep.subr.mxu0 0.0
        %765 = vmatpush1.msra.mxu0 0.0
        %766 = vmatprep.subr.mxu0 0.0
        %767 = vmatpush1.msra.mxu0 0.0
        %768 = vmatprep.subr.mxu0 0.0
        %769 = vmatpush1.msra.mxu0 0.0
        %770 = vmatprep.subr.mxu0 0.0
        %771 = vmatpush1.msra.mxu0 0.0
        %772 = vmatprep.subr.mxu0 0.0
        %773 = vmatpush1.msra.mxu0 0.0
        %774 = vmatprep.subr.mxu0 0.0
        %775 = vmatpush1.msra.mxu0 0.0
        %776 = vmatprep.subr.mxu0 0.0
        %777 = vmatpush1.msra.mxu0 0.0
        %778 = vmatprep.subr.mxu0 0.0
        %779 = vmatpush1.msra.mxu0 0.0
        %780 = vmatprep.subr.mxu0 0.0
        %781 = vmatpush1.msra.mxu0 0.0
        %782 = vmatprep.subr.mxu0 0.0
        %783 = vmatpush1.msra.mxu0 0.0
        %784 = vmatprep.subr.mxu0 0.0
        %785 = vmatpush1.msra.mxu0 0.0
        %786 = vmatprep.subr.mxu0 0.0
        %787 = vmatpush1.msra.mxu0 0.0
        %788 = vmatprep.subr.mxu0 0.0
        %789 = vmatpush1.msra.mxu0 0.0
        %790 = vmatprep.subr.mxu0 0.0
        %791 = vmatpush1.msra.mxu0 0.0
        %792 = vmatprep.subr.mxu0 0.0
        %793 = vmatpush1.msra.mxu0 0.0
        %794 = vmatprep.subr.mxu0 0.0
        %795 = vmatpush1.msra.mxu0 0.0
        %796 = vmatprep.subr.mxu0 0.0
        %797 = vmatpush1.msra.mxu0 0.0
        %798 = vmatprep.subr.mxu0 0.0
        %799 = vmatpush1.msra.mxu0 0.0
        %800 = vmatprep.subr.mxu0 0.0
        %801 = vmatpush1.msra.mxu0 0.0
        %802 = vmatprep.subr.mxu0 0.0
        %803 = vmatpush1.msra.mxu0 0.0
        %804 = vmatprep.mubr.f32.mxu0 0.0
        %805 = vmatmul.mubr.f32.gmra.mrb[0].mxu0 %v738
        %v806 = vpop.f32.mrb[0].mxu0
        %v807 = vadd.f32 0.0, %v806
        %v808 = vpop.f32.mrb[0].mxu0
        %809 = vdwg.mxu0
        %v811 = vsel %vm408, %v568, 0
        %813 = vmatprep.subr.mxu0 0.0
        %814 = vmatpush1.msra.mxu0 %v306
        %815 = vmatprep.subr.mxu0 0.0
        %816 = vmatpush1.msra.mxu0 0.0
        %817 = vmatprep.subr.mxu0 0.0
        %818 = vmatpush1.msra.mxu0 0.0
        %819 = vmatprep.subr.mxu0 0.0
        %820 = vmatpush1.msra.mxu0 0.0
        %821 = vmatprep.subr.mxu0 0.0
        %822 = vmatpush1.msra.mxu0 0.0
        %823 = vmatprep.subr.mxu0 0.0
        %824 = vmatpush1.msra.mxu0 0.0
        %825 = vmatprep.subr.mxu0 0.0
        %826 = vmatpush1.msra.mxu0 0.0
        %827 = vmatprep.subr.mxu0 0.0
        %828 = vmatpush1.msra.mxu0 0.0
        %829 = vmatprep.subr.mxu0 0.0
        %830 = vmatpush1.msra.mxu0 0.0
        %831 = vmatprep.subr.mxu0 0.0
        %832 = vmatpush1.msra.mxu0 0.0
        %833 = vmatprep.subr.mxu0 0.0
        %834 = vmatpush1.msra.mxu0 0.0
        %835 = vmatprep.subr.mxu0 0.0
        %836 = vmatpush1.msra.mxu0 0.0
        %837 = vmatprep.subr.mxu0 0.0
        %838 = vmatpush1.msra.mxu0 0.0
        %839 = vmatprep.subr.mxu0 0.0
        %840 = vmatpush1.msra.mxu0 0.0
        %841 = vmatprep.subr.mxu0 0.0
        %842 = vmatpush1.msra.mxu0 0.0
        %843 = vmatprep.subr.mxu0 0.0
        %844 = vmatpush1.msra.mxu0 0.0
        %845 = vmatprep.subr.mxu0 0.0
        %846 = vmatpush1.msra.mxu0 0.0
        %847 = vmatprep.subr.mxu0 0.0
        %848 = vmatpush1.msra.mxu0 0.0
        %849 = vmatprep.subr.mxu0 0.0
        %850 = vmatpush1.msra.mxu0 0.0
        %851 = vmatprep.subr.mxu0 0.0
        %852 = vmatpush1.msra.mxu0 0.0
        %853 = vmatprep.subr.mxu0 0.0
        %854 = vmatpush1.msra.mxu0 0.0
        %855 = vmatprep.subr.mxu0 0.0
        %856 = vmatpush1.msra.mxu0 0.0
        %857 = vmatprep.subr.mxu0 0.0
        %858 = vmatpush1.msra.mxu0 0.0
        %859 = vmatprep.subr.mxu0 0.0
        %860 = vmatpush1.msra.mxu0 0.0
        %861 = vmatprep.subr.mxu0 0.0
        %862 = vmatpush1.msra.mxu0 0.0
        %863 = vmatprep.subr.mxu0 0.0
        %864 = vmatpush1.msra.mxu0 0.0
        %865 = vmatprep.subr.mxu0 0.0
        %866 = vmatpush1.msra.mxu0 0.0
        %867 = vmatprep.subr.mxu0 0.0
        %868 = vmatpush1.msra.mxu0 0.0
        %869 = vmatprep.subr.mxu0 0.0
        %870 = vmatpush1.msra.mxu0 0.0
        %871 = vmatprep.subr.mxu0 0.0
        %872 = vmatpush1.msra.mxu0 0.0
        %873 = vmatprep.subr.mxu0 0.0
        %874 = vmatpush1.msra.mxu0 0.0
        %875 = vmatprep.subr.mxu0 0.0
        %876 = vmatpush1.msra.mxu0 0.0
        %877 = vmatprep.mubr.f32.mxu0 0.0
        %878 = vmatmul.mubr.f32.gmra.mrb[0].mxu0 %v811
        %v879 = vpop.f32.mrb[0].mxu0
        %v880 = vadd.f32 %v807, %v879
        %v881 = vpop.f32.mrb[0].mxu0
        %882 = vdwg.mxu0
        %883 = vrot.lane.b32.xlu0 %v402, 112
        %v884 = vpop.permute.xlu0 %883
        %885 = vrot.lane.b32.xlu0 %v402, 80
        %v886 = vpop.permute.xlu0 %885
        %v887 = vsel %vm408, %v884, 0
        %v889 = vsel %vm408, %v886, 0
        %891 = vmatprep.subr.mxu0 0.0
        %892 = vmatpush1.xpose.msra.mxu0 %v889
        %893 = vmatprep.subr.mxu0 0.0
        %894 = vmatpush1.xpose.msra.mxu0 0.0
        %895 = vmatprep.subr.mxu0 0.0
        %896 = vmatpush1.xpose.msra.mxu0 0.0
        %897 = vmatprep.subr.mxu0 0.0
        %898 = vmatpush1.xpose.msra.mxu0 0.0
        %899 = vmatprep.subr.mxu0 0.0
        %900 = vmatpush1.xpose.msra.mxu0 0.0
        %901 = vmatprep.subr.mxu0 0.0
        %902 = vmatpush1.xpose.msra.mxu0 0.0
        %903 = vmatprep.subr.mxu0 0.0
        %904 = vmatpush1.xpose.msra.mxu0 0.0
        %905 = vmatprep.subr.mxu0 0.0
        %906 = vmatpush1.xpose.msra.mxu0 0.0
        %907 = vmatprep.subr.mxu0 0.0
        %908 = vmatpush1.xpose.msra.mxu0 0.0
        %909 = vmatprep.subr.mxu0 0.0
        %910 = vmatpush1.xpose.msra.mxu0 0.0
        %911 = vmatprep.subr.mxu0 0.0
        %912 = vmatpush1.xpose.msra.mxu0 0.0
        %913 = vmatprep.subr.mxu0 0.0
        %914 = vmatpush1.xpose.msra.mxu0 0.0
        %915 = vmatprep.subr.mxu0 0.0
        %916 = vmatpush1.xpose.msra.mxu0 0.0
        %917 = vmatprep.subr.mxu0 0.0
        %918 = vmatpush1.xpose.msra.mxu0 0.0
        %919 = vmatprep.subr.mxu0 0.0
        %920 = vmatpush1.xpose.msra.mxu0 0.0
        %921 = vmatprep.subr.mxu0 0.0
        %922 = vmatpush1.xpose.msra.mxu0 0.0
        %923 = vmatprep.subr.mxu0 0.0
        %924 = vmatpush1.xpose.msra.mxu0 0.0
        %925 = vmatprep.subr.mxu0 0.0
        %926 = vmatpush1.xpose.msra.mxu0 0.0
        %927 = vmatprep.subr.mxu0 0.0
        %928 = vmatpush1.xpose.msra.mxu0 0.0
        %929 = vmatprep.subr.mxu0 0.0
        %930 = vmatpush1.xpose.msra.mxu0 0.0
        %931 = vmatprep.subr.mxu0 0.0
        %932 = vmatpush1.xpose.msra.mxu0 0.0
        %933 = vmatprep.subr.mxu0 0.0
        %934 = vmatpush1.xpose.msra.mxu0 0.0
        %935 = vmatprep.subr.mxu0 0.0
        %936 = vmatpush1.xpose.msra.mxu0 0.0
        %937 = vmatprep.subr.mxu0 0.0
        %938 = vmatpush1.xpose.msra.mxu0 0.0
        %939 = vmatprep.subr.mxu0 0.0
        %940 = vmatpush1.xpose.msra.mxu0 0.0
        %941 = vmatprep.subr.mxu0 0.0
        %942 = vmatpush1.xpose.msra.mxu0 0.0
        %943 = vmatprep.subr.mxu0 0.0
        %944 = vmatpush1.xpose.msra.mxu0 0.0
        %945 = vmatprep.subr.mxu0 0.0
        %946 = vmatpush1.xpose.msra.mxu0 0.0
        %947 = vmatprep.subr.mxu0 0.0
        %948 = vmatpush1.xpose.msra.mxu0 0.0
        %949 = vmatprep.subr.mxu0 0.0
        %950 = vmatpush1.xpose.msra.mxu0 0.0
        %951 = vmatprep.subr.mxu0 0.0
        %952 = vmatpush1.xpose.msra.mxu0 0.0
        %953 = vmatprep.subr.mxu0 0.0
        %954 = vmatpush1.xpose.msra.mxu0 0.0
        %955 = vmatprep.mubr.f32.mxu0 0.0
        %956 = vmatmul.mubr.f32.gmra.mrb[0].mxu0 %v887
        %v957 = vpop.f32.mrb[0].mxu0
        %v958 = vadd.f32 0.0, %v957
        %v959 = vpop.f32.mrb[0].mxu0
        %960 = vdwg.mxu0
        %v961 = vmul.f32 %v958, 0.35355338
        %v962 = vsel %vm408, %v961, -inf
        %963 = vmax.xlane.f32.xlu0 %v962
        %v964 = vpop.xlane.xlu0 %963
        %v965 = vsub.f32 %v961, %v964
        %v966 = vmul.f32 %v965, 1.442695
        %v967 = vpow.pop %v966
        %v968 = vsel %vm408, %v967, 0.0
        %969 = vadd.xlane.f32.xlu0 %v968
        %v970 = vpop.xlane.xlu0 %969
        %v971 = vrcp.pop %v970
        %v972 = vmul.f32 %v967, %v971
        %973 = vrot.lane.b32.xlu0 %v402, 48
        %v974 = vpop.permute.xlu0 %973
        %v977 = vsel %vm408, %v972, 0
        %979 = vmatprep.subr.mxu0 0.0
        %980 = vmatpush1.msra.mxu0 %v974
        %981 = vmatprep.subr.mxu0 0.0
        %982 = vmatpush1.msra.mxu0 0.0
        %983 = vmatprep.subr.mxu0 0.0
        %984 = vmatpush1.msra.mxu0 0.0
        %985 = vmatprep.subr.mxu0 0.0
        %986 = vmatpush1.msra.mxu0 0.0
        %987 = vmatprep.subr.mxu0 0.0
        %988 = vmatpush1.msra.mxu0 0.0
        %989 = vmatprep.subr.mxu0 0.0
        %990 = vmatpush1.msra.mxu0 0.0
        %991 = vmatprep.subr.mxu0 0.0
        %992 = vmatpush1.msra.mxu0 0.0
        %993 = vmatprep.subr.mxu0 0.0
        %994 = vmatpush1.msra.mxu0 0.0
        %995 = vmatprep.subr.mxu0 0.0
        %996 = vmatpush1.msra.mxu0 0.0
        %997 = vmatprep.subr.mxu0 0.0
        %998 = vmatpush1.msra.mxu0 0.0
        %999 = vmatprep.subr.mxu0 0.0
        %1000 = vmatpush1.msra.mxu0 0.0
        %1001 = vmatprep.subr.mxu0 0.0
        %1002 = vmatpush1.msra.mxu0 0.0
        %1003 = vmatprep.subr.mxu0 0.0
        %1004 = vmatpush1.msra.mxu0 0.0
        %1005 = vmatprep.subr.mxu0 0.0
        %1006 = vmatpush1.msra.mxu0 0.0
        %1007 = vmatprep.subr.mxu0 0.0
        %1008 = vmatpush1.msra.mxu0 0.0
        %1009 = vmatprep.subr.mxu0 0.0
        %1010 = vmatpush1.msra.mxu0 0.0
        %1011 = vmatprep.subr.mxu0 0.0
        %1012 = vmatpush1.msra.mxu0 0.0
        %1013 = vmatprep.subr.mxu0 0.0
        %1014 = vmatpush1.msra.mxu0 0.0
        %1015 = vmatprep.subr.mxu0 0.0
        %1016 = vmatpush1.msra.mxu0 0.0
        %1017 = vmatprep.subr.mxu0 0.0
        %1018 = vmatpush1.msra.mxu0 0.0
        %1019 = vmatprep.subr.mxu0 0.0
        %1020 = vmatpush1.msra.mxu0 0.0
        %1021 = vmatprep.subr.mxu0 0.0
        %1022 = vmatpush1.msra.mxu0 0.0
        %1023 = vmatprep.subr.mxu0 0.0
        %1024 = vmatpush1.msra.mxu0 0.0
        %1025 = vmatprep.subr.mxu0 0.0
        %1026 = vmatpush1.msra.mxu0 0.0
        %1027 = vmatprep.subr.mxu0 0.0
        %1028 = vmatpush1.msra.mxu0 0.0
        %1029 = vmatprep.subr.mxu0 0.0
        %1030 = vmatpush1.msra.mxu0 0.0
        %1031 = vmatprep.subr.mxu0 0.0
        %1032 = vmatpush1.msra.mxu0 0.0
        %1033 = vmatprep.subr.mxu0 0.0
        %1034 = vmatpush1.msra.mxu0 0.0
        %1035 = vmatprep.subr.mxu0 0.0
        %1036 = vmatpush1.msra.mxu0 0.0
        %1037 = vmatprep.subr.mxu0 0.0
        %1038 = vmatpush1.msra.mxu0 0.0
        %1039 = vmatprep.subr.mxu0 0.0
        %1040 = vmatpush1.msra.mxu0 0.0
        %1041 = vmatprep.subr.mxu0 0.0
        %1042 = vmatpush1.msra.mxu0 0.0
        %1043 = vmatprep.mubr.f32.mxu0 0.0
        %1044 = vmatmul.mubr.f32.gmra.mrb[0].mxu0 %v977
        %v1045 = vpop.f32.mrb[0].mxu0
        %v1046 = vadd.f32 0.0, %v1045
        %v1047 = vpop.f32.mrb[0].mxu0
        %1048 = vdwg.mxu0
        %v1050 = vsel %vm408, %v1046, 0
        %1052 = vmatprep.subr.mxu0 0.0
        %1053 = vmatpush1.msra.mxu0 %v308
        %1054 = vmatprep.subr.mxu0 0.0
        %1055 = vmatpush1.msra.mxu0 0.0
        %1056 = vmatprep.subr.mxu0 0.0
        %1057 = vmatpush1.msra.mxu0 0.0
        %1058 = vmatprep.subr.mxu0 0.0
        %1059 = vmatpush1.msra.mxu0 0.0
        %1060 = vmatprep.subr.mxu0 0.0
        %1061 = vmatpush1.msra.mxu0 0.0
        %1062 = vmatprep.subr.mxu0 0.0
        %1063 = vmatpush1.msra.mxu0 0.0
        %1064 = vmatprep.subr.mxu0 0.0
        %1065 = vmatpush1.msra.mxu0 0.0
        %1066 = vmatprep.subr.mxu0 0.0
        %1067 = vmatpush1.msra.mxu0 0.0
        %1068 = vmatprep.subr.mxu0 0.0
        %1069 = vmatpush1.msra.mxu0 0.0
        %1070 = vmatprep.subr.mxu0 0.0
        %1071 = vmatpush1.msra.mxu0 0.0
        %1072 = vmatprep.subr.mxu0 0.0
        %1073 = vmatpush1.msra.mxu0 0.0
        %1074 = vmatprep.subr.mxu0 0.0
        %1075 = vmatpush1.msra.mxu0 0.0
        %1076 = vmatprep.subr.mxu0 0.0
        %1077 = vmatpush1.msra.mxu0 0.0
        %1078 = vmatprep.subr.mxu0 0.0
        %1079 = vmatpush1.msra.mxu0 0.0
        %1080 = vmatprep.subr.mxu0 0.0
        %1081 = vmatpush1.msra.mxu0 0.0
        %1082 = vmatprep.subr.mxu0 0.0
        %1083 = vmatpush1.msra.mxu0 0.0
        %1084 = vmatprep.subr.mxu0 0.0
        %1085 = vmatpush1.msra.mxu0 0.0
        %1086 = vmatprep.subr.mxu0 0.0
        %1087 = vmatpush1.msra.mxu0 0.0
        %1088 = vmatprep.subr.mxu0 0.0
        %1089 = vmatpush1.msra.mxu0 0.0
        %1090 = vmatprep.subr.mxu0 0.0
        %1091 = vmatpush1.msra.mxu0 0.0
        %1092 = vmatprep.subr.mxu0 0.0
        %1093 = vmatpush1.msra.mxu0 0.0
        %1094 = vmatprep.subr.mxu0 0.0
        %1095 = vmatpush1.msra.mxu0 0.0
        %1096 = vmatprep.subr.mxu0 0.0
        %1097 = vmatpush1.msra.mxu0 0.0
        %1098 = vmatprep.subr.mxu0 0.0
        %1099 = vmatpush1.msra.mxu0 0.0
        %1100 = vmatprep.subr.mxu0 0.0
        %1101 = vmatpush1.msra.mxu0 0.0
        %1102 = vmatprep.subr.mxu0 0.0
        %1103 = vmatpush1.msra.mxu0 0.0
        %1104 = vmatprep.subr.mxu0 0.0
        %1105 = vmatpush1.msra.mxu0 0.0
        %1106 = vmatprep.subr.mxu0 0.0
        %1107 = vmatpush1.msra.mxu0 0.0
        %1108 = vmatprep.subr.mxu0 0.0
        %1109 = vmatpush1.msra.mxu0 0.0
        %1110 = vmatprep.subr.mxu0 0.0
        %1111 = vmatpush1.msra.mxu0 0.0
        %1112 = vmatprep.subr.mxu0 0.0
        %1113 = vmatpush1.msra.mxu0 0.0
        %1114 = vmatprep.subr.mxu0 0.0
        %1115 = vmatpush1.msra.mxu0 0.0
        %1116 = vmatprep.mubr.f32.mxu0 0.0
        %1117 = vmatmul.mubr.f32.gmra.mrb[0].mxu0 %v1050
        %v1118 = vpop.f32.mrb[0].mxu0
        %v1119 = vadd.f32 0.0, %v1118
        %v1120 = vpop.f32.mrb[0].mxu0
        %1121 = vdwg.mxu0
        %v1122 = vadd.f32 %v880, %v1119
        %1123 = vrot.lane.b32.xlu0 %v402, 104
        %v1124 = vpop.permute.xlu0 %1123
        %1125 = vrot.lane.b32.xlu0 %v402, 72
        %v1126 = vpop.permute.xlu0 %1125
        %v1127 = vsel %vm408, %v1124, 0
        %v1129 = vsel %vm408, %v1126, 0
        %1131 = vmatprep.subr.mxu0 0.0
        %1132 = vmatpush1.xpose.msra.mxu0 %v1129
        %1133 = vmatprep.subr.mxu0 0.0
        %1134 = vmatpush1.xpose.msra.mxu0 0.0
        %1135 = vmatprep.subr.mxu0 0.0
        %1136 = vmatpush1.xpose.msra.mxu0 0.0
        %1137 = vmatprep.subr.mxu0 0.0
        %1138 = vmatpush1.xpose.msra.mxu0 0.0
        %1139 = vmatprep.subr.mxu0 0.0
        %1140 = vmatpush1.xpose.msra.mxu0 0.0
        %1141 = vmatprep.subr.mxu0 0.0
        %1142 = vmatpush1.xpose.msra.mxu0 0.0
        %1143 = vmatprep.subr.mxu0 0.0
        %1144 = vmatpush1.xpose.msra.mxu0 0.0
        %1145 = vmatprep.subr.mxu0 0.0
        %1146 = vmatpush1.xpose.msra.mxu0 0.0
        %1147 = vmatprep.subr.mxu0 0.0
        %1148 = vmatpush1.xpose.msra.mxu0 0.0
        %1149 = vmatprep.subr.mxu0 0.0
        %1150 = vmatpush1.xpose.msra.mxu0 0.0
        %1151 = vmatprep.subr.mxu0 0.0
        %1152 = vmatpush1.xpose.msra.mxu0 0.0
        %1153 = vmatprep.subr.mxu0 0.0
        %1154 = vmatpush1.xpose.msra.mxu0 0.0
        %1155 = vmatprep.subr.mxu0 0.0
        %1156 = vmatpush1.xpose.msra.mxu0 0.0
        %1157 = vmatprep.subr.mxu0 0.0
        %1158 = vmatpush1.xpose.msra.mxu0 0.0
        %1159 = vmatprep.subr.mxu0 0.0
        %1160 = vmatpush1.xpose.msra.mxu0 0.0
        %1161 = vmatprep.subr.mxu0 0.0
        %1162 = vmatpush1.xpose.msra.mxu0 0.0
        %1163 = vmatprep.subr.mxu0 0.0
        %1164 = vmatpush1.xpose.msra.mxu0 0.0
        %1165 = vmatprep.subr.mxu0 0.0
        %1166 = vmatpush1.xpose.msra.mxu0 0.0
        %1167 = vmatprep.subr.mxu0 0.0
        %1168 = vmatpush1.xpose.msra.mxu0 0.0
        %1169 = vmatprep.subr.mxu0 0.0
        %1170 = vmatpush1.xpose.msra.mxu0 0.0
        %1171 = vmatprep.subr.mxu0 0.0
        %1172 = vmatpush1.xpose.msra.mxu0 0.0
        %1173 = vmatprep.subr.mxu0 0.0
        %1174 = vmatpush1.xpose.msra.mxu0 0.0
        %1175 = vmatprep.subr.mxu0 0.0
        %1176 = vmatpush1.xpose.msra.mxu0 0.0
        %1177 = vmatprep.subr.mxu0 0.0
        %1178 = vmatpush1.xpose.msra.mxu0 0.0
        %1179 = vmatprep.subr.mxu0 0.0
        %1180 = vmatpush1.xpose.msra.mxu0 0.0
        %1181 = vmatprep.subr.mxu0 0.0
        %1182 = vmatpush1.xpose.msra.mxu0 0.0
        %1183 = vmatprep.subr.mxu0 0.0
        %1184 = vmatpush1.xpose.msra.mxu0 0.0
        %1185 = vmatprep.subr.mxu0 0.0
        %1186 = vmatpush1.xpose.msra.mxu0 0.0
        %1187 = vmatprep.subr.mxu0 0.0
        %1188 = vmatpush1.xpose.msra.mxu0 0.0
        %1189 = vmatprep.subr.mxu0 0.0
        %1190 = vmatpush1.xpose.msra.mxu0 0.0
        %1191 = vmatprep.subr.mxu0 0.0
        %1192 = vmatpush1.xpose.msra.mxu0 0.0
        %1193 = vmatprep.subr.mxu0 0.0
        %1194 = vmatpush1.xpose.msra.mxu0 0.0
        %1195 = vmatprep.mubr.f32.mxu0 0.0
        %1196 = vmatmul.mubr.f32.gmra.mrb[0].mxu0 %v1127
        %v1197 = vpop.f32.mrb[0].mxu0
        %v1198 = vadd.f32 0.0, %v1197
        %v1199 = vpop.f32.mrb[0].mxu0
        %1200 = vdwg.mxu0
        %v1201 = vmul.f32 %v1198, 0.35355338
        %v1202 = vsel %vm408, %v1201, -inf
        %1203 = vmax.xlane.f32.xlu0 %v1202
        %v1204 = vpop.xlane.xlu0 %1203
        %v1205 = vsub.f32 %v1201, %v1204
        %v1206 = vmul.f32 %v1205, 1.442695
        %v1207 = vpow.pop %v1206
        %v1208 = vsel %vm408, %v1207, 0.0
        %1209 = vadd.xlane.f32.xlu0 %v1208
        %v1210 = vpop.xlane.xlu0 %1209
        %v1211 = vrcp.pop %v1210
        %v1212 = vmul.f32 %v1207, %v1211
        %1213 = vrot.lane.b32.xlu0 %v402, 40
        %v1214 = vpop.permute.xlu0 %1213
        %v1217 = vsel %vm408, %v1212, 0
        %1219 = vmatprep.subr.mxu0 0.0
        %1220 = vmatpush1.msra.mxu0 %v1214
        %1221 = vmatprep.subr.mxu0 0.0
        %1222 = vmatpush1.msra.mxu0 0.0
        %1223 = vmatprep.subr.mxu0 0.0
        %1224 = vmatpush1.msra.mxu0 0.0
        %1225 = vmatprep.subr.mxu0 0.0
        %1226 = vmatpush1.msra.mxu0 0.0
        %1227 = vmatprep.subr.mxu0 0.0
        %1228 = vmatpush1.msra.mxu0 0.0
        %1229 = vmatprep.subr.mxu0 0.0
        %1230 = vmatpush1.msra.mxu0 0.0
        %1231 = vmatprep.subr.mxu0 0.0
        %1232 = vmatpush1.msra.mxu0 0.0
        %1233 = vmatprep.subr.mxu0 0.0
        %1234 = vmatpush1.msra.mxu0 0.0
        %1235 = vmatprep.subr.mxu0 0.0
        %1236 = vmatpush1.msra.mxu0 0.0
        %1237 = vmatprep.subr.mxu0 0.0
        %1238 = vmatpush1.msra.mxu0 0.0
        %1239 = vmatprep.subr.mxu0 0.0
        %1240 = vmatpush1.msra.mxu0 0.0
        %1241 = vmatprep.subr.mxu0 0.0
        %1242 = vmatpush1.msra.mxu0 0.0
        %1243 = vmatprep.subr.mxu0 0.0
        %1244 = vmatpush1.msra.mxu0 0.0
        %1245 = vmatprep.subr.mxu0 0.0
        %1246 = vmatpush1.msra.mxu0 0.0
        %1247 = vmatprep.subr.mxu0 0.0
        %1248 = vmatpush1.msra.mxu0 0.0
        %1249 = vmatprep.subr.mxu0 0.0
        %1250 = vmatpush1.msra.mxu0 0.0
        %1251 = vmatprep.subr.mxu0 0.0
        %1252 = vmatpush1.msra.mxu0 0.0
        %1253 = vmatprep.subr.mxu0 0.0
        %1254 = vmatpush1.msra.mxu0 0.0
        %1255 = vmatprep.subr.mxu0 0.0
        %1256 = vmatpush1.msra.mxu0 0.0
        %1257 = vmatprep.subr.mxu0 0.0
        %1258 = vmatpush1.msra.mxu0 0.0
        %1259 = vmatprep.subr.mxu0 0.0
        %1260 = vmatpush1.msra.mxu0 0.0
        %1261 = vmatprep.subr.mxu0 0.0
        %1262 = vmatpush1.msra.mxu0 0.0
        %1263 = vmatprep.subr.mxu0 0.0
        %1264 = vmatpush1.msra.mxu0 0.0
        %1265 = vmatprep.subr.mxu0 0.0
        %1266 = vmatpush1.msra.mxu0 0.0
        %1267 = vmatprep.subr.mxu0 0.0
        %1268 = vmatpush1.msra.mxu0 0.0
        %1269 = vmatprep.subr.mxu0 0.0
        %1270 = vmatpush1.msra.mxu0 0.0
        %1271 = vmatprep.subr.mxu0 0.0
        %1272 = vmatpush1.msra.mxu0 0.0
        %1273 = vmatprep.subr.mxu0 0.0
        %1274 = vmatpush1.msra.mxu0 0.0
        %1275 = vmatprep.subr.mxu0 0.0
        %1276 = vmatpush1.msra.mxu0 0.0
        %1277 = vmatprep.subr.mxu0 0.0
        %1278 = vmatpush1.msra.mxu0 0.0
        %1279 = vmatprep.subr.mxu0 0.0
        %1280 = vmatpush1.msra.mxu0 0.0
        %1281 = vmatprep.subr.mxu0 0.0
        %1282 = vmatpush1.msra.mxu0 0.0
        %1283 = vmatprep.mubr.f32.mxu0 0.0
        %1284 = vmatmul.mubr.f32.gmra.mrb[0].mxu0 %v1217
        %v1285 = vpop.f32.mrb[0].mxu0
        %v1286 = vadd.f32 0.0, %v1285
        %v1287 = vpop.f32.mrb[0].mxu0
        %1288 = vdwg.mxu0
        %v1290 = vsel %vm408, %v1286, 0
        %1292 = vmatprep.subr.mxu0 0.0
        %1293 = vmatpush1.msra.mxu0 %v309
        %1294 = vmatprep.subr.mxu0 0.0
        %1295 = vmatpush1.msra.mxu0 0.0
        %1296 = vmatprep.subr.mxu0 0.0
        %1297 = vmatpush1.msra.mxu0 0.0
        %1298 = vmatprep.subr.mxu0 0.0
        %1299 = vmatpush1.msra.mxu0 0.0
        %1300 = vmatprep.subr.mxu0 0.0
        %1301 = vmatpush1.msra.mxu0 0.0
        %1302 = vmatprep.subr.mxu0 0.0
        %1303 = vmatpush1.msra.mxu0 0.0
        %1304 = vmatprep.subr.mxu0 0.0
        %1305 = vmatpush1.msra.mxu0 0.0
        %1306 = vmatprep.subr.mxu0 0.0
        %1307 = vmatpush1.msra.mxu0 0.0
        %1308 = vmatprep.subr.mxu0 0.0
        %1309 = vmatpush1.msra.mxu0 0.0
        %1310 = vmatprep.subr.mxu0 0.0
        %1311 = vmatpush1.msra.mxu0 0.0
        %1312 = vmatprep.subr.mxu0 0.0
        %1313 = vmatpush1.msra.mxu0 0.0
        %1314 = vmatprep.subr.mxu0 0.0
        %1315 = vmatpush1.msra.mxu0 0.0
        %1316 = vmatprep.subr.mxu0 0.0
        %1317 = vmatpush1.msra.mxu0 0.0
        %1318 = vmatprep.subr.mxu0 0.0
        %1319 = vmatpush1.msra.mxu0 0.0
        %1320 = vmatprep.subr.mxu0 0.0
        %1321 = vmatpush1.msra.mxu0 0.0
        %1322 = vmatprep.subr.mxu0 0.0
        %1323 = vmatpush1.msra.mxu0 0.0
        %1324 = vmatprep.subr.mxu0 0.0
        %1325 = vmatpush1.msra.mxu0 0.0
        %1326 = vmatprep.subr.mxu0 0.0
        %1327 = vmatpush1.msra.mxu0 0.0
        %1328 = vmatprep.subr.mxu0 0.0
        %1329 = vmatpush1.msra.mxu0 0.0
        %1330 = vmatprep.subr.mxu0 0.0
        %1331 = vmatpush1.msra.mxu0 0.0
        %1332 = vmatprep.subr.mxu0 0.0
        %1333 = vmatpush1.msra.mxu0 0.0
        %1334 = vmatprep.subr.mxu0 0.0
        %1335 = vmatpush1.msra.mxu0 0.0
        %1336 = vmatprep.subr.mxu0 0.0
        %1337 = vmatpush1.msra.mxu0 0.0
        %1338 = vmatprep.subr.mxu0 0.0
        %1339 = vmatpush1.msra.mxu0 0.0
        %1340 = vmatprep.subr.mxu0 0.0
        %1341 = vmatpush1.msra.mxu0 0.0
        %1342 = vmatprep.subr.mxu0 0.0
        %1343 = vmatpush1.msra.mxu0 0.0
        %1344 = vmatprep.subr.mxu0 0.0
        %1345 = vmatpush1.msra.mxu0 0.0
        %1346 = vmatprep.subr.mxu0 0.0
        %1347 = vmatpush1.msra.mxu0 0.0
        %1348 = vmatprep.subr.mxu0 0.0
        %1349 = vmatpush1.msra.mxu0 0.0
        %1350 = vmatprep.subr.mxu0 0.0
        %1351 = vmatpush1.msra.mxu0 0.0
        %1352 = vmatprep.subr.mxu0 0.0
        %1353 = vmatpush1.msra.mxu0 0.0
        %1354 = vmatprep.subr.mxu0 0.0
        %1355 = vmatpush1.msra.mxu0 0.0
        %1356 = vmatprep.mubr.f32.mxu0 0.0
        %1357 = vmatmul.mubr.f32.gmra.mrb[0].mxu0 %v1290
        %v1358 = vpop.f32.mrb[0].mxu0
        %v1359 = vadd.f32 0.0, %v1358
        %v1360 = vpop.f32.mrb[0].mxu0
        %1361 = vdwg.mxu0
        %v1362 = vadd.f32 %v1122, %v1359
        %v1363 = vlaneseq
        %v1364 = vshrl.u32 %v1363, 7
        %v1365 = vsub.s32 0, %v1364
        %v1366 = vrot.slane %v324, %v1365
        %v1367 = vadd.f32 %v1362, %v1366
        %v1368 = vadd.f32 %v301, %v1367
        %v1369 = vsel %vm331, %v1368, 0.0
        %1370 = vadd.xlane.f32.xlu0 %v1369
        %v1371 = vpop.xlane.xlu0 %1370
        %v1372 = vrcp.pop 32.0
        %v1373 = vmul.f32 %v1371, %v1372
        %v1374 = vsub.f32 %v1368, %v1373
        %v1375 = vmul.f32 %v1374, %v1374
        %v1376 = vsel %vm331, %v1375, 0.0
        %1377 = vadd.xlane.f32.xlu0 %v1376
        %v1378 = vpop.xlane.xlu0 %1377
        %v1379 = vmul.f32 %v1378, %v1372
        %v1380 = vadd.f32 %v1379, 1e-05
        %v1381 = vrsqrt.pop %v1380
        %v1382 = vmul.f32 %v1374, %v1381
        %v1383 = vlaneseq
        %v1384 = vshrl.u32 %v1383, 7
        %v1385 = vsub.s32 1, %v1384
        %v1386 = vrot.slane %v324, %v1385
        %v1387 = vmul.f32 %v1382, %v1386
        %v1388 = vlaneseq
        %v1389 = vshrl.u32 %v1388, 7
        %v1390 = vsub.s32 2, %v1389
        %v1391 = vrot.slane %v324, %v1390
        %v1392 = vadd.f32 %v1387, %v1391
        %v1394 = vlaneseq
        %v1395 = vshrl.u32 %v1394, 7
        %v1396 = vsub.s32 0, %v1395
        %v1397 = vrot.slane %v323, %v1396
        %v1400 = vsel %vm331, %v1392, 0
        %1402 = vmatprep.subr.mxu0 0.0
        %1403 = vmatpush1.msra.mxu0 %v310
        %1404 = vmatprep.subr.mxu0 0.0
        %1405 = vmatpush1.msra.mxu0 %v311
        %1406 = vmatprep.subr.mxu0 0.0
        %1407 = vmatpush1.msra.mxu0 %v312
        %1408 = vmatprep.subr.mxu0 0.0
        %1409 = vmatpush1.msra.mxu0 %v313
        %1410 = vmatprep.subr.mxu0 0.0
        %1411 = vmatpush1.msra.mxu0 0.0
        %1412 = vmatprep.subr.mxu0 0.0
        %1413 = vmatpush1.msra.mxu0 0.0
        %1414 = vmatprep.subr.mxu0 0.0
        %1415 = vmatpush1.msra.mxu0 0.0
        %1416 = vmatprep.subr.mxu0 0.0
        %1417 = vmatpush1.msra.mxu0 0.0
        %1418 = vmatprep.subr.mxu0 0.0
        %1419 = vmatpush1.msra.mxu0 0.0
        %1420 = vmatprep.subr.mxu0 0.0
        %1421 = vmatpush1.msra.mxu0 0.0
        %1422 = vmatprep.subr.mxu0 0.0
        %1423 = vmatpush1.msra.mxu0 0.0
        %1424 = vmatprep.subr.mxu0 0.0
        %1425 = vmatpush1.msra.mxu0 0.0
        %1426 = vmatprep.subr.mxu0 0.0
        %1427 = vmatpush1.msra.mxu0 0.0
        %1428 = vmatprep.subr.mxu0 0.0
        %1429 = vmatpush1.msra.mxu0 0.0
        %1430 = vmatprep.subr.mxu0 0.0
        %1431 = vmatpush1.msra.mxu0 0.0
        %1432 = vmatprep.subr.mxu0 0.0
        %1433 = vmatpush1.msra.mxu0 0.0
        %1434 = vmatprep.subr.mxu0 0.0
        %1435 = vmatpush1.msra.mxu0 0.0
        %1436 = vmatprep.subr.mxu0 0.0
        %1437 = vmatpush1.msra.mxu0 0.0
        %1438 = vmatprep.subr.mxu0 0.0
        %1439 = vmatpush1.msra.mxu0 0.0
        %1440 = vmatprep.subr.mxu0 0.0
        %1441 = vmatpush1.msra.mxu0 0.0
        %1442 = vmatprep.subr.mxu0 0.0
        %1443 = vmatpush1.msra.mxu0 0.0
        %1444 = vmatprep.subr.mxu0 0.0
        %1445 = vmatpush1.msra.mxu0 0.0
        %1446 = vmatprep.subr.mxu0 0.0
        %1447 = vmatpush1.msra.mxu0 0.0
        %1448 = vmatprep.subr.mxu0 0.0
        %1449 = vmatpush1.msra.mxu0 0.0
        %1450 = vmatprep.subr.mxu0 0.0
        %1451 = vmatpush1.msra.mxu0 0.0
        %1452 = vmatprep.subr.mxu0 0.0
        %1453 = vmatpush1.msra.mxu0 0.0
        %1454 = vmatprep.subr.mxu0 0.0
        %1455 = vmatpush1.msra.mxu0 0.0
        %1456 = vmatprep.subr.mxu0 0.0
        %1457 = vmatpush1.msra.mxu0 0.0
        %1458 = vmatprep.subr.mxu0 0.0
        %1459 = vmatpush1.msra.mxu0 0.0
        %1460 = vmatprep.subr.mxu0 0.0
        %1461 = vmatpush1.msra.mxu0 0.0
        %1462 = vmatprep.subr.mxu0 0.0
        %1463 = vmatpush1.msra.mxu0 0.0
        %1464 = vmatprep.subr.mxu0 0.0
        %1465 = vmatpush1.msra.mxu0 0.0
        %1466 = vmatprep.mubr.f32.mxu0 0.0
        %1467 = vmatmul.mubr.f32.gmra.mrb[0].mxu0 %v1400
        %v1468 = vpop.f32.mrb[0].mxu0
        %v1469 = vadd.f32 %v1397, %v1468
        %v1470 = vpop.f32.mrb[0].mxu0
        %1471 = vdwg.mxu0
        %v1472 = vmax.f32 %v1469, 0.0
        %v1473 = vlaneseq
        %v1474 = vshrl.u32 %v1473, 7
        %v1475 = vsub.s32 3, %v1474
        %v1476 = vrot.slane %v324, %v1475
        %vm1477 = vcmask 523264
        %v1479 = vsel %vm1477, %v1472, 0
        %1481 = vmatprep.subr.mxu0 0.0
        %1482 = vmatpush1.msra.mxu0 %v314
        %1483 = vmatprep.subr.mxu0 0.0
        %1484 = vmatpush1.msra.mxu0 %v315
        %1485 = vmatprep.subr.mxu0 0.0
        %1486 = vmatpush1.msra.mxu0 %v316
        %1487 = vmatprep.subr.mxu0 0.0
        %1488 = vmatpush1.msra.mxu0 %v317
        %1489 = vmatprep.subr.mxu0 0.0
        %1490 = vmatpush1.msra.mxu0 %v318
        %1491 = vmatprep.subr.mxu0 0.0
        %1492 = vmatpush1.msra.mxu0 %v319
        %1493 = vmatprep.subr.mxu0 0.0
        %1494 = vmatpush1.msra.mxu0 %v320
        %1495 = vmatprep.subr.mxu0 0.0
        %1496 = vmatpush1.msra.mxu0 %v321
        %1497 = vmatprep.subr.mxu0 0.0
        %1498 = vmatpush1.msra.mxu0 0.0
        %1499 = vmatprep.subr.mxu0 0.0
        %1500 = vmatpush1.msra.mxu0 0.0
        %1501 = vmatprep.subr.mxu0 0.0
        %1502 = vmatpush1.msra.mxu0 0.0
        %1503 = vmatprep.subr.mxu0 0.0
        %1504 = vmatpush1.msra.mxu0 0.0
        %1505 = vmatprep.subr.mxu0 0.0
        %1506 = vmatpush1.msra.mxu0 0.0
        %1507 = vmatprep.subr.mxu0 0.0
        %1508 = vmatpush1.msra.mxu0 0.0
        %1509 = vmatprep.subr.mxu0 0.0
        %1510 = vmatpush1.msra.mxu0 0.0
        %1511 = vmatprep.subr.mxu0 0.0
        %1512 = vmatpush1.msra.mxu0 0.0
        %1513 = vmatprep.subr.mxu0 0.0
        %1514 = vmatpush1.msra.mxu0 0.0
        %1515 = vmatprep.subr.mxu0 0.0
        %1516 = vmatpush1.msra.mxu0 0.0
        %1517 = vmatprep.subr.mxu0 0.0
        %1518 = vmatpush1.msra.mxu0 0.0
        %1519 = vmatprep.subr.mxu0 0.0
        %1520 = vmatpush1.msra.mxu0 0.0
        %1521 = vmatprep.subr.mxu0 0.0
        %1522 = vmatpush1.msra.mxu0 0.0
        %1523 = vmatprep.subr.mxu0 0.0
        %1524 = vmatpush1.msra.mxu0 0.0
        %1525 = vmatprep.subr.mxu0 0.0
        %1526 = vmatpush1.msra.mxu0 0.0
        %1527 = vmatprep.subr.mxu0 0.0
        %1528 = vmatpush1.msra.mxu0 0.0
        %1529 = vmatprep.subr.mxu0 0.0
        %1530 = vmatpush1.msra.mxu0 0.0
        %1531 = vmatprep.subr.mxu0 0.0
        %1532 = vmatpush1.msra.mxu0 0.0
        %1533 = vmatprep.subr.mxu0 0.0
        %1534 = vmatpush1.msra.mxu0 0.0
        %1535 = vmatprep.subr.mxu0 0.0
        %1536 = vmatpush1.msra.mxu0 0.0
        %1537 = vmatprep.subr.mxu0 0.0
        %1538 = vmatpush1.msra.mxu0 0.0
        %1539 = vmatprep.subr.mxu0 0.0
        %1540 = vmatpush1.msra.mxu0 0.0
        %1541 = vmatprep.subr.mxu0 0.0
        %1542 = vmatpush1.msra.mxu0 0.0
        %1543 = vmatprep.subr.mxu0 0.0
        %1544 = vmatpush1.msra.mxu0 0.0
        %1545 = vmatprep.mubr.f32.mxu0 0.0
        %1546 = vmatmul.mubr.f32.gmra.mrb[0].mxu0 %v1479
        %v1547 = vpop.f32.mrb[0].mxu0
        %v1548 = vadd.f32 %v1476, %v1547
        %v1549 = vpop.f32.mrb[0].mxu0
        %1550 = vdwg.mxu0
        %v1551 = vadd.f32 %v1392, %v1548
        %v1552 = vsel %vm331, %v1551, 0.0
        %1553 = vadd.xlane.f32.xlu0 %v1552
        %v1554 = vpop.xlane.xlu0 %1553
        %v1555 = vmul.f32 %v1554, %v1372
        %v1556 = vsub.f32 %v1551, %v1555
        %v1557 = vmul.f32 %v1556, %v1556
        %v1558 = vsel %vm331, %v1557, 0.0
        %1559 = vadd.xlane.f32.xlu0 %v1558
        %v1560 = vpop.xlane.xlu0 %1559
        %v1561 = vmul.f32 %v1560, %v1372
        %v1562 = vadd.f32 %v1561, 1e-05
        %v1563 = vrsqrt.pop %v1562
        %v1564 = vmul.f32 %v1556, %v1563
        %v1565 = vlaneseq
        %v1566 = vshrl.u32 %v1565, 7
        %v1567 = vsub.s32 4, %v1566
        %v1568 = vrot.slane %v324, %v1567
        %v1569 = vmul.f32 %v1564, %v1568
        %v1570 = vlaneseq
        %v1571 = vshrl.u32 %v1570, 7
        %v1572 = vsub.s32 5, %v1571
        %v1573 = vrot.slane %v324, %v1572
        %v1574 = vadd.f32 %v1569, %v1573
        %s1575 = scalar_lea.vmem %s1, 32
        %v1576 = vld [vmem:[%s1575] sm:$0xff]
        %v1577 = vld [vmem:[%s1575 + $0x8] sm:$0xff]
        %v1578 = vld [vmem:[%s1575 + $0x10] sm:$0xff]
        %v1579 = vld [vmem:[%s1575 + $0x18] sm:$0xff]
        %s1580 = scalar_lea.vmem %s2, 32
        %v1581 = vld [vmem:[%s1580] sm:$0xff]
        %v1582 = vld [vmem:[%s1580 + $0x8] sm:$0xff]
        %v1583 = vld [vmem:[%s1580 + $0x10] sm:$0xff]
        %v1584 = vld [vmem:[%s1580 + $0x18] sm:$0xff]
        %s1585 = scalar_lea.vmem %s3, 32
        %v1586 = vld [vmem:[%s1585] sm:$0xff]
        %v1587 = vld [vmem:[%s1585 + $0x8] sm:$0xff]
        %v1588 = vld [vmem:[%s1585 + $0x10] sm:$0xff]
        %v1589 = vld [vmem:[%s1585 + $0x18] sm:$0xff]
        %s1590 = scalar_lea.vmem %s4, 64
        %v1591 = vld [vmem:[%s1590] sm:$0xff]
        %v1592 = vld [vmem:[%s1590 + $0x8] sm:$0xff]
        %v1593 = vld [vmem:[%s1590 + $0x10] sm:$0xff]
        %v1594 = vld [vmem:[%s1590 + $0x18] sm:$0xff]
        %v1595 = vld [vmem:[%s1590 + $0x20] sm:$0xff]
        %v1596 = vld [vmem:[%s1590 + $0x28] sm:$0xff]
        %v1597 = vld [vmem:[%s1590 + $0x30] sm:$0xff]
        %v1598 = vld [vmem:[%s1590 + $0x38] sm:$0xff]
        %s1599 = scalar_lea.vmem %s5, 1
        %v1600 = vld [vmem:[%s1599] sm:$0x1]
        %s1601 = scalar_lea.vmem %s6, 1
        %v1602 = vld [vmem:[%s1601] sm:$0x1]
        %s1603 = scalar_lea.vmem %s7, 8
        %v1604 = vld [vmem:[%s1603] sm:$0x3f]
        %v1606 = vlaneseq
        %v1607 = vshrl.u32 %v1606, 7
        %v1608 = vsub.s32 0, %v1607
        %v1609 = vrot.slane %v1600, %v1608
        %v1612 = vsel %vm331, %v1574, 0
        %1614 = vmatprep.subr.mxu0 0.0
        %1615 = vmatpush1.msra.mxu0 %v1576
        %1616 = vmatprep.subr.mxu0 0.0
        %1617 = vmatpush1.msra.mxu0 %v1577
        %1618 = vmatprep.subr.mxu0 0.0
        %1619 = vmatpush1.msra.mxu0 %v1578
        %1620 = vmatprep.subr.mxu0 0.0
        %1621 = vmatpush1.msra.mxu0 %v1579
        %1622 = vmatprep.subr.mxu0 0.0
        %1623 = vmatpush1.msra.mxu0 0.0
        %1624 = vmatprep.subr.mxu0 0.0
        %1625 = vmatpush1.msra.mxu0 0.0
        %1626 = vmatprep.subr.mxu0 0.0
        %1627 = vmatpush1.msra.mxu0 0.0
        %1628 = vmatprep.subr.mxu0 0.0
        %1629 = vmatpush1.msra.mxu0 0.0
        %1630 = vmatprep.subr.mxu0 0.0
        %1631 = vmatpush1.msra.mxu0 0.0
        %1632 = vmatprep.subr.mxu0 0.0
        %1633 = vmatpush1.msra.mxu0 0.0
        %1634 = vmatprep.subr.mxu0 0.0
        %1635 = vmatpush1.msra.mxu0 0.0
        %1636 = vmatprep.subr.mxu0 0.0
        %1637 = vmatpush1.msra.mxu0 0.0
        %1638 = vmatprep.subr.mxu0 0.0
        %1639 = vmatpush1.msra.mxu0 0.0
        %1640 = vmatprep.subr.mxu0 0.0
        %1641 = vmatpush1.msra.mxu0 0.0
        %1642 = vmatprep.subr.mxu0 0.0
        %1643 = vmatpush1.msra.mxu0 0.0
        %1644 = vmatprep.subr.mxu0 0.0
        %1645 = vmatpush1.msra.mxu0 0.0
        %1646 = vmatprep.subr.mxu0 0.0
        %1647 = vmatpush1.msra.mxu0 0.0
        %1648 = vmatprep.subr.mxu0 0.0
        %1649 = vmatpush1.msra.mxu0 0.0
        %1650 = vmatprep.subr.mxu0 0.0
        %1651 = vmatpush1.msra.mxu0 0.0
        %1652 = vmatprep.subr.mxu0 0.0
        %1653 = vmatpush1.msra.mxu0 0.0
        %1654 = vmatprep.subr.mxu0 0.0
        %1655 = vmatpush1.msra.mxu0 0.0
        %1656 = vmatprep.subr.mxu0 0.0
        %1657 = vmatpush1.msra.mxu0 0.0
        %1658 = vmatprep.subr.mxu0 0.0
        %1659 = vmatpush1.msra.mxu0 0.0
        %1660 = vmatprep.subr.mxu0 0.0
        %1661 = vmatpush1.msra.mxu0 0.0
        %1662 = vmatprep.subr.mxu0 0.0
        %1663 = vmatpush1.msra.mxu0 0.0
        %1664 = vmatprep.subr.mxu0 0.0
        %1665 = vmatpush1.msra.mxu0 0.0
        %1666 = vmatprep.subr.mxu0 0.0
        %1667 = vmatpush1.msra.mxu0 0.0
        %1668 = vmatprep.subr.mxu0 0.0
        %1669 = vmatpush1.msra.mxu0 0.0
        %1670 = vmatprep.subr.mxu0 0.0
        %1671 = vmatpush1.msra.mxu0 0.0
        %1672 = vmatprep.subr.mxu0 0.0
        %1673 = vmatpush1.msra.mxu0 0.0
        %1674 = vmatprep.subr.mxu0 0.0
        %1675 = vmatpush1.msra.mxu0 0.0
        %1676 = vmatprep.subr.mxu0 0.0
        %1677 = vmatpush1.msra.mxu0 0.0
        %1678 = vmatprep.mubr.f32.mxu0 0.0
        %1679 = vmatmul.mubr.f32.gmra.mrb[0].mxu0 %v1612
        %v1680 = vpop.f32.mrb[0].mxu0
        %v1681 = vadd.f32 %v1609, %v1680
        %v1682 = vpop.f32.mrb[0].mxu0
        %1683 = vdwg.mxu0
        %1685 = vrot.lane.b32.xlu0 %v1681, 96
        %v1686 = vpop.permute.xlu0 %1685
        %v1687 = vsel %vm408, %v1681, 0
        %v1689 = vsel %vm408, %v1686, 0
        %1691 = vmatprep.subr.mxu0 0.0
        %1692 = vmatpush1.xpose.msra.mxu0 %v1689
        %1693 = vmatprep.subr.mxu0 0.0
        %1694 = vmatpush1.xpose.msra.mxu0 0.0
        %1695 = vmatprep.subr.mxu0 0.0
        %1696 = vmatpush1.xpose.msra.mxu0 0.0
        %1697 = vmatprep.subr.mxu0 0.0
        %1698 = vmatpush1.xpose.msra.mxu0 0.0
        %1699 = vmatprep.subr.mxu0 0.0
        %1700 = vmatpush1.xpose.msra.mxu0 0.0
        %1701 = vmatprep.subr.mxu0 0.0
        %1702 = vmatpush1.xpose.msra.mxu0 0.0
        %1703 = vmatprep.subr.mxu0 0.0
        %1704 = vmatpush1.xpose.msra.mxu0 0.0
        %1705 = vmatprep.subr.mxu0 0.0
        %1706 = vmatpush1.xpose.msra.mxu0 0.0
        %1707 = vmatprep.subr.mxu0 0.0
        %1708 = vmatpush1.xpose.msra.mxu0 0.0
        %1709 = vmatprep.subr.mxu0 0.0
        %1710 = vmatpush1.xpose.msra.mxu0 0.0
        %1711 = vmatprep.subr.mxu0 0.0
        %1712 = vmatpush1.xpose.msra.mxu0 0.0
        %1713 = vmatprep.subr.mxu0 0.0
        %1714 = vmatpush1.xpose.msra.mxu0 0.0
        %1715 = vmatprep.subr.mxu0 0.0
        %1716 = vmatpush1.xpose.msra.mxu0 0.0
        %1717 = vmatprep.subr.mxu0 0.0
        %1718 = vmatpush1.xpose.msra.mxu0 0.0
        %1719 = vmatprep.subr.mxu0 0.0
        %1720 = vmatpush1.xpose.msra.mxu0 0.0
        %1721 = vmatprep.subr.mxu0 0.0
        %1722 = vmatpush1.xpose.msra.mxu0 0.0
        %1723 = vmatprep.subr.mxu0 0.0
        %1724 = vmatpush1.xpose.msra.mxu0 0.0
        %1725 = vmatprep.subr.mxu0 0.0
        %1726 = vmatpush1.xpose.msra.mxu0 0.0
        %1727 = vmatprep.subr.mxu0 0.0
        %1728 = vmatpush1.xpose.msra.mxu0 0.0
        %1729 = vmatprep.subr.mxu0 0.0
        %1730 = vmatpush1.xpose.msra.mxu0 0.0
        %1731 = vmatprep.subr.mxu0 0.0
        %1732 = vmatpush1.xpose.msra.mxu0 0.0
        %1733 = vmatprep.subr.mxu0 0.0
        %1734 = vmatpush1.xpose.msra.mxu0 0.0
        %1735 = vmatprep.subr.mxu0 0.0
        %1736 = vmatpush1.xpose.msra.mxu0 0.0
        %1737 = vmatprep.subr.mxu0 0.0
        %1738 = vmatpush1.xpose.msra.mxu0 0.0
        %1739 = vmatprep.subr.mxu0 0.0
        %1740 = vmatpush1.xpose.msra.mxu0 0.0
        %1741 = vmatprep.subr.mxu0 0.0
        %1742 = vmatpush1.xpose.msra.mxu0 0.0
        %1743 = vmatprep.subr.mxu0 0.0
        %1744 = vmatpush1.xpose.msra.mxu0 0.0
        %1745 = vmatprep.subr.mxu0 0.0
        %1746 = vmatpush1.xpose.msra.mxu0 0.0
        %1747 = vmatprep.subr.mxu0 0.0
        %1748 = vmatpush1.xpose.msra.mxu0 0.0
        %1749 = vmatprep.subr.mxu0 0.0
        %1750 = vmatpush1.xpose.msra.mxu0 0.0
        %1751 = vmatprep.subr.mxu0 0.0
        %1752 = vmatpush1.xpose.msra.mxu0 0.0
        %1753 = vmatprep.subr.mxu0 0.0
        %1754 = vmatpush1.xpose.msra.mxu0 0.0
        %1755 = vmatprep.mubr.f32.mxu0 0.0
        %1756 = vmatmul.mubr.f32.gmra.mrb[0].mxu0 %v1687
        %v1757 = vpop.f32.mrb[0].mxu0
        %v1758 = vadd.f32 0.0, %v1757
        %v1759 = vpop.f32.mrb[0].mxu0
        %1760 = vdwg.mxu0
        %v1761 = vmul.f32 %v1758, 0.35355338
        %v1762 = vsel %vm408, %v1761, -inf
        %1763 = vmax.xlane.f32.xlu0 %v1762
        %v1764 = vpop.xlane.xlu0 %1763
        %v1765 = vsub.f32 %v1761, %v1764
        %v1766 = vmul.f32 %v1765, 1.442695
        %v1767 = vpow.pop %v1766
        %v1768 = vsel %vm408, %v1767, 0.0
        %1769 = vadd.xlane.f32.xlu0 %v1768
        %v1770 = vpop.xlane.xlu0 %1769
        %v1771 = vrcp.pop %v1770
        %v1772 = vmul.f32 %v1767, %v1771
        %1773 = vrot.lane.b32.xlu0 %v1681, 64
        %v1774 = vpop.permute.xlu0 %1773
        %v1777 = vsel %vm408, %v1772, 0
        %1779 = vmatprep.subr.mxu0 0.0
        %1780 = vmatpush1.msra.mxu0 %v1774
        %1781 = vmatprep.subr.mxu0 0.0
        %1782 = vmatpush1.msra.mxu0 0.0
        %1783 = vmatprep.subr.mxu0 0.0
        %1784 = vmatpush1.msra.mxu0 0.0
        %1785 = vmatprep.subr.mxu0 0.0
        %1786 = vmatpush1.msra.mxu0 0.0
        %1787 = vmatprep.subr.mxu0 0.0
        %1788 = vmatpush1.msra.mxu0 0.0
        %1789 = vmatprep.subr.mxu0 0.0
        %1790 = vmatpush1.msra.mxu0 0.0
        %1791 = vmatprep.subr.mxu0 0.0
        %1792 = vmatpush1.msra.mxu0 0.0
        %1793 = vmatprep.subr.mxu0 0.0
        %1794 = vmatpush1.msra.mxu0 0.0
        %1795 = vmatprep.subr.mxu0 0.0
        %1796 = vmatpush1.msra.mxu0 0.0
        %1797 = vmatprep.subr.mxu0 0.0
        %1798 = vmatpush1.msra.mxu0 0.0
        %1799 = vmatprep.subr.mxu0 0.0
        %1800 = vmatpush1.msra.mxu0 0.0
        %1801 = vmatprep.subr.mxu0 0.0
        %1802 = vmatpush1.msra.mxu0 0.0
        %1803 = vmatprep.subr.mxu0 0.0
        %1804 = vmatpush1.msra.mxu0 0.0
        %1805 = vmatprep.subr.mxu0 0.0
        %1806 = vmatpush1.msra.mxu0 0.0
        %1807 = vmatprep.subr.mxu0 0.0
        %1808 = vmatpush1.msra.mxu0 0.0
        %1809 = vmatprep.subr.mxu0 0.0
        %1810 = vmatpush1.msra.mxu0 0.0
        %1811 = vmatprep.subr.mxu0 0.0
        %1812 = vmatpush1.msra.mxu0 0.0
        %1813 = vmatprep.subr.mxu0 0.0
        %1814 = vmatpush1.msra.mxu0 0.0
        %1815 = vmatprep.subr.mxu0 0.0
        %1816 = vmatpush1.msra.mxu0 0.0
        %1817 = vmatprep.subr.mxu0 0.0
        %1818 = vmatpush1.msra.mxu0 0.0
        %1819 = vmatprep.subr.mxu0 0.0
        %1820 = vmatpush1.msra.mxu0 0.0
        %1821 = vmatprep.subr.mxu0 0.0
        %1822 = vmatpush1.msra.mxu0 0.0
        %1823 = vmatprep.subr.mxu0 0.0
        %1824 = vmatpush1.msra.mxu0 0.0
        %1825 = vmatprep.subr.mxu0 0.0
        %1826 = vmatpush1.msra.mxu0 0.0
        %1827 = vmatprep.subr.mxu0 0.0
        %1828 = vmatpush1.msra.mxu0 0.0
        %1829 = vmatprep.subr.mxu0 0.0
        %1830 = vmatpush1.msra.mxu0 0.0
        %1831 = vmatprep.subr.mxu0 0.0
        %1832 = vmatpush1.msra.mxu0 0.0
        %1833 = vmatprep.subr.mxu0 0.0
        %1834 = vmatpush1.msra.mxu0 0.0
        %1835 = vmatprep.subr.mxu0 0.0
        %1836 = vmatpush1.msra.mxu0 0.0
        %1837 = vmatprep.subr.mxu0 0.0
        %1838 = vmatpush1.msra.mxu0 0.0
        %1839 = vmatprep.subr.mxu0 0.0
        %1840 = vmatpush1.msra.mxu0 0.0
        %1841 = vmatprep.subr.mxu0 0.0
        %1842 = vmatpush1.msra.mxu0 0.0
        %1843 = vmatprep.mubr.f32.mxu0 0.0
        %1844 = vmatmul.mubr.f32.gmra.mrb[0].mxu0 %v1777
        %v1845 = vpop.f32.mrb[0].mxu0
        %v1846 = vadd.f32 0.0, %v1845
        %v1847 = vpop.f32.mrb[0].mxu0
        %1848 = vdwg.mxu0
        %1849 = vrot.lane.b32.xlu0 %v1681, 120
        %v1850 = vpop.permute.xlu0 %1849
        %1851 = vrot.lane.b32.xlu0 %v1681, 88
        %v1852 = vpop.permute.xlu0 %1851
        %v1853 = vsel %vm408, %v1850, 0
        %v1855 = vsel %vm408, %v1852, 0
        %1857 = vmatprep.subr.mxu0 0.0
        %1858 = vmatpush1.xpose.msra.mxu0 %v1855
        %1859 = vmatprep.subr.mxu0 0.0
        %1860 = vmatpush1.xpose.msra.mxu0 0.0
        %1861 = vmatprep.subr.mxu0 0.0
        %1862 = vmatpush1.xpose.msra.mxu0 0.0
        %1863 = vmatprep.subr.mxu0 0.0
        %1864 = vmatpush1.xpose.msra.mxu0 0.0
        %1865 = vmatprep.subr.mxu0 0.0
        %1866 = vmatpush1.xpose.msra.mxu0 0.0
        %1867 = vmatprep.subr.mxu0 0.0
        %1868 = vmatpush1.xpose.msra.mxu0 0.0
        %1869 = vmatprep.subr.mxu0 0.0
        %1870 = vmatpush1.xpose.msra.mxu0 0.0
        %1871 = vmatprep.subr.mxu0 0.0
        %1872 = vmatpush1.xpose.msra.mxu0 0.0
        %1873 = vmatprep.subr.mxu0 0.0
        %1874 = vmatpush1.xpose.msra.mxu0 0.0
        %1875 = vmatprep.subr.mxu0 0.0
        %1876 = vmatpush1.xpose.msra.mxu0 0.0
        %1877 = vmatprep.subr.mxu0 0.0
        %1878 = vmatpush1.xpose.msra.mxu0 0.0
        %1879 = vmatprep.subr.mxu0 0.0
        %1880 = vmatpush1.xpose.msra.mxu0 0.0
        %1881 = vmatprep.subr.mxu0 0.0
        %1882 = vmatpush1.xpose.msra.mxu0 0.0
        %1883 = vmatprep.subr.mxu0 0.0
        %1884 = vmatpush1.xpose.msra.mxu0 0.0
        %1885 = vmatprep.subr.mxu0 0.0
        %1886 = vmatpush1.xpose.msra.mxu0 0.0
        %1887 = vmatprep.subr.mxu0 0.0
        %1888 = vmatpush1.xpose.msra.mxu0 0.0
        %1889 = vmatprep.subr.mxu0 0.0
        %1890 = vmatpush1.xpose.msra.mxu0 0.0
        %1891 = vmatprep.subr.mxu0 0.0
        %1892 = vmatpush1.xpose.msra.mxu0 0.0
        %1893 = vmatprep.subr.mxu0 0.0
        %1894 = vmatpush1.xpose.msra.mxu0 0.0
        %1895 = vmatprep.subr.mxu0 0.0
        %1896 = vmatpush1.xpose.msra.mxu0 0.0
        %1897 = vmatprep.subr.mxu0 0.0
        %1898 = vmatpush1.xpose.msra.mxu0 0.0
        %1899 = vmatprep.subr.mxu0 0.0
        %1900 = vmatpush1.xpose.msra.mxu0 0.0
        %1901 = vmatprep.subr.mxu0 0.0
        %1902 = vmatpush1.xpose.msra.mxu0 0.0
        %1903 = vmatprep.subr.mxu0 0.0
        %1904 = vmatpush1.xpose.msra.mxu0 0.0
        %1905 = vmatprep.subr.mxu0 0.0
        %1906 = vmatpush1.xpose.msra.mxu0 0.0
        %1907 = vmatprep.subr.mxu0 0.0
        %1908 = vmatpush1.xpose.msra.mxu0 0.0
        %1909 = vmatprep.subr.mxu0 0.0
        %1910 = vmatpush1.xpose.msra.mxu0 0.0
        %1911 = vmatprep.subr.mxu0 0.0
        %1912 = vmatpush1.xpose.msra.mxu0 0.0
        %1913 = vmatprep.subr.mxu0 0.0
        %1914 = vmatpush1.xpose.msra.mxu0 0.0
        %1915 = vmatprep.subr.mxu0 0.0
        %1916 = vmatpush1.xpose.msra.mxu0 0.0
        %1917 = vmatprep.subr.mxu0 0.0
        %1918 = vmatpush1.xpose.msra.mxu0 0.0
        %1919 = vmatprep.subr.mxu0 0.0
        %1920 = vmatpush1.xpose.msra.mxu0 0.0
        %1921 = vmatprep.mubr.f32.mxu0 0.0
        %1922 = vmatmul.mubr.f32.gmra.mrb[0].mxu0 %v1853
        %v1923 = vpop.f32.mrb[0].mxu0
        %v1924 = vadd.f32 0.0, %v1923
        %v1925 = vpop.f32.mrb[0].mxu0
        %1926 = vdwg.mxu0
        %v1927 = vmul.f32 %v1924, 0.35355338
        %v1928 = vsel %vm408, %v1927, -inf
        %1929 = vmax.xlane.f32.xlu0 %v1928
        %v1930 = vpop.xlane.xlu0 %1929
        %v1931 = vsub.f32 %v1927, %v1930
        %v1932 = vmul.f32 %v1931, 1.442695
        %v1933 = vpow.pop %v1932
        %v1934 = vsel %vm408, %v1933, 0.0
        %1935 = vadd.xlane.f32.xlu0 %v1934
        %v1936 = vpop.xlane.xlu0 %1935
        %v1937 = vrcp.pop %v1936
        %v1938 = vmul.f32 %v1933, %v1937
        %1939 = vrot.lane.b32.xlu0 %v1681, 56
        %v1940 = vpop.permute.xlu0 %1939
        %v1943 = vsel %vm408, %v1938, 0
        %1945 = vmatprep.subr.mxu0 0.0
        %1946 = vmatpush1.msra.mxu0 %v1940
        %1947 = vmatprep.subr.mxu0 0.0
        %1948 = vmatpush1.msra.mxu0 0.0
        %1949 = vmatprep.subr.mxu0 0.0
        %1950 = vmatpush1.msra.mxu0 0.0
        %1951 = vmatprep.subr.mxu0 0.0
        %1952 = vmatpush1.msra.mxu0 0.0
        %1953 = vmatprep.subr.mxu0 0.0
        %1954 = vmatpush1.msra.mxu0 0.0
        %1955 = vmatprep.subr.mxu0 0.0
        %1956 = vmatpush1.msra.mxu0 0.0
        %1957 = vmatprep.subr.mxu0 0.0
        %1958 = vmatpush1.msra.mxu0 0.0
        %1959 = vmatprep.subr.mxu0 0.0
        %1960 = vmatpush1.msra.mxu0 0.0
        %1961 = vmatprep.subr.mxu0 0.0
        %1962 = vmatpush1.msra.mxu0 0.0
        %1963 = vmatprep.subr.mxu0 0.0
        %1964 = vmatpush1.msra.mxu0 0.0
        %1965 = vmatprep.subr.mxu0 0.0
        %1966 = vmatpush1.msra.mxu0 0.0
        %1967 = vmatprep.subr.mxu0 0.0
        %1968 = vmatpush1.msra.mxu0 0.0
        %1969 = vmatprep.subr.mxu0 0.0
        %1970 = vmatpush1.msra.mxu0 0.0
        %1971 = vmatprep.subr.mxu0 0.0
        %1972 = vmatpush1.msra.mxu0 0.0
        %1973 = vmatprep.subr.mxu0 0.0
        %1974 = vmatpush1.msra.mxu0 0.0
        %1975 = vmatprep.subr.mxu0 0.0
        %1976 = vmatpush1.msra.mxu0 0.0
        %1977 = vmatprep.subr.mxu0 0.0
        %1978 = vmatpush1.msra.mxu0 0.0
        %1979 = vmatprep.subr.mxu0 0.0
        %1980 = vmatpush1.msra.mxu0 0.0
        %1981 = vmatprep.subr.mxu0 0.0
        %1982 = vmatpush1.msra.mxu0 0.0
        %1983 = vmatprep.subr.mxu0 0.0
        %1984 = vmatpush1.msra.mxu0 0.0
        %1985 = vmatprep.subr.mxu0 0.0
        %1986 = vmatpush1.msra.mxu0 0.0
        %1987 = vmatprep.subr.mxu0 0.0
        %1988 = vmatpush1.msra.mxu0 0.0
        %1989 = vmatprep.subr.mxu0 0.0
        %1990 = vmatpush1.msra.mxu0 0.0
        %1991 = vmatprep.subr.mxu0 0.0
        %1992 = vmatpush1.msra.mxu0 0.0
        %1993 = vmatprep.subr.mxu0 0.0
        %1994 = vmatpush1.msra.mxu0 0.0
        %1995 = vmatprep.subr.mxu0 0.0
        %1996 = vmatpush1.msra.mxu0 0.0
        %1997 = vmatprep.subr.mxu0 0.0
        %1998 = vmatpush1.msra.mxu0 0.0
        %1999 = vmatprep.subr.mxu0 0.0
        %2000 = vmatpush1.msra.mxu0 0.0
        %2001 = vmatprep.subr.mxu0 0.0
        %2002 = vmatpush1.msra.mxu0 0.0
        %2003 = vmatprep.subr.mxu0 0.0
        %2004 = vmatpush1.msra.mxu0 0.0
        %2005 = vmatprep.subr.mxu0 0.0
        %2006 = vmatpush1.msra.mxu0 0.0
        %2007 = vmatprep.subr.mxu0 0.0
        %2008 = vmatpush1.msra.mxu0 0.0
        %2009 = vmatprep.mubr.f32.mxu0 0.0
        %2010 = vmatmul.mubr.f32.gmra.mrb[0].mxu0 %v1943
        %v2011 = vpop.f32.mrb[0].mxu0
        %v2012 = vadd.f32 0.0, %v2011
        %v2013 = vpop.f32.mrb[0].mxu0
        %2014 = vdwg.mxu0
        %v2016 = vsel %vm408, %v2012, 0
        %2018 = vmatprep.subr.mxu0 0.0
        %2019 = vmatpush1.msra.mxu0 %v1582
        %2020 = vmatprep.subr.mxu0 0.0
        %2021 = vmatpush1.msra.mxu0 0.0
        %2022 = vmatprep.subr.mxu0 0.0
        %2023 = vmatpush1.msra.mxu0 0.0
        %2024 = vmatprep.subr.mxu0 0.0
        %2025 = vmatpush1.msra.mxu0 0.0
        %2026 = vmatprep.subr.mxu0 0.0
        %2027 = vmatpush1.msra.mxu0 0.0
        %2028 = vmatprep.subr.mxu0 0.0
        %2029 = vmatpush1.msra.mxu0 0.0
        %2030 = vmatprep.subr.mxu0 0.0
        %2031 = vmatpush1.msra.mxu0 0.0
        %2032 = vmatprep.subr.mxu0 0.0
        %2033 = vmatpush1.msra.mxu0 0.0
        %2034 = vmatprep.subr.mxu0 0.0
        %2035 = vmatpush1.msra.mxu0 0.0
        %2036 = vmatprep.subr.mxu0 0.0
        %2037 = vmatpush1.msra.mxu0 0.0
        %2038 = vmatprep.subr.mxu0 0.0
        %2039 = vmatpush1.msra.mxu0 0.0
        %2040 = vmatprep.subr.mxu0 0.0
        %2041 = vmatpush1.msra.mxu0 0.0
        %2042 = vmatprep.subr.mxu0 0.0
        %2043 = vmatpush1.msra.mxu0 0.0
        %2044 = vmatprep.subr.mxu0 0.0
        %2045 = vmatpush1.msra.mxu0 0.0
        %2046 = vmatprep.subr.mxu0 0.0
        %2047 = vmatpush1.msra.mxu0 0.0
        %2048 = vmatprep.subr.mxu0 0.0
        %2049 = vmatpush1.msra.mxu0 0.0
        %2050 = vmatprep.subr.mxu0 0.0
        %2051 = vmatpush1.msra.mxu0 0.0
        %2052 = vmatprep.subr.mxu0 0.0
        %2053 = vmatpush1.msra.mxu0 0.0
        %2054 = vmatprep.subr.mxu0 0.0
        %2055 = vmatpush1.msra.mxu0 0.0
        %2056 = vmatprep.subr.mxu0 0.0
        %2057 = vmatpush1.msra.mxu0 0.0
        %2058 = vmatprep.subr.mxu0 0.0
        %2059 = vmatpush1.msra.mxu0 0.0
        %2060 = vmatprep.subr.mxu0 0.0
        %2061 = vmatpush1.msra.mxu0 0.0
        %2062 = vmatprep.subr.mxu0 0.0
        %2063 = vmatpush1.msra.mxu0 0.0
        %2064 = vmatprep.subr.mxu0 0.0
        %2065 = vmatpush1.msra.mxu0 0.0
        %2066 = vmatprep.subr.mxu0 0.0
        %2067 = vmatpush1.msra.mxu0 0.0
        %2068 = vmatprep.subr.mxu0 0.0
        %2069 = vmatpush1.msra.mxu0 0.0
        %2070 = vmatprep.subr.mxu0 0.0
        %2071 = vmatpush1.msra.mxu0 0.0
        %2072 = vmatprep.subr.mxu0 0.0
        %2073 = vmatpush1.msra.mxu0 0.0
        %2074 = vmatprep.subr.mxu0 0.0
        %2075 = vmatpush1.msra.mxu0 0.0
        %2076 = vmatprep.subr.mxu0 0.0
        %2077 = vmatpush1.msra.mxu0 0.0
        %2078 = vmatprep.subr.mxu0 0.0
        %2079 = vmatpush1.msra.mxu0 0.0
        %2080 = vmatprep.subr.mxu0 0.0
        %2081 = vmatpush1.msra.mxu0 0.0
        %2082 = vmatprep.mubr.f32.mxu0 0.0
        %2083 = vmatmul.mubr.f32.gmra.mrb[0].mxu0 %v2016
        %v2084 = vpop.f32.mrb[0].mxu0
        %v2085 = vadd.f32 0.0, %v2084
        %v2086 = vpop.f32.mrb[0].mxu0
        %2087 = vdwg.mxu0
        %v2089 = vsel %vm408, %v1846, 0
        %2091 = vmatprep.subr.mxu0 0.0
        %2092 = vmatpush1.msra.mxu0 %v1581
        %2093 = vmatprep.subr.mxu0 0.0
        %2094 = vmatpush1.msra.mxu0 0.0
        %2095 = vmatprep.subr.mxu0 0.0
        %2096 = vmatpush1.msra.mxu0 0.0
        %2097 = vmatprep.subr.mxu0 0.0
        %2098 = vmatpush1.msra.mxu0 0.0
        %2099 = vmatprep.subr.mxu0 0.0
        %2100 = vmatpush1.msra.mxu0 0.0
        %2101 = vmatprep.subr.mxu0 0.0
        %2102 = vmatpush1.msra.mxu0 0.0
        %2103 = vmatprep.subr.mxu0 0.0
        %2104 = vmatpush1.msra.mxu0 0.0
        %2105 = vmatprep.subr.mxu0 0.0
        %2106 = vmatpush1.msra.mxu0 0.0
        %2107 = vmatprep.subr.mxu0 0.0
        %2108 = vmatpush1.msra.mxu0 0.0
        %2109 = vmatprep.subr.mxu0 0.0
        %2110 = vmatpush1.msra.mxu0 0.0
        %2111 = vmatprep.subr.mxu0 0.0
        %2112 = vmatpush1.msra.mxu0 0.0
        %2113 = vmatprep.subr.mxu0 0.0
        %2114 = vmatpush1.msra.mxu0 0.0
        %2115 = vmatprep.subr.mxu0 0.0
        %2116 = vmatpush1.msra.mxu0 0.0
        %2117 = vmatprep.subr.mxu0 0.0
        %2118 = vmatpush1.msra.mxu0 0.0
        %2119 = vmatprep.subr.mxu0 0.0
        %2120 = vmatpush1.msra.mxu0 0.0
        %2121 = vmatprep.subr.mxu0 0.0
        %2122 = vmatpush1.msra.mxu0 0.0
        %2123 = vmatprep.subr.mxu0 0.0
        %2124 = vmatpush1.msra.mxu0 0.0
        %2125 = vmatprep.subr.mxu0 0.0
        %2126 = vmatpush1.msra.mxu0 0.0
        %2127 = vmatprep.subr.mxu0 0.0
        %2128 = vmatpush1.msra.mxu0 0.0
        %2129 = vmatprep.subr.mxu0 0.0
        %2130 = vmatpush1.msra.mxu0 0.0
        %2131 = vmatprep.subr.mxu0 0.0
        %2132 = vmatpush1.msra.mxu0 0.0
        %2133 = vmatprep.subr.mxu0 0.0
        %2134 = vmatpush1.msra.mxu0 0.0
        %2135 = vmatprep.subr.mxu0 0.0
        %2136 = vmatpush1.msra.mxu0 0.0
        %2137 = vmatprep.subr.mxu0 0.0
        %2138 = vmatpush1.msra.mxu0 0.0
        %2139 = vmatprep.subr.mxu0 0.0
        %2140 = vmatpush1.msra.mxu0 0.0
        %2141 = vmatprep.subr.mxu0 0.0
        %2142 = vmatpush1.msra.mxu0 0.0
        %2143 = vmatprep.subr.mxu0 0.0
        %2144 = vmatpush1.msra.mxu0 0.0
        %2145 = vmatprep.subr.mxu0 0.0
        %2146 = vmatpush1.msra.mxu0 0.0
        %2147 = vmatprep.subr.mxu0 0.0
        %2148 = vmatpush1.msra.mxu0 0.0
        %2149 = vmatprep.subr.mxu0 0.0
        %2150 = vmatpush1.msra.mxu0 0.0
        %2151 = vmatprep.subr.mxu0 0.0
        %2152 = vmatpush1.msra.mxu0 0.0
        %2153 = vmatprep.subr.mxu0 0.0
        %2154 = vmatpush1.msra.mxu0 0.0
        %2155 = vmatprep.mubr.f32.mxu0 0.0
        %2156 = vmatmul.mubr.f32.gmra.mrb[0].mxu0 %v2089
        %v2157 = vpop.f32.mrb[0].mxu0
        %v2158 = vadd.f32 %v2085, %v2157
        %v2159 = vpop.f32.mrb[0].mxu0
        %2160 = vdwg.mxu0
        %2161 = vrot.lane.b32.xlu0 %v1681, 112
        %v2162 = vpop.permute.xlu0 %2161
        %2163 = vrot.lane.b32.xlu0 %v1681, 80
        %v2164 = vpop.permute.xlu0 %2163
        %v2165 = vsel %vm408, %v2162, 0
        %v2167 = vsel %vm408, %v2164, 0
        %2169 = vmatprep.subr.mxu0 0.0
        %2170 = vmatpush1.xpose.msra.mxu0 %v2167
        %2171 = vmatprep.subr.mxu0 0.0
        %2172 = vmatpush1.xpose.msra.mxu0 0.0
        %2173 = vmatprep.subr.mxu0 0.0
        %2174 = vmatpush1.xpose.msra.mxu0 0.0
        %2175 = vmatprep.subr.mxu0 0.0
        %2176 = vmatpush1.xpose.msra.mxu0 0.0
        %2177 = vmatprep.subr.mxu0 0.0
        %2178 = vmatpush1.xpose.msra.mxu0 0.0
        %2179 = vmatprep.subr.mxu0 0.0
        %2180 = vmatpush1.xpose.msra.mxu0 0.0
        %2181 = vmatprep.subr.mxu0 0.0
        %2182 = vmatpush1.xpose.msra.mxu0 0.0
        %2183 = vmatprep.subr.mxu0 0.0
        %2184 = vmatpush1.xpose.msra.mxu0 0.0
        %2185 = vmatprep.subr.mxu0 0.0
        %2186 = vmatpush1.xpose.msra.mxu0 0.0
        %2187 = vmatprep.subr.mxu0 0.0
        %2188 = vmatpush1.xpose.msra.mxu0 0.0
        %2189 = vmatprep.subr.mxu0 0.0
        %2190 = vmatpush1.xpose.msra.mxu0 0.0
        %2191 = vmatprep.subr.mxu0 0.0
        %2192 = vmatpush1.xpose.msra.mxu0 0.0
        %2193 = vmatprep.subr.mxu0 0.0
        %2194 = vmatpush1.xpose.msra.mxu0 0.0
        %2195 = vmatprep.subr.mxu0 0.0
        %2196 = vmatpush1.xpose.msra.mxu0 0.0
        %2197 = vmatprep.subr.mxu0 0.0
        %2198 = vmatpush1.xpose.msra.mxu0 0.0
        %2199 = vmatprep.subr.mxu0 0.0
        %2200 = vmatpush1.xpose.msra.mxu0 0.0
        %2201 = vmatprep.subr.mxu0 0.0
        %2202 = vmatpush1.xpose.msra.mxu0 0.0
        %2203 = vmatprep.subr.mxu0 0.0
        %2204 = vmatpush1.xpose.msra.mxu0 0.0
        %2205 = vmatprep.subr.mxu0 0.0
        %2206 = vmatpush1.xpose.msra.mxu0 0.0
        %2207 = vmatprep.subr.mxu0 0.0
        %2208 = vmatpush1.xpose.msra.mxu0 0.0
        %2209 = vmatprep.subr.mxu0 0.0
        %2210 = vmatpush1.xpose.msra.mxu0 0.0
        %2211 = vmatprep.subr.mxu0 0.0
        %2212 = vmatpush1.xpose.msra.mxu0 0.0
        %2213 = vmatprep.subr.mxu0 0.0
        %2214 = vmatpush1.xpose.msra.mxu0 0.0
        %2215 = vmatprep.subr.mxu0 0.0
        %2216 = vmatpush1.xpose.msra.mxu0 0.0
        %2217 = vmatprep.subr.mxu0 0.0
        %2218 = vmatpush1.xpose.msra.mxu0 0.0
        %2219 = vmatprep.subr.mxu0 0.0
        %2220 = vmatpush1.xpose.msra.mxu0 0.0
        %2221 = vmatprep.subr.mxu0 0.0
        %2222 = vmatpush1.xpose.msra.mxu0 0.0
        %2223 = vmatprep.subr.mxu0 0.0
        %2224 = vmatpush1.xpose.msra.mxu0 0.0
        %2225 = vmatprep.subr.mxu0 0.0
        %2226 = vmatpush1.xpose.msra.mxu0 0.0
        %2227 = vmatprep.subr.mxu0 0.0
        %2228 = vmatpush1.xpose.msra.mxu0 0.0
        %2229 = vmatprep.subr.mxu0 0.0
        %2230 = vmatpush1.xpose.msra.mxu0 0.0
        %2231 = vmatprep.subr.mxu0 0.0
        %2232 = vmatpush1.xpose.msra.mxu0 0.0
        %2233 = vmatprep.mubr.f32.mxu0 0.0
        %2234 = vmatmul.mubr.f32.gmra.mrb[0].mxu0 %v2165
        %v2235 = vpop.f32.mrb[0].mxu0
        %v2236 = vadd.f32 0.0, %v2235
        %v2237 = vpop.f32.mrb[0].mxu0
        %2238 = vdwg.mxu0
        %v2239 = vmul.f32 %v2236, 0.35355338
        %v2240 = vsel %vm408, %v2239, -inf
        %2241 = vmax.xlane.f32.xlu0 %v2240
        %v2242 = vpop.xlane.xlu0 %2241
        %v2243 = vsub.f32 %v2239, %v2242
        %v2244 = vmul.f32 %v2243, 1.442695
        %v2245 = vpow.pop %v2244
        %v2246 = vsel %vm408, %v2245, 0.0
        %2247 = vadd.xlane.f32.xlu0 %v2246
        %v2248 = vpop.xlane.xlu0 %2247
        %v2249 = vrcp.pop %v2248
        %v2250 = vmul.f32 %v2245, %v2249
        %2251 = vrot.lane.b32.xlu0 %v1681, 48
        %v2252 = vpop.permute.xlu0 %2251
        %v2255 = vsel %vm408, %v2250, 0
        %2257 = vmatprep.subr.mxu0 0.0
        %2258 = vmatpush1.msra.mxu0 %v2252
        %2259 = vmatprep.subr.mxu0 0.0
        %2260 = vmatpush1.msra.mxu0 0.0
        %2261 = vmatprep.subr.mxu0 0.0
        %2262 = vmatpush1.msra.mxu0 0.0
        %2263 = vmatprep.subr.mxu0 0.0
        %2264 = vmatpush1.msra.mxu0 0.0
        %2265 = vmatprep.subr.mxu0 0.0
        %2266 = vmatpush1.msra.mxu0 0.0
        %2267 = vmatprep.subr.mxu0 0.0
        %2268 = vmatpush1.msra.mxu0 0.0
        %2269 = vmatprep.subr.mxu0 0.0
        %2270 = vmatpush1.msra.mxu0 0.0
        %2271 = vmatprep.subr.mxu0 0.0
        %2272 = vmatpush1.msra.mxu0 0.0
        %2273 = vmatprep.subr.mxu0 0.0
        %2274 = vmatpush1.msra.mxu0 0.0
        %2275 = vmatprep.subr.mxu0 0.0
        %2276 = vmatpush1.msra.mxu0 0.0
        %2277 = vmatprep.subr.mxu0 0.0
        %2278 = vmatpush1.msra.mxu0 0.0
        %2279 = vmatprep.subr.mxu0 0.0
        %2280 = vmatpush1.msra.mxu0 0.0
        %2281 = vmatprep.subr.mxu0 0.0
        %2282 = vmatpush1.msra.mxu0 0.0
        %2283 = vmatprep.subr.mxu0 0.0
        %2284 = vmatpush1.msra.mxu0 0.0
        %2285 = vmatprep.subr.mxu0 0.0
        %2286 = vmatpush1.msra.mxu0 0.0
        %2287 = vmatprep.subr.mxu0 0.0
        %2288 = vmatpush1.msra.mxu0 0.0
        %2289 = vmatprep.subr.mxu0 0.0
        %2290 = vmatpush1.msra.mxu0 0.0
        %2291 = vmatprep.subr.mxu0 0.0
        %2292 = vmatpush1.msra.mxu0 0.0
        %2293 = vmatprep.subr.mxu0 0.0
        %2294 = vmatpush1.msra.mxu0 0.0
        %2295 = vmatprep.subr.mxu0 0.0
        %2296 = vmatpush1.msra.mxu0 0.0
        %2297 = vmatprep.subr.mxu0 0.0
        %2298 = vmatpush1.msra.mxu0 0.0
        %2299 = vmatprep.subr.mxu0 0.0
        %2300 = vmatpush1.msra.mxu0 0.0
        %2301 = vmatprep.subr.mxu0 0.0
        %2302 = vmatpush1.msra.mxu0 0.0
        %2303 = vmatprep.subr.mxu0 0.0
        %2304 = vmatpush1.msra.mxu0 0.0
        %2305 = vmatprep.subr.mxu0 0.0
        %2306 = vmatpush1.msra.mxu0 0.0
        %2307 = vmatprep.subr.mxu0 0.0
        %2308 = vmatpush1.msra.mxu0 0.0
        %2309 = vmatprep.subr.mxu0 0.0
        %2310 = vmatpush1.msra.mxu0 0.0
        %2311 = vmatprep.subr.mxu0 0.0
        %2312 = vmatpush1.msra.mxu0 0.0
        %2313 = vmatprep.subr.mxu0 0.0
        %2314 = vmatpush1.msra.mxu0 0.0
        %2315 = vmatprep.subr.mxu0 0.0
        %2316 = vmatpush1.msra.mxu0 0.0
        %2317 = vmatprep.subr.mxu0 0.0
        %2318 = vmatpush1.msra.mxu0 0.0
        %2319 = vmatprep.subr.mxu0 0.0
        %2320 = vmatpush1.msra.mxu0 0.0
        %2321 = vmatprep.mubr.f32.mxu0 0.0
        %2322 = vmatmul.mubr.f32.gmra.mrb[0].mxu0 %v2255
        %v2323 = vpop.f32.mrb[0].mxu0
        %v2324 = vadd.f32 0.0, %v2323
        %v2325 = vpop.f32.mrb[0].mxu0
        %2326 = vdwg.mxu0
        %v2328 = vsel %vm408, %v2324, 0
        %2330 = vmatprep.subr.mxu0 0.0
        %2331 = vmatpush1.msra.mxu0 %v1583
        %2332 = vmatprep.subr.mxu0 0.0
        %2333 = vmatpush1.msra.mxu0 0.0
        %2334 = vmatprep.subr.mxu0 0.0
        %2335 = vmatpush1.msra.mxu0 0.0
        %2336 = vmatprep.subr.mxu0 0.0
        %2337 = vmatpush1.msra.mxu0 0.0
        %2338 = vmatprep.subr.mxu0 0.0
        %2339 = vmatpush1.msra.mxu0 0.0
        %2340 = vmatprep.subr.mxu0 0.0
        %2341 = vmatpush1.msra.mxu0 0.0
        %2342 = vmatprep.subr.mxu0 0.0
        %2343 = vmatpush1.msra.mxu0 0.0
        %2344 = vmatprep.subr.mxu0 0.0
        %2345 = vmatpush1.msra.mxu0 0.0
        %2346 = vmatprep.subr.mxu0 0.0
        %2347 = vmatpush1.msra.mxu0 0.0
        %2348 = vmatprep.subr.mxu0 0.0
        %2349 = vmatpush1.msra.mxu0 0.0
        %2350 = vmatprep.subr.mxu0 0.0
        %2351 = vmatpush1.msra.mxu0 0.0
        %2352 = vmatprep.subr.mxu0 0.0
        %2353 = vmatpush1.msra.mxu0 0.0
        %2354 = vmatprep.subr.mxu0 0.0
        %2355 = vmatpush1.msra.mxu0 0.0
        %2356 = vmatprep.subr.mxu0 0.0
        %2357 = vmatpush1.msra.mxu0 0.0
        %2358 = vmatprep.subr.mxu0 0.0
        %2359 = vmatpush1.msra.mxu0 0.0
        %2360 = vmatprep.subr.mxu0 0.0
        %2361 = vmatpush1.msra.mxu0 0.0
        %2362 = vmatprep.subr.mxu0 0.0
        %2363 = vmatpush1.msra.mxu0 0.0
        %2364 = vmatprep.subr.mxu0 0.0
        %2365 = vmatpush1.msra.mxu0 0.0
        %2366 = vmatprep.subr.mxu0 0.0
        %2367 = vmatpush1.msra.mxu0 0.0
        %2368 = vmatprep.subr.mxu0 0.0
        %2369 = vmatpush1.msra.mxu0 0.0
        %2370 = vmatprep.subr.mxu0 0.0
        %2371 = vmatpush1.msra.mxu0 0.0
        %2372 = vmatprep.subr.mxu0 0.0
        %2373 = vmatpush1.msra.mxu0 0.0
        %2374 = vmatprep.subr.mxu0 0.0
        %2375 = vmatpush1.msra.mxu0 0.0
        %2376 = vmatprep.subr.mxu0 0.0
        %2377 = vmatpush1.msra.mxu0 0.0
        %2378 = vmatprep.subr.mxu0 0.0
        %2379 = vmatpush1.msra.mxu0 0.0
        %2380 = vmatprep.subr.mxu0 0.0
        %2381 = vmatpush1.msra.mxu0 0.0
        %2382 = vmatprep.subr.mxu0 0.0
        %2383 = vmatpush1.msra.mxu0 0.0
        %2384 = vmatprep.subr.mxu0 0.0
        %2385 = vmatpush1.msra.mxu0 0.0
        %2386 = vmatprep.subr.mxu0 0.0
        %2387 = vmatpush1.msra.mxu0 0.0
        %2388 = vmatprep.subr.mxu0 0.0
        %2389 = vmatpush1.msra.mxu0 0.0
        %2390 = vmatprep.subr.mxu0 0.0
        %2391 = vmatpush1.msra.mxu0 0.0
        %2392 = vmatprep.subr.mxu0 0.0
        %2393 = vmatpush1.msra.mxu0 0.0
        %2394 = vmatprep.mubr.f32.mxu0 0.0
        %2395 = vmatmul.mubr.f32.gmra.mrb[0].mxu0 %v2328
        %v2396 = vpop.f32.mrb[0].mxu0
        %v2397 = vadd.f32 0.0, %v2396
        %v2398 = vpop.f32.mrb[0].mxu0
        %2399 = vdwg.mxu0
        %v2400 = vadd.f32 %v2158, %v2397
        %2401 = vrot.lane.b32.xlu0 %v1681, 104
        %v2402 = vpop.permute.xlu0 %2401
        %2403 = vrot.lane.b32.xlu0 %v1681, 72
        %v2404 = vpop.permute.xlu0 %2403
        %v2405 = vsel %vm408, %v2402, 0
        %v2407 = vsel %vm408, %v2404, 0
        %2409 = vmatprep.subr.mxu0 0.0
        %2410 = vmatpush1.xpose.msra.mxu0 %v2407
        %2411 = vmatprep.subr.mxu0 0.0
        %2412 = vmatpush1.xpose.msra.mxu0 0.0
        %2413 = vmatprep.subr.mxu0 0.0
        %2414 = vmatpush1.xpose.msra.mxu0 0.0
        %2415 = vmatprep.subr.mxu0 0.0
        %2416 = vmatpush1.xpose.msra.mxu0 0.0
        %2417 = vmatprep.subr.mxu0 0.0
        %2418 = vmatpush1.xpose.msra.mxu0 0.0
        %2419 = vmatprep.subr.mxu0 0.0
        %2420 = vmatpush1.xpose.msra.mxu0 0.0
        %2421 = vmatprep.subr.mxu0 0.0
        %2422 = vmatpush1.xpose.msra.mxu0 0.0
        %2423 = vmatprep.subr.mxu0 0.0
        %2424 = vmatpush1.xpose.msra.mxu0 0.0
        %2425 = vmatprep.subr.mxu0 0.0
        %2426 = vmatpush1.xpose.msra.mxu0 0.0
        %2427 = vmatprep.subr.mxu0 0.0
        %2428 = vmatpush1.xpose.msra.mxu0 0.0
        %2429 = vmatprep.subr.mxu0 0.0
        %2430 = vmatpush1.xpose.msra.mxu0 0.0
        %2431 = vmatprep.subr.mxu0 0.0
        %2432 = vmatpush1.xpose.msra.mxu0 0.0
        %2433 = vmatprep.subr.mxu0 0.0
        %2434 = vmatpush1.xpose.msra.mxu0 0.0
        %2435 = vmatprep.subr.mxu0 0.0
        %2436 = vmatpush1.xpose.msra.mxu0 0.0
        %2437 = vmatprep.subr.mxu0 0.0
        %2438 = vmatpush1.xpose.msra.mxu0 0.0
        %2439 = vmatprep.subr.mxu0 0.0
        %2440 = vmatpush1.xpose.msra.mxu0 0.0
        %2441 = vmatprep.subr.mxu0 0.0
        %2442 = vmatpush1.xpose.msra.mxu0 0.0
        %2443 = vmatprep.subr.mxu0 0.0
        %2444 = vmatpush1.xpose.msra.mxu0 0.0
        %2445 = vmatprep.subr.mxu0 0.0
        %2446 = vmatpush1.xpose.msra.mxu0 0.0
        %2447 = vmatprep.subr.mxu0 0.0
        %2448 = vmatpush1.xpose.msra.mxu0 0.0
        %2449 = vmatprep.subr.mxu0 0.0
        %2450 = vmatpush1.xpose.msra.mxu0 0.0
        %2451 = vmatprep.subr.mxu0 0.0
        %2452 = vmatpush1.xpose.msra.mxu0 0.0
        %2453 = vmatprep.subr.mxu0 0.0
        %2454 = vmatpush1.xpose.msra.mxu0 0.0
        %2455 = vmatprep.subr.mxu0 0.0
        %2456 = vmatpush1.xpose.msra.mxu0 0.0
        %2457 = vmatprep.subr.mxu0 0.0
        %2458 = vmatpush1.xpose.msra.mxu0 0.0
        %2459 = vmatprep.subr.mxu0 0.0
        %2460 = vmatpush1.xpose.msra.mxu0 0.0
        %2461 = vmatprep.subr.mxu0 0.0
        %2462 = vmatpush1.xpose.msra.mxu0 0.0
        %2463 = vmatprep.subr.mxu0 0.0
        %2464 = vmatpush1.xpose.msra.mxu0 0.0
        %2465 = vmatprep.subr.mxu0 0.0
        %2466 = vmatpush1.xpose.msra.mxu0 0.0
        %2467 = vmatprep.subr.mxu0 0.0
        %2468 = vmatpush1.xpose.msra.mxu0 0.0
        %2469 = vmatprep.subr.mxu0 0.0
        %2470 = vmatpush1.xpose.msra.mxu0 0.0
        %2471 = vmatprep.subr.mxu0 0.0
        %2472 = vmatpush1.xpose.msra.mxu0 0.0
        %2473 = vmatprep.mubr.f32.mxu0 0.0
        %2474 = vmatmul.mubr.f32.gmra.mrb[0].mxu0 %v2405
        %v2475 = vpop.f32.mrb[0].mxu0
        %v2476 = vadd.f32 0.0, %v2475
        %v2477 = vpop.f32.mrb[0].mxu0
        %2478 = vdwg.mxu0
        %v2479 = vmul.f32 %v2476, 0.35355338
        %v2480 = vsel %vm408, %v2479, -inf
        %2481 = vmax.xlane.f32.xlu0 %v2480
        %v2482 = vpop.xlane.xlu0 %2481
        %v2483 = vsub.f32 %v2479, %v2482
        %v2484 = vmul.f32 %v2483, 1.442695
        %v2485 = vpow.pop %v2484
        %v2486 = vsel %vm408, %v2485, 0.0
        %2487 = vadd.xlane.f32.xlu0 %v2486
        %v2488 = vpop.xlane.xlu0 %2487
        %v2489 = vrcp.pop %v2488
        %v2490 = vmul.f32 %v2485, %v2489
        %2491 = vrot.lane.b32.xlu0 %v1681, 40
        %v2492 = vpop.permute.xlu0 %2491
        %v2495 = vsel %vm408, %v2490, 0
        %2497 = vmatprep.subr.mxu0 0.0
        %2498 = vmatpush1.msra.mxu0 %v2492
        %2499 = vmatprep.subr.mxu0 0.0
        %2500 = vmatpush1.msra.mxu0 0.0
        %2501 = vmatprep.subr.mxu0 0.0
        %2502 = vmatpush1.msra.mxu0 0.0
        %2503 = vmatprep.subr.mxu0 0.0
        %2504 = vmatpush1.msra.mxu0 0.0
        %2505 = vmatprep.subr.mxu0 0.0
        %2506 = vmatpush1.msra.mxu0 0.0
        %2507 = vmatprep.subr.mxu0 0.0
        %2508 = vmatpush1.msra.mxu0 0.0
        %2509 = vmatprep.subr.mxu0 0.0
        %2510 = vmatpush1.msra.mxu0 0.0
        %2511 = vmatprep.subr.mxu0 0.0
        %2512 = vmatpush1.msra.mxu0 0.0
        %2513 = vmatprep.subr.mxu0 0.0
        %2514 = vmatpush1.msra.mxu0 0.0
        %2515 = vmatprep.subr.mxu0 0.0
        %2516 = vmatpush1.msra.mxu0 0.0
        %2517 = vmatprep.subr.mxu0 0.0
        %2518 = vmatpush1.msra.mxu0 0.0
        %2519 = vmatprep.subr.mxu0 0.0
        %2520 = vmatpush1.msra.mxu0 0.0
        %2521 = vmatprep.subr.mxu0 0.0
        %2522 = vmatpush1.msra.mxu0 0.0
        %2523 = vmatprep.subr.mxu0 0.0
        %2524 = vmatpush1.msra.mxu0 0.0
        %2525 = vmatprep.subr.mxu0 0.0
        %2526 = vmatpush1.msra.mxu0 0.0
        %2527 = vmatprep.subr.mxu0 0.0
        %2528 = vmatpush1.msra.mxu0 0.0
        %2529 = vmatprep.subr.mxu0 0.0
        %2530 = vmatpush1.msra.mxu0 0.0
        %2531 = vmatprep.subr.mxu0 0.0
        %2532 = vmatpush1.msra.mxu0 0.0
        %2533 = vmatprep.subr.mxu0 0.0
        %2534 = vmatpush1.msra.mxu0 0.0
        %2535 = vmatprep.subr.mxu0 0.0
        %2536 = vmatpush1.msra.mxu0 0.0
        %2537 = vmatprep.subr.mxu0 0.0
        %2538 = vmatpush1.msra.mxu0 0.0
        %2539 = vmatprep.subr.mxu0 0.0
        %2540 = vmatpush1.msra.mxu0 0.0
        %2541 = vmatprep.subr.mxu0 0.0
        %2542 = vmatpush1.msra.mxu0 0.0
        %2543 = vmatprep.subr.mxu0 0.0
        %2544 = vmatpush1.msra.mxu0 0.0
        %2545 = vmatprep.subr.mxu0 0.0
        %2546 = vmatpush1.msra.mxu0 0.0
        %2547 = vmatprep.subr.mxu0 0.0
        %2548 = vmatpush1.msra.mxu0 0.0
        %2549 = vmatprep.subr.mxu0 0.0
        %2550 = vmatpush1.msra.mxu0 0.0
        %2551 = vmatprep.subr.mxu0 0.0
        %2552 = vmatpush1.msra.mxu0 0.0
        %2553 = vmatprep.subr.mxu0 0.0
        %2554 = vmatpush1.msra.mxu0 0.0
        %2555 = vmatprep.subr.mxu0 0.0
        %2556 = vmatpush1.msra.mxu0 0.0
        %2557 = vmatprep.subr.mxu0 0.0
        %2558 = vmatpush1.msra.mxu0 0.0
        %2559 = vmatprep.subr.mxu0 0.0
        %2560 = vmatpush1.msra.mxu0 0.0
        %2561 = vmatprep.mubr.f32.mxu0 0.0
        %2562 = vmatmul.mubr.f32.gmra.mrb[0].mxu0 %v2495
        %v2563 = vpop.f32.mrb[0].mxu0
        %v2564 = vadd.f32 0.0, %v2563
        %v2565 = vpop.f32.mrb[0].mxu0
        %2566 = vdwg.mxu0
        %v2568 = vsel %vm408, %v2564, 0
        %2570 = vmatprep.subr.mxu0 0.0
        %2571 = vmatpush1.msra.mxu0 %v1584
        %2572 = vmatprep.subr.mxu0 0.0
        %2573 = vmatpush1.msra.mxu0 0.0
        %2574 = vmatprep.subr.mxu0 0.0
        %2575 = vmatpush1.msra.mxu0 0.0
        %2576 = vmatprep.subr.mxu0 0.0
        %2577 = vmatpush1.msra.mxu0 0.0
        %2578 = vmatprep.subr.mxu0 0.0
        %2579 = vmatpush1.msra.mxu0 0.0
        %2580 = vmatprep.subr.mxu0 0.0
        %2581 = vmatpush1.msra.mxu0 0.0
        %2582 = vmatprep.subr.mxu0 0.0
        %2583 = vmatpush1.msra.mxu0 0.0
        %2584 = vmatprep.subr.mxu0 0.0
        %2585 = vmatpush1.msra.mxu0 0.0
        %2586 = vmatprep.subr.mxu0 0.0
        %2587 = vmatpush1.msra.mxu0 0.0
        %2588 = vmatprep.subr.mxu0 0.0
        %2589 = vmatpush1.msra.mxu0 0.0
        %2590 = vmatprep.subr.mxu0 0.0
        %2591 = vmatpush1.msra.mxu0 0.0
        %2592 = vmatprep.subr.mxu0 0.0
        %2593 = vmatpush1.msra.mxu0 0.0
        %2594 = vmatprep.subr.mxu0 0.0
        %2595 = vmatpush1.msra.mxu0 0.0
        %2596 = vmatprep.subr.mxu0 0.0
        %2597 = vmatpush1.msra.mxu0 0.0
        %2598 = vmatprep.subr.mxu0 0.0
        %2599 = vmatpush1.msra.mxu0 0.0
        %2600 = vmatprep.subr.mxu0 0.0
        %2601 = vmatpush1.msra.mxu0 0.0
        %2602 = vmatprep.subr.mxu0 0.0
        %2603 = vmatpush1.msra.mxu0 0.0
        %2604 = vmatprep.subr.mxu0 0.0
        %2605 = vmatpush1.msra.mxu0 0.0
        %2606 = vmatprep.subr.mxu0 0.0
        %2607 = vmatpush1.msra.mxu0 0.0
        %2608 = vmatprep.subr.mxu0 0.0
        %2609 = vmatpush1.msra.mxu0 0.0
        %2610 = vmatprep.subr.mxu0 0.0
        %2611 = vmatpush1.msra.mxu0 0.0
        %2612 = vmatprep.subr.mxu0 0.0
        %2613 = vmatpush1.msra.mxu0 0.0
        %2614 = vmatprep.subr.mxu0 0.0
        %2615 = vmatpush1.msra.mxu0 0.0
        %2616 = vmatprep.subr.mxu0 0.0
        %2617 = vmatpush1.msra.mxu0 0.0
        %2618 = vmatprep.subr.mxu0 0.0
        %2619 = vmatpush1.msra.mxu0 0.0
        %2620 = vmatprep.subr.mxu0 0.0
        %2621 = vmatpush1.msra.mxu0 0.0
        %2622 = vmatprep.subr.mxu0 0.0
        %2623 = vmatpush1.msra.mxu0 0.0
        %2624 = vmatprep.subr.mxu0 0.0
        %2625 = vmatpush1.msra.mxu0 0.0
        %2626 = vmatprep.subr.mxu0 0.0
        %2627 = vmatpush1.msra.mxu0 0.0
        %2628 = vmatprep.subr.mxu0 0.0
        %2629 = vmatpush1.msra.mxu0 0.0
        %2630 = vmatprep.subr.mxu0 0.0
        %2631 = vmatpush1.msra.mxu0 0.0
        %2632 = vmatprep.subr.mxu0 0.0
        %2633 = vmatpush1.msra.mxu0 0.0
        %2634 = vmatprep.mubr.f32.mxu0 0.0
        %2635 = vmatmul.mubr.f32.gmra.mrb[0].mxu0 %v2568
        %v2636 = vpop.f32.mrb[0].mxu0
        %v2637 = vadd.f32 0.0, %v2636
        %v2638 = vpop.f32.mrb[0].mxu0
        %2639 = vdwg.mxu0
        %v2640 = vadd.f32 %v2400, %v2637
        %v2641 = vlaneseq
        %v2642 = vshrl.u32 %v2641, 7
        %v2643 = vsub.s32 0, %v2642
        %v2644 = vrot.slane %v1604, %v2643
        %v2645 = vadd.f32 %v2640, %v2644
        %v2646 = vadd.f32 %v1574, %v2645
        %v2647 = vsel %vm331, %v2646, 0.0
        %2648 = vadd.xlane.f32.xlu0 %v2647
        %v2649 = vpop.xlane.xlu0 %2648
        %v2650 = vmul.f32 %v2649, %v1372
        %v2651 = vsub.f32 %v2646, %v2650
        %v2652 = vmul.f32 %v2651, %v2651
        %v2653 = vsel %vm331, %v2652, 0.0
        %2654 = vadd.xlane.f32.xlu0 %v2653
        %v2655 = vpop.xlane.xlu0 %2654
        %v2656 = vmul.f32 %v2655, %v1372
        %v2657 = vadd.f32 %v2656, 1e-05
        %v2658 = vrsqrt.pop %v2657
        %v2659 = vmul.f32 %v2651, %v2658
        %v2660 = vlaneseq
        %v2661 = vshrl.u32 %v2660, 7
        %v2662 = vsub.s32 1, %v2661
        %v2663 = vrot.slane %v1604, %v2662
        %v2664 = vmul.f32 %v2659, %v2663
        %v2665 = vlaneseq
        %v2666 = vshrl.u32 %v2665, 7
        %v2667 = vsub.s32 2, %v2666
        %v2668 = vrot.slane %v1604, %v2667
        %v2669 = vadd.f32 %v2664, %v2668
        %v2671 = vlaneseq
        %v2672 = vshrl.u32 %v2671, 7
        %v2673 = vsub.s32 0, %v2672
        %v2674 = vrot.slane %v1602, %v2673
        %v2677 = vsel %vm331, %v2669, 0
        %2679 = vmatprep.subr.mxu0 0.0
        %2680 = vmatpush1.msra.mxu0 %v1586
        %2681 = vmatprep.subr.mxu0 0.0
        %2682 = vmatpush1.msra.mxu0 %v1587
        %2683 = vmatprep.subr.mxu0 0.0
        %2684 = vmatpush1.msra.mxu0 %v1588
        %2685 = vmatprep.subr.mxu0 0.0
        %2686 = vmatpush1.msra.mxu0 %v1589
        %2687 = vmatprep.subr.mxu0 0.0
        %2688 = vmatpush1.msra.mxu0 0.0
        %2689 = vmatprep.subr.mxu0 0.0
        %2690 = vmatpush1.msra.mxu0 0.0
        %2691 = vmatprep.subr.mxu0 0.0
        %2692 = vmatpush1.msra.mxu0 0.0
        %2693 = vmatprep.subr.mxu0 0.0
        %2694 = vmatpush1.msra.mxu0 0.0
        %2695 = vmatprep.subr.mxu0 0.0
        %2696 = vmatpush1.msra.mxu0 0.0
        %2697 = vmatprep.subr.mxu0 0.0
        %2698 = vmatpush1.msra.mxu0 0.0
        %2699 = vmatprep.subr.mxu0 0.0
        %2700 = vmatpush1.msra.mxu0 0.0
        %2701 = vmatprep.subr.mxu0 0.0
        %2702 = vmatpush1.msra.mxu0 0.0
        %2703 = vmatprep.subr.mxu0 0.0
        %2704 = vmatpush1.msra.mxu0 0.0
        %2705 = vmatprep.subr.mxu0 0.0
        %2706 = vmatpush1.msra.mxu0 0.0
        %2707 = vmatprep.subr.mxu0 0.0
        %2708 = vmatpush1.msra.mxu0 0.0
        %2709 = vmatprep.subr.mxu0 0.0
        %2710 = vmatpush1.msra.mxu0 0.0
        %2711 = vmatprep.subr.mxu0 0.0
        %2712 = vmatpush1.msra.mxu0 0.0
        %2713 = vmatprep.subr.mxu0 0.0
        %2714 = vmatpush1.msra.mxu0 0.0
        %2715 = vmatprep.subr.mxu0 0.0
        %2716 = vmatpush1.msra.mxu0 0.0
        %2717 = vmatprep.subr.mxu0 0.0
        %2718 = vmatpush1.msra.mxu0 0.0
        %2719 = vmatprep.subr.mxu0 0.0
        %2720 = vmatpush1.msra.mxu0 0.0
        %2721 = vmatprep.subr.mxu0 0.0
        %2722 = vmatpush1.msra.mxu0 0.0
        %2723 = vmatprep.subr.mxu0 0.0
        %2724 = vmatpush1.msra.mxu0 0.0
        %2725 = vmatprep.subr.mxu0 0.0
        %2726 = vmatpush1.msra.mxu0 0.0
        %2727 = vmatprep.subr.mxu0 0.0
        %2728 = vmatpush1.msra.mxu0 0.0
        %2729 = vmatprep.subr.mxu0 0.0
        %2730 = vmatpush1.msra.mxu0 0.0
        %2731 = vmatprep.subr.mxu0 0.0
        %2732 = vmatpush1.msra.mxu0 0.0
        %2733 = vmatprep.subr.mxu0 0.0
        %2734 = vmatpush1.msra.mxu0 0.0
        %2735 = vmatprep.subr.mxu0 0.0
        %2736 = vmatpush1.msra.mxu0 0.0
        %2737 = vmatprep.subr.mxu0 0.0
        %2738 = vmatpush1.msra.mxu0 0.0
        %2739 = vmatprep.subr.mxu0 0.0
        %2740 = vmatpush1.msra.mxu0 0.0
        %2741 = vmatprep.subr.mxu0 0.0
        %2742 = vmatpush1.msra.mxu0 0.0
        %2743 = vmatprep.mubr.f32.mxu0 0.0
        %2744 = vmatmul.mubr.f32.gmra.mrb[0].mxu0 %v2677
        %v2745 = vpop.f32.mrb[0].mxu0
        %v2746 = vadd.f32 %v2674, %v2745
        %v2747 = vpop.f32.mrb[0].mxu0
        %2748 = vdwg.mxu0
        %v2749 = vmax.f32 %v2746, 0.0
        %v2750 = vlaneseq
        %v2751 = vshrl.u32 %v2750, 7
        %v2752 = vsub.s32 3, %v2751
        %v2753 = vrot.slane %v1604, %v2752
        %v2755 = vsel %vm1477, %v2749, 0
        %2757 = vmatprep.subr.mxu0 0.0
        %2758 = vmatpush1.msra.mxu0 %v1591
        %2759 = vmatprep.subr.mxu0 0.0
        %2760 = vmatpush1.msra.mxu0 %v1592
        %2761 = vmatprep.subr.mxu0 0.0
        %2762 = vmatpush1.msra.mxu0 %v1593
        %2763 = vmatprep.subr.mxu0 0.0
        %2764 = vmatpush1.msra.mxu0 %v1594
        %2765 = vmatprep.subr.mxu0 0.0
        %2766 = vmatpush1.msra.mxu0 %v1595
        %2767 = vmatprep.subr.mxu0 0.0
        %2768 = vmatpush1.msra.mxu0 %v1596
        %2769 = vmatprep.subr.mxu0 0.0
        %2770 = vmatpush1.msra.mxu0 %v1597
        %2771 = vmatprep.subr.mxu0 0.0
        %2772 = vmatpush1.msra.mxu0 %v1598
        %2773 = vmatprep.subr.mxu0 0.0
        %2774 = vmatpush1.msra.mxu0 0.0
        %2775 = vmatprep.subr.mxu0 0.0
        %2776 = vmatpush1.msra.mxu0 0.0
        %2777 = vmatprep.subr.mxu0 0.0
        %2778 = vmatpush1.msra.mxu0 0.0
        %2779 = vmatprep.subr.mxu0 0.0
        %2780 = vmatpush1.msra.mxu0 0.0
        %2781 = vmatprep.subr.mxu0 0.0
        %2782 = vmatpush1.msra.mxu0 0.0
        %2783 = vmatprep.subr.mxu0 0.0
        %2784 = vmatpush1.msra.mxu0 0.0
        %2785 = vmatprep.subr.mxu0 0.0
        %2786 = vmatpush1.msra.mxu0 0.0
        %2787 = vmatprep.subr.mxu0 0.0
        %2788 = vmatpush1.msra.mxu0 0.0
        %2789 = vmatprep.subr.mxu0 0.0
        %2790 = vmatpush1.msra.mxu0 0.0
        %2791 = vmatprep.subr.mxu0 0.0
        %2792 = vmatpush1.msra.mxu0 0.0
        %2793 = vmatprep.subr.mxu0 0.0
        %2794 = vmatpush1.msra.mxu0 0.0
        %2795 = vmatprep.subr.mxu0 0.0
        %2796 = vmatpush1.msra.mxu0 0.0
        %2797 = vmatprep.subr.mxu0 0.0
        %2798 = vmatpush1.msra.mxu0 0.0
        %2799 = vmatprep.subr.mxu0 0.0
        %2800 = vmatpush1.msra.mxu0 0.0
        %2801 = vmatprep.subr.mxu0 0.0
        %2802 = vmatpush1.msra.mxu0 0.0
        %2803 = vmatprep.subr.mxu0 0.0
        %2804 = vmatpush1.msra.mxu0 0.0
        %2805 = vmatprep.subr.mxu0 0.0
        %2806 = vmatpush1.msra.mxu0 0.0
        %2807 = vmatprep.subr.mxu0 0.0
        %2808 = vmatpush1.msra.mxu0 0.0
        %2809 = vmatprep.subr.mxu0 0.0
        %2810 = vmatpush1.msra.mxu0 0.0
        %2811 = vmatprep.subr.mxu0 0.0
        %2812 = vmatpush1.msra.mxu0 0.0
        %2813 = vmatprep.subr.mxu0 0.0
        %2814 = vmatpush1.msra.mxu0 0.0
        %2815 = vmatprep.subr.mxu0 0.0
        %2816 = vmatpush1.msra.mxu0 0.0
        %2817 = vmatprep.subr.mxu0 0.0
        %2818 = vmatpush1.msra.mxu0 0.0
        %2819 = vmatprep.subr.mxu0 0.0
        %2820 = vmatpush1.msra.mxu0 0.0
        %2821 = vmatprep.mubr.f32.mxu0 0.0
        %2822 = vmatmul.mubr.f32.gmra.mrb[0].mxu0 %v2755
        %v2823 = vpop.f32.mrb[0].mxu0
        %v2824 = vadd.f32 %v2753, %v2823
        %v2825 = vpop.f32.mrb[0].mxu0
        %2826 = vdwg.mxu0
        %v2827 = vadd.f32 %v2669, %v2824
        %v2828 = vsel %vm331, %v2827, 0.0
        %2829 = vadd.xlane.f32.xlu0 %v2828
        %v2830 = vpop.xlane.xlu0 %2829
        %v2831 = vmul.f32 %v2830, %v1372
        %v2832 = vsub.f32 %v2827, %v2831
        %v2833 = vmul.f32 %v2832, %v2832
        %v2834 = vsel %vm331, %v2833, 0.0
        %2835 = vadd.xlane.f32.xlu0 %v2834
        %v2836 = vpop.xlane.xlu0 %2835
        %v2837 = vmul.f32 %v2836, %v1372
        %v2838 = vadd.f32 %v2837, 1e-05
        %v2839 = vrsqrt.pop %v2838
        %v2840 = vmul.f32 %v2832, %v2839
        %v2841 = vlaneseq
        %v2842 = vshrl.u32 %v2841, 7
        %v2843 = vsub.s32 4, %v2842
        %v2844 = vrot.slane %v1604, %v2843
        %v2845 = vmul.f32 %v2840, %v2844
        %v2846 = vlaneseq
        %v2847 = vshrl.u32 %v2846, 7
        %v2848 = vsub.s32 5, %v2847
        %v2849 = vrot.slane %v1604, %v2848
        %v2850 = vadd.f32 %v2845, %v2849
        %2851 = vst.msk [vmem:[%s296] sm:$0xff] %vm331, %v2850
        %s2852 = sand.u32 %s203, 1
        %s2853 = scalar_lea.sflag [#allocation3], %s2852
        %s2854 = sand.u32 %s203, 1
        %s2855 = smul.addr %s2854, 8
        %s2856 = scalar_lea.vmem [#allocation2], %s2855
        // Predicated region
        $region53: #{tpu_custom_call.1} parent=51 // pred_check
          %p2857 = pneg %p213
        $region54: #{tpu_custom_call.1} parent=51 // pred_check_branch
          %2859 = sbr.rel (%p2857) target = $region56
        $region55: #{tpu_custom_call.1} parent=51 // pred_region
          %s2861 = ssub.s32 128, 128
          %2862 = vsyncadd %s2853, %s2861
          %s2863 = smul.addr %s22, 128
          %s2864 = scalar_lea.hbm %s8, %s2863
          %s2866 = sshll.u32 %s2856, 4
          %s2867 = int_to_ptr.vmem [resolvable:$true] %s2866
          %2869 = dma.vmem_to_hbm [thread:$0]  %s2867, 128, %s2864, %s2853
        $region56: #{tpu_custom_call.1} parent=51 // pred_fallthru
          _
      $region52: #{tpu_custom_call.1} parent=5 // pred_fallthru
        _
      %p2870 = scmp.le.s32.totalorder 2, %s17
      // Predicated region
      $region57: #{tpu_custom_call.1} parent=5 // pred_check
        %p2871 = pneg %p2870
      $region58: #{tpu_custom_call.1} parent=5 // pred_check_branch
        %2873 = sbr.rel (%p2871) target = $region60
      $region59: #{tpu_custom_call.1} parent=5 // pred_region
        %s2874 = ssub.s32 %s17, 2
        // Predicated region
        $region61: #{tpu_custom_call.1} parent=59 // pred_check
          %p2875 = pneg %p219
        $region62: #{tpu_custom_call.1} parent=59 // pred_check_branch
          %2877 = sbr.rel (%p2875) target = $region64
        $region63: #{tpu_custom_call.1} parent=59 // pred_region
          %s2878 = sand.u32 %s204, 1
          %s2879 = scalar_lea.sflag [#allocation3], %s2878
          %s2880 = sand.u32 %s204, 1
          %s2881 = smul.addr %s2880, 8
          %s2882 = scalar_lea.vmem [#allocation2], %s2881
          %2883 = dma.done %s2879, 128
        $region64: #{tpu_custom_call.1} parent=59 // pred_fallthru
          _
      $region60: #{tpu_custom_call.1} parent=5 // pred_fallthru
        _
    $region6: #{tpu_custom_call.1} parent=1 // loop_footer
      %s21 = sadd.s32 1, %s17
    $region7: #{tpu_custom_call.1} parent=1 // loop_footer_branch
      %16 = sbr.rel target = $region3
    $region8: #{tpu_custom_call.1} parent=1 // loop_exit
      _
    %2884 = vsyncpa [#allocation3], 1
    %s2885 = scalar_lea.sflag [#allocation3], 1
    %2886 = vsyncpa %s2885, 1

</llo_original>
